<compile_context>
chip_gen: v7x
topology: tpu7x:2x2x1
jax: 0.10.0
libtpu: 0.0.40
codegen_flags: <defaults>
</compile_context>

<pallas_src>
import functools
import jax
import jax.numpy as jnp
from jax import lax
from jax.experimental import pallas as pl
from jax.experimental.pallas import tpu as pltpu

# ---------------- hyperparameters (module globals in the PyTorch script) ----------------
vocab_size = 65
block_size = 8
n_embd     = 32
num_heads  = 4
num_layers = 2
head_size  = n_embd // num_heads
LN_EPS     = 1e-5
VOCAB_PAD  = 128                         # lane-dense padded vocab dimension
ATTN_SCALE = float(n_embd) ** -0.5       # PyTorch Head scales by C**-0.5 with C = n_embd
NEG_INF    = -1e30                       # finite "minus infinity" for the causal mask


# ---------------- in-kernel helpers ----------------
def _layer_norm(x, g, b):
    # x: (R, C), g/b: (1, C)
    mean = jnp.mean(x, axis=-1, keepdims=True)
    var = jnp.mean((x - mean) ** 2, axis=-1, keepdims=True)
    return (x - mean) * lax.rsqrt(var + LN_EPS) * g + b


def _softmax_rows(s):
    # numerically-stable softmax over the last axis; reciprocal on the EUP slot.
    s = s - jnp.max(s, axis=-1, keepdims=True)
    p = jnp.exp(s)
    return p * pl.reciprocal(jnp.sum(p, axis=-1, keepdims=True), approx=True)


# ---------------- fused forward kernel ----------------
def fused_forward_kernel(idx_ref, tok_ref, pos_ref,
                         ln1g_ref, ln1b_ref, wqkv_ref, wo_ref, bo_ref,
                         ln2g_ref, ln2b_ref, w1_ref, b1_ref, w2_ref, b2_ref,
                         lnfg_ref, lnfb_ref, wlm_ref, blm_ref,
                         out_ref, *, B, T):
    C = n_embd
    BT = B * T

    # ---- token embedding: one-hot matmul (MXU), avoids in-kernel dynamic gather ----
    idx = idx_ref[...]                                                    # (BT, 1) int32
    onehot = (lax.broadcasted_iota(jnp.int32, (BT, VOCAB_PAD), 1) == idx
              ).astype(jnp.float32)                                       # (BT, Vp)
    x = jnp.dot(onehot, tok_ref[...], preferred_element_type=jnp.float32)  # (BT, C)

    # ---- positional embedding, replicated across the batch (built once) ----
    x = x + jnp.concatenate([pos_ref[...]] * B, axis=0)                   # (BT, C)

    # ---- causal mask bias, built & broadcast ONCE, reused for every layer/head ----
    row = lax.broadcasted_iota(jnp.int32, (T, T), 0)
    col = lax.broadcasted_iota(jnp.int32, (T, T), 1)
    mask_bias = jnp.where(row >= col,
                          jnp.float32(0.0), jnp.float32(NEG_INF))         # (T, T)
    mask_b = jnp.broadcast_to(mask_bias.reshape(1, T, T), (B, T, T))      # (B, T, T)

    for l in range(num_layers):                                           # static unroll
        # ========== x = x + MultiHeadAttention(LayerNorm1(x)) ==========
        xn = _layer_norm(x, ln1g_ref[l], ln1b_ref[l])                     # (BT, C)
        qkv = jnp.dot(xn, wqkv_ref[l],
                      preferred_element_type=jnp.float32)                 # (BT, 3C)
        qkv = qkv.reshape(B, T, 3 * C)                                    # batch-major view
        wo_l = wo_ref[l]                                                  # (C, C)

        attn_proj = None
        for h in range(num_heads):                                        # static unroll
            s = h * head_size
            qh = qkv[:, :, s:s + head_size]                               # (B, T, hs)
            kh = qkv[:, :, C + s:C + s + head_size]                       # (B, T, hs)
            vh = qkv[:, :, 2 * C + s:2 * C + s + head_size]               # (B, T, hs)

            sc = jnp.einsum('bqd,bkd->bqk', qh, kh,
                            preferred_element_type=jnp.float32) * ATTN_SCALE
            p = _softmax_rows(sc + mask_b)                                # (B, T, T)
            oh = jnp.einsum('bqk,bkd->bqd', p, vh,
                            preferred_element_type=jnp.float32)           # (B, T, hs)

            # Fold the head-concat into the output projection:
            # head h only multiplies rows [s, s+hs) of wo.
            contrib = jnp.dot(oh.reshape(BT, head_size),
                              wo_l[s:s + head_size, :],
                              preferred_element_type=jnp.float32)         # (BT, C)
            attn_proj = contrib if attn_proj is None else attn_proj + contrib

        x = x + attn_proj + bo_ref[l]                                     # residual add

        # ========== x = x + FeedForward(LayerNorm2(x)) ==========
        xn = _layer_norm(x, ln2g_ref[l], ln2b_ref[l])
        hdn = jnp.dot(xn, w1_ref[l], preferred_element_type=jnp.float32) + b1_ref[l]
        hdn = jnp.maximum(hdn, 0.0)                                       # ReLU
        x = x + jnp.dot(hdn, w2_ref[l],
                        preferred_element_type=jnp.float32) + b2_ref[l]   # residual add

    # ========== final LayerNorm + lm_head (lane-dense padded vocab) ==========
    xn = _layer_norm(x, lnfg_ref[...], lnfb_ref[...])
    out_ref[...] = (jnp.dot(xn, wlm_ref[...],
                            preferred_element_type=jnp.float32) + blm_ref[...])


# ---------------- pallas_call wrapper ----------------
def _full_spec(arr):
    nd = arr.ndim
    return pl.BlockSpec(arr.shape, lambda i, _nd=nd: (0,) * _nd)


def bigram_lm_forward(idx, params):
    """idx: (B, T) int32 token ids. Returns (logits (B, T, V), loss=None)."""
    B, T = idx.shape
    BT = B * T
    idx2d = idx.reshape(BT, 1).astype(jnp.int32)
    pos = params["pos_emb"][:T]                                           # (T, C)

    inputs = (idx2d, params["tok_emb"], pos,
              params["ln1_g"], params["ln1_b"], params["wqkv"],
              params["wo"], params["bo"],
              params["ln2_g"], params["ln2_b"], params["w1"], params["b1"],
              params["w2"], params["b2"],
              params["lnf_g"], params["lnf_b"], params["w_lm"], params["b_lm"])

    logits_padded = pl.pallas_call(
        functools.partial(fused_forward_kernel, B=B, T=T),
        out_shape=jax.ShapeDtypeStruct((BT, VOCAB_PAD), jnp.float32),
        grid=(1,),
        in_specs=[_full_spec(a) for a in inputs],
        out_specs=pl.BlockSpec((BT, VOCAB_PAD), lambda i: (0, 0)),
        compiler_params=pltpu.CompilerParams(dimension_semantics=("arbitrary",)),
    )(*inputs)

    logits = logits_padded[:, :vocab_size].reshape(B, T, vocab_size)
    return logits, None                                                   # targets=None path


# ---------------- deterministic parameter init ----------------
def init_params(key):
    def normal(k, shape, scale=0.02):
        return scale * jax.random.normal(k, shape, dtype=jnp.float32)

    C, H, V, Vp, L = n_embd, 4 * n_embd, vocab_size, VOCAB_PAD, num_layers
    keys = iter(jax.random.split(key, 3 + L * 6))

    tok = normal(next(keys), (V, C))
    tok_pad = jnp.zeros((Vp, C), jnp.float32).at[:V].set(tok)             # zero-padded rows
    pos = normal(next(keys), (block_size, C))
    wlm = normal(next(keys), (C, V))
    wlm_pad = jnp.zeros((C, Vp), jnp.float32).at[:, :V].set(wlm)          # zero-padded cols

    ln1_g, ln1_b, wqkv, wo, bo = [], [], [], [], []
    ln2_g, ln2_b, w1, b1, w2, b2 = [], [], [], [], [], []
    for _ in range(L):
        wq = normal(next(keys), (C, C))
        wk = normal(next(keys), (C, C))
        wv = normal(next(keys), (C, C))
        ln1_g.append(jnp.ones((1, C), jnp.float32))
        ln1_b.append(jnp.zeros((1, C), jnp.float32))
        wqkv.append(jnp.concatenate([wq, wk, wv], axis=1))                # (C, 3C)
        wo.append(normal(next(keys), (C, C)))
        bo.append(jnp.zeros((1, C), jnp.float32))
        ln2_g.append(jnp.ones((1, C), jnp.float32))
        ln2_b.append(jnp.zeros((1, C), jnp.float32))
        w1.append(normal(next(keys), (C, H)))
        b1.append(jnp.zeros((1, H), jnp.float32))
        w2.append(normal(next(keys), (H, C)))
        b2.append(jnp.zeros((1, C), jnp.float32))

    stack = lambda xs: jnp.stack(xs, axis=0)
    return {
        "tok_emb": tok_pad, "pos_emb": pos,
        "lnf_g": jnp.ones((1, C), jnp.float32),
        "lnf_b": jnp.zeros((1, C), jnp.float32),
        "w_lm": wlm_pad, "b_lm": jnp.zeros((1, Vp), jnp.float32),
        "ln1_g": stack(ln1_g), "ln1_b": stack(ln1_b),
        "wqkv": stack(wqkv), "wo": stack(wo), "bo": stack(bo),
        "ln2_g": stack(ln2_g), "ln2_b": stack(ln2_b),
        "w1": stack(w1), "b1": stack(b1), "w2": stack(w2), "b2": stack(b2),
    }


if __name__ == "__main__":
    key = jax.random.PRNGKey(0)
    pkey, dkey = jax.random.split(key)
    params = init_params(pkey)

    B, T = 2, block_size
    idx = jax.random.randint(dkey, (B, T), 0, vocab_size, dtype=jnp.int32)

    logits, loss = bigram_lm_forward(idx, params)
    logits = jax.block_until_ready(logits)

    assert logits.shape == (B, T, vocab_size)
    assert logits.dtype == jnp.float32
    assert bool(jnp.all(jnp.isfinite(logits)))
    print("KERNEL_OK")
</pallas_src>

<mosaic_0001>
module attributes {stable_mosaic.version = 11 : i64} {
  func.func @fused_forward_kernel(%arg0: i32, %arg1: memref<16x1xi32, #tpu.memory_space<vmem>>, %arg2: memref<128x32xf32, #tpu.memory_space<vmem>>, %arg3: memref<8x32xf32, #tpu.memory_space<vmem>>, %arg4: memref<2x1x32xf32, #tpu.memory_space<vmem>>, %arg5: memref<2x1x32xf32, #tpu.memory_space<vmem>>, %arg6: memref<2x32x96xf32, #tpu.memory_space<vmem>>, %arg7: memref<2x32x32xf32, #tpu.memory_space<vmem>>, %arg8: memref<2x1x32xf32, #tpu.memory_space<vmem>>, %arg9: memref<2x1x32xf32, #tpu.memory_space<vmem>>, %arg10: memref<2x1x32xf32, #tpu.memory_space<vmem>>, %arg11: memref<2x32x128xf32, #tpu.memory_space<vmem>>, %arg12: memref<2x1x128xf32, #tpu.memory_space<vmem>>, %arg13: memref<2x128x32xf32, #tpu.memory_space<vmem>>, %arg14: memref<2x1x32xf32, #tpu.memory_space<vmem>>, %arg15: memref<1x32xf32, #tpu.memory_space<vmem>>, %arg16: memref<1x32xf32, #tpu.memory_space<vmem>>, %arg17: memref<32x128xf32, #tpu.memory_space<vmem>>, %arg18: memref<1x128xf32, #tpu.memory_space<vmem>>, %arg19: memref<16x128xf32, #tpu.memory_space<vmem>>) attributes {dimension_semantics = [#tpu.dimension_semantics<arbitrary>], iteration_bounds = array<i64: 1>, scalar_prefetch = 0 : i64, scratch_operands = 0 : i64, tpu.core_type = #tpu.core_type<tc>, window_params = [{pipeline_mode = #tpu.pipeline_mode<synchronous>, transform_indices = @transform_0, window_bounds = array<i64: 16, 1>}, {pipeline_mode = #tpu.pipeline_mode<synchronous>, transform_indices = @transform_1, window_bounds = array<i64: 128, 32>}, {pipeline_mode = #tpu.pipeline_mode<synchronous>, transform_indices = @transform_2, window_bounds = array<i64: 8, 32>}, {pipeline_mode = #tpu.pipeline_mode<synchronous>, transform_indices = @transform_3, window_bounds = array<i64: 2, 1, 32>}, {pipeline_mode = #tpu.pipeline_mode<synchronous>, transform_indices = @transform_4, window_bounds = array<i64: 2, 1, 32>}, {pipeline_mode = #tpu.pipeline_mode<synchronous>, transform_indices = @transform_5, window_bounds = array<i64: 2, 32, 96>}, {pipeline_mode = #tpu.pipeline_mode<synchronous>, transform_indices = @transform_6, window_bounds = array<i64: 2, 32, 32>}, {pipeline_mode = #tpu.pipeline_mode<synchronous>, transform_indices = @transform_7, window_bounds = array<i64: 2, 1, 32>}, {pipeline_mode = #tpu.pipeline_mode<synchronous>, transform_indices = @transform_8, window_bounds = array<i64: 2, 1, 32>}, {pipeline_mode = #tpu.pipeline_mode<synchronous>, transform_indices = @transform_9, window_bounds = array<i64: 2, 1, 32>}, {pipeline_mode = #tpu.pipeline_mode<synchronous>, transform_indices = @transform_10, window_bounds = array<i64: 2, 32, 128>}, {pipeline_mode = #tpu.pipeline_mode<synchronous>, transform_indices = @transform_11, window_bounds = array<i64: 2, 1, 128>}, {pipeline_mode = #tpu.pipeline_mode<synchronous>, transform_indices = @transform_12, window_bounds = array<i64: 2, 128, 32>}, {pipeline_mode = #tpu.pipeline_mode<synchronous>, transform_indices = @transform_13, window_bounds = array<i64: 2, 1, 32>}, {pipeline_mode = #tpu.pipeline_mode<synchronous>, transform_indices = @transform_14, window_bounds = array<i64: 1, 32>}, {pipeline_mode = #tpu.pipeline_mode<synchronous>, transform_indices = @transform_15, window_bounds = array<i64: 1, 32>}, {pipeline_mode = #tpu.pipeline_mode<synchronous>, transform_indices = @transform_16, window_bounds = array<i64: 32, 128>}, {pipeline_mode = #tpu.pipeline_mode<synchronous>, transform_indices = @transform_17, window_bounds = array<i64: 1, 128>}, {pipeline_mode = #tpu.pipeline_mode<synchronous>, transform_indices = @transform_18, window_bounds = array<i64: 16, 128>}]} {
    %c0 = arith.constant 0 : index
    %c0_0 = arith.constant 0 : index
    %0 = vector.load %arg1[%c0, %c0_0] : memref<16x1xi32, #tpu.memory_space<vmem>>, vector<16x1xi32>
    %1 = tpu.iota {dimensions = array<i32: 1>} : vector<16x128xi32>
    %2 = vector.broadcast %0 : vector<16x1xi32> to vector<16x128xi32>
    %3 = arith.cmpi eq, %1, %2 : vector<16x128xi32>
    %4 = arith.extui %3 : vector<16x128xi1> to vector<16x128xi32>
    %5 = arith.sitofp %4 : vector<16x128xi32> to vector<16x128xf32>
    %c0_1 = arith.constant 0 : index
    %c0_2 = arith.constant 0 : index
    %6 = vector.load %arg2[%c0_1, %c0_2] : memref<128x32xf32, #tpu.memory_space<vmem>>, vector<128x32xf32>
    %cst = arith.constant dense<0.000000e+00> : vector<16x32xf32>
    %7 = tpu.matmul %5, %6, %cst {dimension_numbers = #tpu.dot_dimension_numbers<[1], [0], [0], [1], [0, 0, 1, 1], [], []>} : vector<16x128xf32>, vector<128x32xf32>, vector<16x32xf32> -> vector<16x32xf32>
    %c0_3 = arith.constant 0 : index
    %c0_4 = arith.constant 0 : index
    %8 = vector.load %arg3[%c0_3, %c0_4] : memref<8x32xf32, #tpu.memory_space<vmem>>, vector<8x32xf32>
    %9 = tpu.concatenate %8, %8 in 0 : vector<8x32xf32>, vector<8x32xf32> -> vector<16x32xf32>
    %10 = arith.addf %7, %9 : vector<16x32xf32>
    %11 = tpu.iota {dimensions = array<i32: 0>} : vector<8x8xi32>
    %12 = tpu.iota {dimensions = array<i32: 1>} : vector<8x8xi32>
    %13 = arith.cmpi sge, %11, %12 : vector<8x8xi32>
    %cst_5 = arith.constant 0.000000e+00 : f32
    %cst_6 = arith.constant -1.000000e+30 : f32
    %14 = vector.broadcast %cst_5 : f32 to vector<8x8xf32>
    %15 = vector.broadcast %cst_6 : f32 to vector<8x8xf32>
    %16 = arith.select %13, %14, %15 : vector<8x8xi1>, vector<8x8xf32>
    %17 = vector.shape_cast %16 : vector<8x8xf32> to vector<1x8x8xf32>
    %18 = vector.shape_cast %17 : vector<1x8x8xf32> to vector<1x8x8xf32>
    %19 = vector.broadcast %18 : vector<1x8x8xf32> to vector<2x8x8xf32>
    %c0_7 = arith.constant 0 : index
    %c0_8 = arith.constant 0 : index
    %c0_9 = arith.constant 0 : index
    %20 = vector.load %arg4[%c0_7, %c0_8, %c0_9] : memref<2x1x32xf32, #tpu.memory_space<vmem>>, vector<1x1x32xf32>
    %21 = vector.shape_cast %20 : vector<1x1x32xf32> to vector<1x32xf32>
    %c0_10 = arith.constant 0 : index
    %c0_11 = arith.constant 0 : index
    %c0_12 = arith.constant 0 : index
    %22 = vector.load %arg5[%c0_10, %c0_11, %c0_12] : memref<2x1x32xf32, #tpu.memory_space<vmem>>, vector<1x1x32xf32>
    %23 = vector.shape_cast %22 : vector<1x1x32xf32> to vector<1x32xf32>
    %cst_13 = arith.constant dense<0.000000e+00> : vector<16xf32>
    %24 = vector.multi_reduction <add>, %10, %cst_13 [1] : vector<16x32xf32> to vector<16xf32>
    %25 = vector.shape_cast %24 : vector<16xf32> to vector<16x1xf32>
    %cst_14 = arith.constant 3.200000e+01 : f32
    %26 = vector.broadcast %cst_14 : f32 to vector<16x1xf32>
    %27 = arith.divf %25, %26 : vector<16x1xf32>
    %28 = vector.broadcast %27 : vector<16x1xf32> to vector<16x32xf32>
    %29 = arith.subf %10, %28 : vector<16x32xf32>
    %30 = arith.mulf %29, %29 : vector<16x32xf32>
    %cst_15 = arith.constant dense<0.000000e+00> : vector<16xf32>
    %31 = vector.multi_reduction <add>, %30, %cst_15 [1] : vector<16x32xf32> to vector<16xf32>
    %32 = vector.shape_cast %31 : vector<16xf32> to vector<16x1xf32>
    %cst_16 = arith.constant 3.200000e+01 : f32
    %33 = vector.broadcast %cst_16 : f32 to vector<16x1xf32>
    %34 = arith.divf %32, %33 : vector<16x1xf32>
    %35 = vector.broadcast %27 : vector<16x1xf32> to vector<16x32xf32>
    %36 = arith.subf %10, %35 : vector<16x32xf32>
    %cst_17 = arith.constant 9.99999974E-6 : f32
    %37 = vector.broadcast %cst_17 : f32 to vector<16x1xf32>
    %38 = arith.addf %34, %37 : vector<16x1xf32>
    %39 = math.rsqrt %38 : vector<16x1xf32>
    %40 = vector.broadcast %39 : vector<16x1xf32> to vector<16x32xf32>
    %41 = arith.mulf %36, %40 : vector<16x32xf32>
    %42 = vector.broadcast %21 : vector<1x32xf32> to vector<16x32xf32>
    %43 = arith.mulf %41, %42 : vector<16x32xf32>
    %44 = vector.broadcast %23 : vector<1x32xf32> to vector<16x32xf32>
    %45 = arith.addf %43, %44 : vector<16x32xf32>
    %c0_18 = arith.constant 0 : index
    %c0_19 = arith.constant 0 : index
    %c0_20 = arith.constant 0 : index
    %46 = vector.load %arg6[%c0_18, %c0_19, %c0_20] : memref<2x32x96xf32, #tpu.memory_space<vmem>>, vector<1x32x96xf32>
    %47 = vector.shape_cast %46 : vector<1x32x96xf32> to vector<32x96xf32>
    %cst_21 = arith.constant dense<0.000000e+00> : vector<16x96xf32>
    %48 = tpu.matmul %45, %47, %cst_21 {dimension_numbers = #tpu.dot_dimension_numbers<[1], [0], [0], [1], [0, 0, 1, 1], [], []>} : vector<16x32xf32>, vector<32x96xf32>, vector<16x96xf32> -> vector<16x96xf32>
    %49 = vector.shape_cast %48 : vector<16x96xf32> to vector<2x8x96xf32>
    %c0_22 = arith.constant 0 : index
    %c0_23 = arith.constant 0 : index
    %c0_24 = arith.constant 0 : index
    %50 = vector.load %arg7[%c0_22, %c0_23, %c0_24] : memref<2x32x32xf32, #tpu.memory_space<vmem>>, vector<1x32x32xf32>
    %51 = vector.shape_cast %50 : vector<1x32x32xf32> to vector<32x32xf32>
    %52 = vector.extract_strided_slice %49 {offsets = [0, 0, 0], sizes = [2, 8, 8], strides = [1, 1, 1]} : vector<2x8x96xf32> to vector<2x8x8xf32>
    %53 = vector.extract_strided_slice %49 {offsets = [0, 0, 32], sizes = [2, 8, 8], strides = [1, 1, 1]} : vector<2x8x96xf32> to vector<2x8x8xf32>
    %54 = vector.extract_strided_slice %49 {offsets = [0, 0, 64], sizes = [2, 8, 8], strides = [1, 1, 1]} : vector<2x8x96xf32> to vector<2x8x8xf32>
    "tpu.trace_start"() <{level = 10 : i32, message = "bqd,bkd->bqk"}> : () -> ()
    %cst_25 = arith.constant dense<0.000000e+00> : vector<2x8x8xf32>
    %55 = tpu.matmul %52, %53, %cst_25 {dimension_numbers = #tpu.dot_dimension_numbers<[2], [2], [1], [1], [0, 0, 0, 1, 1, 1], [0], [0]>} : vector<2x8x8xf32>, vector<2x8x8xf32>, vector<2x8x8xf32> -> vector<2x8x8xf32>
    "tpu.trace_stop"() : () -> ()
    %cst_26 = arith.constant 0.176776692 : f32
    %56 = vector.broadcast %cst_26 : f32 to vector<2x8x8xf32>
    %57 = arith.mulf %55, %56 : vector<2x8x8xf32>
    %58 = arith.addf %57, %19 : vector<2x8x8xf32>
    %cst_27 = arith.constant dense<0xFF800000> : vector<2x8xf32>
    %59 = vector.multi_reduction <maximumf>, %58, %cst_27 [2] : vector<2x8x8xf32> to vector<2x8xf32>
    %60 = vector.shape_cast %59 : vector<2x8xf32> to vector<2x8x1xf32>
    %61 = vector.broadcast %60 : vector<2x8x1xf32> to vector<2x8x8xf32>
    %62 = arith.subf %58, %61 : vector<2x8x8xf32>
    %63 = math.exp %62 : vector<2x8x8xf32>
    %cst_28 = arith.constant dense<0.000000e+00> : vector<2x8xf32>
    %64 = vector.multi_reduction <add>, %63, %cst_28 [2] : vector<2x8x8xf32> to vector<2x8xf32>
    %65 = vector.shape_cast %64 : vector<2x8xf32> to vector<2x8x1xf32>
    %66 = tpu.reciprocal %65 {approx = true} : vector<2x8x1xf32> -> vector<2x8x1xf32>
    %67 = vector.broadcast %66 : vector<2x8x1xf32> to vector<2x8x8xf32>
    %68 = arith.mulf %63, %67 : vector<2x8x8xf32>
    "tpu.trace_start"() <{level = 10 : i32, message = "bqk,bkd->bqd"}> : () -> ()
    %cst_29 = arith.constant dense<0.000000e+00> : vector<2x8x8xf32>
    %69 = tpu.matmul %68, %54, %cst_29 {dimension_numbers = #tpu.dot_dimension_numbers<[2], [1], [1], [2], [0, 0, 0, 1, 1, 2], [0], [0]>} : vector<2x8x8xf32>, vector<2x8x8xf32>, vector<2x8x8xf32> -> vector<2x8x8xf32>
    "tpu.trace_stop"() : () -> ()
    %70 = vector.shape_cast %69 : vector<2x8x8xf32> to vector<16x8xf32>
    %71 = vector.extract_strided_slice %51 {offsets = [0, 0], sizes = [8, 32], strides = [1, 1]} : vector<32x32xf32> to vector<8x32xf32>
    %cst_30 = arith.constant dense<0.000000e+00> : vector<16x32xf32>
    %72 = tpu.matmul %70, %71, %cst_30 {dimension_numbers = #tpu.dot_dimension_numbers<[1], [0], [0], [1], [0, 0, 1, 1], [], []>} : vector<16x8xf32>, vector<8x32xf32>, vector<16x32xf32> -> vector<16x32xf32>
    %73 = vector.extract_strided_slice %49 {offsets = [0, 0, 8], sizes = [2, 8, 8], strides = [1, 1, 1]} : vector<2x8x96xf32> to vector<2x8x8xf32>
    %74 = vector.extract_strided_slice %49 {offsets = [0, 0, 40], sizes = [2, 8, 8], strides = [1, 1, 1]} : vector<2x8x96xf32> to vector<2x8x8xf32>
    %75 = vector.extract_strided_slice %49 {offsets = [0, 0, 72], sizes = [2, 8, 8], strides = [1, 1, 1]} : vector<2x8x96xf32> to vector<2x8x8xf32>
    "tpu.trace_start"() <{level = 10 : i32, message = "bqd,bkd->bqk"}> : () -> ()
    %cst_31 = arith.constant dense<0.000000e+00> : vector<2x8x8xf32>
    %76 = tpu.matmul %73, %74, %cst_31 {dimension_numbers = #tpu.dot_dimension_numbers<[2], [2], [1], [1], [0, 0, 0, 1, 1, 1], [0], [0]>} : vector<2x8x8xf32>, vector<2x8x8xf32>, vector<2x8x8xf32> -> vector<2x8x8xf32>
    "tpu.trace_stop"() : () -> ()
    %cst_32 = arith.constant 0.176776692 : f32
    %77 = vector.broadcast %cst_32 : f32 to vector<2x8x8xf32>
    %78 = arith.mulf %76, %77 : vector<2x8x8xf32>
    %79 = arith.addf %78, %19 : vector<2x8x8xf32>
    %cst_33 = arith.constant dense<0xFF800000> : vector<2x8xf32>
    %80 = vector.multi_reduction <maximumf>, %79, %cst_33 [2] : vector<2x8x8xf32> to vector<2x8xf32>
    %81 = vector.shape_cast %80 : vector<2x8xf32> to vector<2x8x1xf32>
    %82 = vector.broadcast %81 : vector<2x8x1xf32> to vector<2x8x8xf32>
    %83 = arith.subf %79, %82 : vector<2x8x8xf32>
    %84 = math.exp %83 : vector<2x8x8xf32>
    %cst_34 = arith.constant dense<0.000000e+00> : vector<2x8xf32>
    %85 = vector.multi_reduction <add>, %84, %cst_34 [2] : vector<2x8x8xf32> to vector<2x8xf32>
    %86 = vector.shape_cast %85 : vector<2x8xf32> to vector<2x8x1xf32>
    %87 = tpu.reciprocal %86 {approx = true} : vector<2x8x1xf32> -> vector<2x8x1xf32>
    %88 = vector.broadcast %87 : vector<2x8x1xf32> to vector<2x8x8xf32>
    %89 = arith.mulf %84, %88 : vector<2x8x8xf32>
    "tpu.trace_start"() <{level = 10 : i32, message = "bqk,bkd->bqd"}> : () -> ()
    %cst_35 = arith.constant dense<0.000000e+00> : vector<2x8x8xf32>
    %90 = tpu.matmul %89, %75, %cst_35 {dimension_numbers = #tpu.dot_dimension_numbers<[2], [1], [1], [2], [0, 0, 0, 1, 1, 2], [0], [0]>} : vector<2x8x8xf32>, vector<2x8x8xf32>, vector<2x8x8xf32> -> vector<2x8x8xf32>
    "tpu.trace_stop"() : () -> ()
    %91 = vector.shape_cast %90 : vector<2x8x8xf32> to vector<16x8xf32>
    %92 = vector.extract_strided_slice %51 {offsets = [8, 0], sizes = [8, 32], strides = [1, 1]} : vector<32x32xf32> to vector<8x32xf32>
    %cst_36 = arith.constant dense<0.000000e+00> : vector<16x32xf32>
    %93 = tpu.matmul %91, %92, %cst_36 {dimension_numbers = #tpu.dot_dimension_numbers<[1], [0], [0], [1], [0, 0, 1, 1], [], []>} : vector<16x8xf32>, vector<8x32xf32>, vector<16x32xf32> -> vector<16x32xf32>
    %94 = arith.addf %72, %93 : vector<16x32xf32>
    %95 = vector.extract_strided_slice %49 {offsets = [0, 0, 16], sizes = [2, 8, 8], strides = [1, 1, 1]} : vector<2x8x96xf32> to vector<2x8x8xf32>
    %96 = vector.extract_strided_slice %49 {offsets = [0, 0, 48], sizes = [2, 8, 8], strides = [1, 1, 1]} : vector<2x8x96xf32> to vector<2x8x8xf32>
    %97 = vector.extract_strided_slice %49 {offsets = [0, 0, 80], sizes = [2, 8, 8], strides = [1, 1, 1]} : vector<2x8x96xf32> to vector<2x8x8xf32>
    "tpu.trace_start"() <{level = 10 : i32, message = "bqd,bkd->bqk"}> : () -> ()
    %cst_37 = arith.constant dense<0.000000e+00> : vector<2x8x8xf32>
    %98 = tpu.matmul %95, %96, %cst_37 {dimension_numbers = #tpu.dot_dimension_numbers<[2], [2], [1], [1], [0, 0, 0, 1, 1, 1], [0], [0]>} : vector<2x8x8xf32>, vector<2x8x8xf32>, vector<2x8x8xf32> -> vector<2x8x8xf32>
    "tpu.trace_stop"() : () -> ()
    %cst_38 = arith.constant 0.176776692 : f32
    %99 = vector.broadcast %cst_38 : f32 to vector<2x8x8xf32>
    %100 = arith.mulf %98, %99 : vector<2x8x8xf32>
    %101 = arith.addf %100, %19 : vector<2x8x8xf32>
    %cst_39 = arith.constant dense<0xFF800000> : vector<2x8xf32>
    %102 = vector.multi_reduction <maximumf>, %101, %cst_39 [2] : vector<2x8x8xf32> to vector<2x8xf32>
    %103 = vector.shape_cast %102 : vector<2x8xf32> to vector<2x8x1xf32>
    %104 = vector.broadcast %103 : vector<2x8x1xf32> to vector<2x8x8xf32>
    %105 = arith.subf %101, %104 : vector<2x8x8xf32>
    %106 = math.exp %105 : vector<2x8x8xf32>
    %cst_40 = arith.constant dense<0.000000e+00> : vector<2x8xf32>
    %107 = vector.multi_reduction <add>, %106, %cst_40 [2] : vector<2x8x8xf32> to vector<2x8xf32>
    %108 = vector.shape_cast %107 : vector<2x8xf32> to vector<2x8x1xf32>
    %109 = tpu.reciprocal %108 {approx = true} : vector<2x8x1xf32> -> vector<2x8x1xf32>
    %110 = vector.broadcast %109 : vector<2x8x1xf32> to vector<2x8x8xf32>
    %111 = arith.mulf %106, %110 : vector<2x8x8xf32>
    "tpu.trace_start"() <{level = 10 : i32, message = "bqk,bkd->bqd"}> : () -> ()
    %cst_41 = arith.constant dense<0.000000e+00> : vector<2x8x8xf32>
    %112 = tpu.matmul %111, %97, %cst_41 {dimension_numbers = #tpu.dot_dimension_numbers<[2], [1], [1], [2], [0, 0, 0, 1, 1, 2], [0], [0]>} : vector<2x8x8xf32>, vector<2x8x8xf32>, vector<2x8x8xf32> -> vector<2x8x8xf32>
    "tpu.trace_stop"() : () -> ()
    %113 = vector.shape_cast %112 : vector<2x8x8xf32> to vector<16x8xf32>
    %114 = vector.extract_strided_slice %51 {offsets = [16, 0], sizes = [8, 32], strides = [1, 1]} : vector<32x32xf32> to vector<8x32xf32>
    %cst_42 = arith.constant dense<0.000000e+00> : vector<16x32xf32>
    %115 = tpu.matmul %113, %114, %cst_42 {dimension_numbers = #tpu.dot_dimension_numbers<[1], [0], [0], [1], [0, 0, 1, 1], [], []>} : vector<16x8xf32>, vector<8x32xf32>, vector<16x32xf32> -> vector<16x32xf32>
    %116 = arith.addf %94, %115 : vector<16x32xf32>
    %117 = vector.extract_strided_slice %49 {offsets = [0, 0, 24], sizes = [2, 8, 8], strides = [1, 1, 1]} : vector<2x8x96xf32> to vector<2x8x8xf32>
    %118 = vector.extract_strided_slice %49 {offsets = [0, 0, 56], sizes = [2, 8, 8], strides = [1, 1, 1]} : vector<2x8x96xf32> to vector<2x8x8xf32>
    %119 = vector.extract_strided_slice %49 {offsets = [0, 0, 88], sizes = [2, 8, 8], strides = [1, 1, 1]} : vector<2x8x96xf32> to vector<2x8x8xf32>
    "tpu.trace_start"() <{level = 10 : i32, message = "bqd,bkd->bqk"}> : () -> ()
    %cst_43 = arith.constant dense<0.000000e+00> : vector<2x8x8xf32>
    %120 = tpu.matmul %117, %118, %cst_43 {dimension_numbers = #tpu.dot_dimension_numbers<[2], [2], [1], [1], [0, 0, 0, 1, 1, 1], [0], [0]>} : vector<2x8x8xf32>, vector<2x8x8xf32>, vector<2x8x8xf32> -> vector<2x8x8xf32>
    "tpu.trace_stop"() : () -> ()
    %cst_44 = arith.constant 0.176776692 : f32
    %121 = vector.broadcast %cst_44 : f32 to vector<2x8x8xf32>
    %122 = arith.mulf %120, %121 : vector<2x8x8xf32>
    %123 = arith.addf %122, %19 : vector<2x8x8xf32>
    %cst_45 = arith.constant dense<0xFF800000> : vector<2x8xf32>
    %124 = vector.multi_reduction <maximumf>, %123, %cst_45 [2] : vector<2x8x8xf32> to vector<2x8xf32>
    %125 = vector.shape_cast %124 : vector<2x8xf32> to vector<2x8x1xf32>
    %126 = vector.broadcast %125 : vector<2x8x1xf32> to vector<2x8x8xf32>
    %127 = arith.subf %123, %126 : vector<2x8x8xf32>
    %128 = math.exp %127 : vector<2x8x8xf32>
    %cst_46 = arith.constant dense<0.000000e+00> : vector<2x8xf32>
    %129 = vector.multi_reduction <add>, %128, %cst_46 [2] : vector<2x8x8xf32> to vector<2x8xf32>
    %130 = vector.shape_cast %129 : vector<2x8xf32> to vector<2x8x1xf32>
    %131 = tpu.reciprocal %130 {approx = true} : vector<2x8x1xf32> -> vector<2x8x1xf32>
    %132 = vector.broadcast %131 : vector<2x8x1xf32> to vector<2x8x8xf32>
    %133 = arith.mulf %128, %132 : vector<2x8x8xf32>
    "tpu.trace_start"() <{level = 10 : i32, message = "bqk,bkd->bqd"}> : () -> ()
    %cst_47 = arith.constant dense<0.000000e+00> : vector<2x8x8xf32>
    %134 = tpu.matmul %133, %119, %cst_47 {dimension_numbers = #tpu.dot_dimension_numbers<[2], [1], [1], [2], [0, 0, 0, 1, 1, 2], [0], [0]>} : vector<2x8x8xf32>, vector<2x8x8xf32>, vector<2x8x8xf32> -> vector<2x8x8xf32>
    "tpu.trace_stop"() : () -> ()
    %135 = vector.shape_cast %134 : vector<2x8x8xf32> to vector<16x8xf32>
    %136 = vector.extract_strided_slice %51 {offsets = [24, 0], sizes = [8, 32], strides = [1, 1]} : vector<32x32xf32> to vector<8x32xf32>
    %cst_48 = arith.constant dense<0.000000e+00> : vector<16x32xf32>
    %137 = tpu.matmul %135, %136, %cst_48 {dimension_numbers = #tpu.dot_dimension_numbers<[1], [0], [0], [1], [0, 0, 1, 1], [], []>} : vector<16x8xf32>, vector<8x32xf32>, vector<16x32xf32> -> vector<16x32xf32>
    %138 = arith.addf %116, %137 : vector<16x32xf32>
    %139 = arith.addf %10, %138 : vector<16x32xf32>
    %c0_49 = arith.constant 0 : index
    %c0_50 = arith.constant 0 : index
    %c0_51 = arith.constant 0 : index
    %140 = vector.load %arg8[%c0_49, %c0_50, %c0_51] : memref<2x1x32xf32, #tpu.memory_space<vmem>>, vector<1x1x32xf32>
    %141 = vector.shape_cast %140 : vector<1x1x32xf32> to vector<1x32xf32>
    %142 = vector.broadcast %141 : vector<1x32xf32> to vector<16x32xf32>
    %143 = arith.addf %139, %142 : vector<16x32xf32>
    %c0_52 = arith.constant 0 : index
    %c0_53 = arith.constant 0 : index
    %c0_54 = arith.constant 0 : index
    %144 = vector.load %arg9[%c0_52, %c0_53, %c0_54] : memref<2x1x32xf32, #tpu.memory_space<vmem>>, vector<1x1x32xf32>
    %145 = vector.shape_cast %144 : vector<1x1x32xf32> to vector<1x32xf32>
    %c0_55 = arith.constant 0 : index
    %c0_56 = arith.constant 0 : index
    %c0_57 = arith.constant 0 : index
    %146 = vector.load %arg10[%c0_55, %c0_56, %c0_57] : memref<2x1x32xf32, #tpu.memory_space<vmem>>, vector<1x1x32xf32>
    %147 = vector.shape_cast %146 : vector<1x1x32xf32> to vector<1x32xf32>
    %cst_58 = arith.constant dense<0.000000e+00> : vector<16xf32>
    %148 = vector.multi_reduction <add>, %143, %cst_58 [1] : vector<16x32xf32> to vector<16xf32>
    %149 = vector.shape_cast %148 : vector<16xf32> to vector<16x1xf32>
    %cst_59 = arith.constant 3.200000e+01 : f32
    %150 = vector.broadcast %cst_59 : f32 to vector<16x1xf32>
    %151 = arith.divf %149, %150 : vector<16x1xf32>
    %152 = vector.broadcast %151 : vector<16x1xf32> to vector<16x32xf32>
    %153 = arith.subf %143, %152 : vector<16x32xf32>
    %154 = arith.mulf %153, %153 : vector<16x32xf32>
    %cst_60 = arith.constant dense<0.000000e+00> : vector<16xf32>
    %155 = vector.multi_reduction <add>, %154, %cst_60 [1] : vector<16x32xf32> to vector<16xf32>
    %156 = vector.shape_cast %155 : vector<16xf32> to vector<16x1xf32>
    %cst_61 = arith.constant 3.200000e+01 : f32
    %157 = vector.broadcast %cst_61 : f32 to vector<16x1xf32>
    %158 = arith.divf %156, %157 : vector<16x1xf32>
    %159 = vector.broadcast %151 : vector<16x1xf32> to vector<16x32xf32>
    %160 = arith.subf %143, %159 : vector<16x32xf32>
    %cst_62 = arith.constant 9.99999974E-6 : f32
    %161 = vector.broadcast %cst_62 : f32 to vector<16x1xf32>
    %162 = arith.addf %158, %161 : vector<16x1xf32>
    %163 = math.rsqrt %162 : vector<16x1xf32>
    %164 = vector.broadcast %163 : vector<16x1xf32> to vector<16x32xf32>
    %165 = arith.mulf %160, %164 : vector<16x32xf32>
    %166 = vector.broadcast %145 : vector<1x32xf32> to vector<16x32xf32>
    %167 = arith.mulf %165, %166 : vector<16x32xf32>
    %168 = vector.broadcast %147 : vector<1x32xf32> to vector<16x32xf32>
    %169 = arith.addf %167, %168 : vector<16x32xf32>
    %c0_63 = arith.constant 0 : index
    %c0_64 = arith.constant 0 : index
    %c0_65 = arith.constant 0 : index
    %170 = vector.load %arg11[%c0_63, %c0_64, %c0_65] : memref<2x32x128xf32, #tpu.memory_space<vmem>>, vector<1x32x128xf32>
    %171 = vector.shape_cast %170 : vector<1x32x128xf32> to vector<32x128xf32>
    %cst_66 = arith.constant dense<0.000000e+00> : vector<16x128xf32>
    %172 = tpu.matmul %169, %171, %cst_66 {dimension_numbers = #tpu.dot_dimension_numbers<[1], [0], [0], [1], [0, 0, 1, 1], [], []>} : vector<16x32xf32>, vector<32x128xf32>, vector<16x128xf32> -> vector<16x128xf32>
    %c0_67 = arith.constant 0 : index
    %c0_68 = arith.constant 0 : index
    %c0_69 = arith.constant 0 : index
    %173 = vector.load %arg12[%c0_67, %c0_68, %c0_69] : memref<2x1x128xf32, #tpu.memory_space<vmem>>, vector<1x1x128xf32>
    %174 = vector.shape_cast %173 : vector<1x1x128xf32> to vector<1x128xf32>
    %175 = vector.broadcast %174 : vector<1x128xf32> to vector<16x128xf32>
    %176 = arith.addf %172, %175 : vector<16x128xf32>
    %cst_70 = arith.constant 0.000000e+00 : f32
    %177 = vector.broadcast %cst_70 : f32 to vector<16x128xf32>
    %178 = arith.maximumf %176, %177 : vector<16x128xf32>
    %c0_71 = arith.constant 0 : index
    %c0_72 = arith.constant 0 : index
    %c0_73 = arith.constant 0 : index
    %179 = vector.load %arg13[%c0_71, %c0_72, %c0_73] : memref<2x128x32xf32, #tpu.memory_space<vmem>>, vector<1x128x32xf32>
    %180 = vector.shape_cast %179 : vector<1x128x32xf32> to vector<128x32xf32>
    %cst_74 = arith.constant dense<0.000000e+00> : vector<16x32xf32>
    %181 = tpu.matmul %178, %180, %cst_74 {dimension_numbers = #tpu.dot_dimension_numbers<[1], [0], [0], [1], [0, 0, 1, 1], [], []>} : vector<16x128xf32>, vector<128x32xf32>, vector<16x32xf32> -> vector<16x32xf32>
    %182 = arith.addf %143, %181 : vector<16x32xf32>
    %c0_75 = arith.constant 0 : index
    %c0_76 = arith.constant 0 : index
    %c0_77 = arith.constant 0 : index
    %183 = vector.load %arg14[%c0_75, %c0_76, %c0_77] : memref<2x1x32xf32, #tpu.memory_space<vmem>>, vector<1x1x32xf32>
    %184 = vector.shape_cast %183 : vector<1x1x32xf32> to vector<1x32xf32>
    %185 = vector.broadcast %184 : vector<1x32xf32> to vector<16x32xf32>
    %186 = arith.addf %182, %185 : vector<16x32xf32>
    %c1 = arith.constant 1 : index
    %c0_78 = arith.constant 0 : index
    %c0_79 = arith.constant 0 : index
    %187 = vector.load %arg4[%c1, %c0_78, %c0_79] : memref<2x1x32xf32, #tpu.memory_space<vmem>>, vector<1x1x32xf32>
    %188 = vector.shape_cast %187 : vector<1x1x32xf32> to vector<1x32xf32>
    %c1_80 = arith.constant 1 : index
    %c0_81 = arith.constant 0 : index
    %c0_82 = arith.constant 0 : index
    %189 = vector.load %arg5[%c1_80, %c0_81, %c0_82] : memref<2x1x32xf32, #tpu.memory_space<vmem>>, vector<1x1x32xf32>
    %190 = vector.shape_cast %189 : vector<1x1x32xf32> to vector<1x32xf32>
    %cst_83 = arith.constant dense<0.000000e+00> : vector<16xf32>
    %191 = vector.multi_reduction <add>, %186, %cst_83 [1] : vector<16x32xf32> to vector<16xf32>
    %192 = vector.shape_cast %191 : vector<16xf32> to vector<16x1xf32>
    %cst_84 = arith.constant 3.200000e+01 : f32
    %193 = vector.broadcast %cst_84 : f32 to vector<16x1xf32>
    %194 = arith.divf %192, %193 : vector<16x1xf32>
    %195 = vector.broadcast %194 : vector<16x1xf32> to vector<16x32xf32>
    %196 = arith.subf %186, %195 : vector<16x32xf32>
    %197 = arith.mulf %196, %196 : vector<16x32xf32>
    %cst_85 = arith.constant dense<0.000000e+00> : vector<16xf32>
    %198 = vector.multi_reduction <add>, %197, %cst_85 [1] : vector<16x32xf32> to vector<16xf32>
    %199 = vector.shape_cast %198 : vector<16xf32> to vector<16x1xf32>
    %cst_86 = arith.constant 3.200000e+01 : f32
    %200 = vector.broadcast %cst_86 : f32 to vector<16x1xf32>
    %201 = arith.divf %199, %200 : vector<16x1xf32>
    %202 = vector.broadcast %194 : vector<16x1xf32> to vector<16x32xf32>
    %203 = arith.subf %186, %202 : vector<16x32xf32>
    %cst_87 = arith.constant 9.99999974E-6 : f32
    %204 = vector.broadcast %cst_87 : f32 to vector<16x1xf32>
    %205 = arith.addf %201, %204 : vector<16x1xf32>
    %206 = math.rsqrt %205 : vector<16x1xf32>
    %207 = vector.broadcast %206 : vector<16x1xf32> to vector<16x32xf32>
    %208 = arith.mulf %203, %207 : vector<16x32xf32>
    %209 = vector.broadcast %188 : vector<1x32xf32> to vector<16x32xf32>
    %210 = arith.mulf %208, %209 : vector<16x32xf32>
    %211 = vector.broadcast %190 : vector<1x32xf32> to vector<16x32xf32>
    %212 = arith.addf %210, %211 : vector<16x32xf32>
    %c1_88 = arith.constant 1 : index
    %c0_89 = arith.constant 0 : index
    %c0_90 = arith.constant 0 : index
    %213 = vector.load %arg6[%c1_88, %c0_89, %c0_90] : memref<2x32x96xf32, #tpu.memory_space<vmem>>, vector<1x32x96xf32>
    %214 = vector.shape_cast %213 : vector<1x32x96xf32> to vector<32x96xf32>
    %cst_91 = arith.constant dense<0.000000e+00> : vector<16x96xf32>
    %215 = tpu.matmul %212, %214, %cst_91 {dimension_numbers = #tpu.dot_dimension_numbers<[1], [0], [0], [1], [0, 0, 1, 1], [], []>} : vector<16x32xf32>, vector<32x96xf32>, vector<16x96xf32> -> vector<16x96xf32>
    %216 = vector.shape_cast %215 : vector<16x96xf32> to vector<2x8x96xf32>
    %c1_92 = arith.constant 1 : index
    %c0_93 = arith.constant 0 : index
    %c0_94 = arith.constant 0 : index
    %217 = vector.load %arg7[%c1_92, %c0_93, %c0_94] : memref<2x32x32xf32, #tpu.memory_space<vmem>>, vector<1x32x32xf32>
    %218 = vector.shape_cast %217 : vector<1x32x32xf32> to vector<32x32xf32>
    %219 = vector.extract_strided_slice %216 {offsets = [0, 0, 0], sizes = [2, 8, 8], strides = [1, 1, 1]} : vector<2x8x96xf32> to vector<2x8x8xf32>
    %220 = vector.extract_strided_slice %216 {offsets = [0, 0, 32], sizes = [2, 8, 8], strides = [1, 1, 1]} : vector<2x8x96xf32> to vector<2x8x8xf32>
    %221 = vector.extract_strided_slice %216 {offsets = [0, 0, 64], sizes = [2, 8, 8], strides = [1, 1, 1]} : vector<2x8x96xf32> to vector<2x8x8xf32>
    "tpu.trace_start"() <{level = 10 : i32, message = "bqd,bkd->bqk"}> : () -> ()
    %cst_95 = arith.constant dense<0.000000e+00> : vector<2x8x8xf32>
    %222 = tpu.matmul %219, %220, %cst_95 {dimension_numbers = #tpu.dot_dimension_numbers<[2], [2], [1], [1], [0, 0, 0, 1, 1, 1], [0], [0]>} : vector<2x8x8xf32>, vector<2x8x8xf32>, vector<2x8x8xf32> -> vector<2x8x8xf32>
    "tpu.trace_stop"() : () -> ()
    %cst_96 = arith.constant 0.176776692 : f32
    %223 = vector.broadcast %cst_96 : f32 to vector<2x8x8xf32>
    %224 = arith.mulf %222, %223 : vector<2x8x8xf32>
    %225 = arith.addf %224, %19 : vector<2x8x8xf32>
    %cst_97 = arith.constant dense<0xFF800000> : vector<2x8xf32>
    %226 = vector.multi_reduction <maximumf>, %225, %cst_97 [2] : vector<2x8x8xf32> to vector<2x8xf32>
    %227 = vector.shape_cast %226 : vector<2x8xf32> to vector<2x8x1xf32>
    %228 = vector.broadcast %227 : vector<2x8x1xf32> to vector<2x8x8xf32>
    %229 = arith.subf %225, %228 : vector<2x8x8xf32>
    %230 = math.exp %229 : vector<2x8x8xf32>
    %cst_98 = arith.constant dense<0.000000e+00> : vector<2x8xf32>
    %231 = vector.multi_reduction <add>, %230, %cst_98 [2] : vector<2x8x8xf32> to vector<2x8xf32>
    %232 = vector.shape_cast %231 : vector<2x8xf32> to vector<2x8x1xf32>
    %233 = tpu.reciprocal %232 {approx = true} : vector<2x8x1xf32> -> vector<2x8x1xf32>
    %234 = vector.broadcast %233 : vector<2x8x1xf32> to vector<2x8x8xf32>
    %235 = arith.mulf %230, %234 : vector<2x8x8xf32>
    "tpu.trace_start"() <{level = 10 : i32, message = "bqk,bkd->bqd"}> : () -> ()
    %cst_99 = arith.constant dense<0.000000e+00> : vector<2x8x8xf32>
    %236 = tpu.matmul %235, %221, %cst_99 {dimension_numbers = #tpu.dot_dimension_numbers<[2], [1], [1], [2], [0, 0, 0, 1, 1, 2], [0], [0]>} : vector<2x8x8xf32>, vector<2x8x8xf32>, vector<2x8x8xf32> -> vector<2x8x8xf32>
    "tpu.trace_stop"() : () -> ()
    %237 = vector.shape_cast %236 : vector<2x8x8xf32> to vector<16x8xf32>
    %238 = vector.extract_strided_slice %218 {offsets = [0, 0], sizes = [8, 32], strides = [1, 1]} : vector<32x32xf32> to vector<8x32xf32>
    %cst_100 = arith.constant dense<0.000000e+00> : vector<16x32xf32>
    %239 = tpu.matmul %237, %238, %cst_100 {dimension_numbers = #tpu.dot_dimension_numbers<[1], [0], [0], [1], [0, 0, 1, 1], [], []>} : vector<16x8xf32>, vector<8x32xf32>, vector<16x32xf32> -> vector<16x32xf32>
    %240 = vector.extract_strided_slice %216 {offsets = [0, 0, 8], sizes = [2, 8, 8], strides = [1, 1, 1]} : vector<2x8x96xf32> to vector<2x8x8xf32>
    %241 = vector.extract_strided_slice %216 {offsets = [0, 0, 40], sizes = [2, 8, 8], strides = [1, 1, 1]} : vector<2x8x96xf32> to vector<2x8x8xf32>
    %242 = vector.extract_strided_slice %216 {offsets = [0, 0, 72], sizes = [2, 8, 8], strides = [1, 1, 1]} : vector<2x8x96xf32> to vector<2x8x8xf32>
    "tpu.trace_start"() <{level = 10 : i32, message = "bqd,bkd->bqk"}> : () -> ()
    %cst_101 = arith.constant dense<0.000000e+00> : vector<2x8x8xf32>
    %243 = tpu.matmul %240, %241, %cst_101 {dimension_numbers = #tpu.dot_dimension_numbers<[2], [2], [1], [1], [0, 0, 0, 1, 1, 1], [0], [0]>} : vector<2x8x8xf32>, vector<2x8x8xf32>, vector<2x8x8xf32> -> vector<2x8x8xf32>
    "tpu.trace_stop"() : () -> ()
    %cst_102 = arith.constant 0.176776692 : f32
    %244 = vector.broadcast %cst_102 : f32 to vector<2x8x8xf32>
    %245 = arith.mulf %243, %244 : vector<2x8x8xf32>
    %246 = arith.addf %245, %19 : vector<2x8x8xf32>
    %cst_103 = arith.constant dense<0xFF800000> : vector<2x8xf32>
    %247 = vector.multi_reduction <maximumf>, %246, %cst_103 [2] : vector<2x8x8xf32> to vector<2x8xf32>
    %248 = vector.shape_cast %247 : vector<2x8xf32> to vector<2x8x1xf32>
    %249 = vector.broadcast %248 : vector<2x8x1xf32> to vector<2x8x8xf32>
    %250 = arith.subf %246, %249 : vector<2x8x8xf32>
    %251 = math.exp %250 : vector<2x8x8xf32>
    %cst_104 = arith.constant dense<0.000000e+00> : vector<2x8xf32>
    %252 = vector.multi_reduction <add>, %251, %cst_104 [2] : vector<2x8x8xf32> to vector<2x8xf32>
    %253 = vector.shape_cast %252 : vector<2x8xf32> to vector<2x8x1xf32>
    %254 = tpu.reciprocal %253 {approx = true} : vector<2x8x1xf32> -> vector<2x8x1xf32>
    %255 = vector.broadcast %254 : vector<2x8x1xf32> to vector<2x8x8xf32>
    %256 = arith.mulf %251, %255 : vector<2x8x8xf32>
    "tpu.trace_start"() <{level = 10 : i32, message = "bqk,bkd->bqd"}> : () -> ()
    %cst_105 = arith.constant dense<0.000000e+00> : vector<2x8x8xf32>
    %257 = tpu.matmul %256, %242, %cst_105 {dimension_numbers = #tpu.dot_dimension_numbers<[2], [1], [1], [2], [0, 0, 0, 1, 1, 2], [0], [0]>} : vector<2x8x8xf32>, vector<2x8x8xf32>, vector<2x8x8xf32> -> vector<2x8x8xf32>
    "tpu.trace_stop"() : () -> ()
    %258 = vector.shape_cast %257 : vector<2x8x8xf32> to vector<16x8xf32>
    %259 = vector.extract_strided_slice %218 {offsets = [8, 0], sizes = [8, 32], strides = [1, 1]} : vector<32x32xf32> to vector<8x32xf32>
    %cst_106 = arith.constant dense<0.000000e+00> : vector<16x32xf32>
    %260 = tpu.matmul %258, %259, %cst_106 {dimension_numbers = #tpu.dot_dimension_numbers<[1], [0], [0], [1], [0, 0, 1, 1], [], []>} : vector<16x8xf32>, vector<8x32xf32>, vector<16x32xf32> -> vector<16x32xf32>
    %261 = arith.addf %239, %260 : vector<16x32xf32>
    %262 = vector.extract_strided_slice %216 {offsets = [0, 0, 16], sizes = [2, 8, 8], strides = [1, 1, 1]} : vector<2x8x96xf32> to vector<2x8x8xf32>
    %263 = vector.extract_strided_slice %216 {offsets = [0, 0, 48], sizes = [2, 8, 8], strides = [1, 1, 1]} : vector<2x8x96xf32> to vector<2x8x8xf32>
    %264 = vector.extract_strided_slice %216 {offsets = [0, 0, 80], sizes = [2, 8, 8], strides = [1, 1, 1]} : vector<2x8x96xf32> to vector<2x8x8xf32>
    "tpu.trace_start"() <{level = 10 : i32, message = "bqd,bkd->bqk"}> : () -> ()
    %cst_107 = arith.constant dense<0.000000e+00> : vector<2x8x8xf32>
    %265 = tpu.matmul %262, %263, %cst_107 {dimension_numbers = #tpu.dot_dimension_numbers<[2], [2], [1], [1], [0, 0, 0, 1, 1, 1], [0], [0]>} : vector<2x8x8xf32>, vector<2x8x8xf32>, vector<2x8x8xf32> -> vector<2x8x8xf32>
    "tpu.trace_stop"() : () -> ()
    %cst_108 = arith.constant 0.176776692 : f32
    %266 = vector.broadcast %cst_108 : f32 to vector<2x8x8xf32>
    %267 = arith.mulf %265, %266 : vector<2x8x8xf32>
    %268 = arith.addf %267, %19 : vector<2x8x8xf32>
    %cst_109 = arith.constant dense<0xFF800000> : vector<2x8xf32>
    %269 = vector.multi_reduction <maximumf>, %268, %cst_109 [2] : vector<2x8x8xf32> to vector<2x8xf32>
    %270 = vector.shape_cast %269 : vector<2x8xf32> to vector<2x8x1xf32>
    %271 = vector.broadcast %270 : vector<2x8x1xf32> to vector<2x8x8xf32>
    %272 = arith.subf %268, %271 : vector<2x8x8xf32>
    %273 = math.exp %272 : vector<2x8x8xf32>
    %cst_110 = arith.constant dense<0.000000e+00> : vector<2x8xf32>
    %274 = vector.multi_reduction <add>, %273, %cst_110 [2] : vector<2x8x8xf32> to vector<2x8xf32>
    %275 = vector.shape_cast %274 : vector<2x8xf32> to vector<2x8x1xf32>
    %276 = tpu.reciprocal %275 {approx = true} : vector<2x8x1xf32> -> vector<2x8x1xf32>
    %277 = vector.broadcast %276 : vector<2x8x1xf32> to vector<2x8x8xf32>
    %278 = arith.mulf %273, %277 : vector<2x8x8xf32>
    "tpu.trace_start"() <{level = 10 : i32, message = "bqk,bkd->bqd"}> : () -> ()
    %cst_111 = arith.constant dense<0.000000e+00> : vector<2x8x8xf32>
    %279 = tpu.matmul %278, %264, %cst_111 {dimension_numbers = #tpu.dot_dimension_numbers<[2], [1], [1], [2], [0, 0, 0, 1, 1, 2], [0], [0]>} : vector<2x8x8xf32>, vector<2x8x8xf32>, vector<2x8x8xf32> -> vector<2x8x8xf32>
    "tpu.trace_stop"() : () -> ()
    %280 = vector.shape_cast %279 : vector<2x8x8xf32> to vector<16x8xf32>
    %281 = vector.extract_strided_slice %218 {offsets = [16, 0], sizes = [8, 32], strides = [1, 1]} : vector<32x32xf32> to vector<8x32xf32>
    %cst_112 = arith.constant dense<0.000000e+00> : vector<16x32xf32>
    %282 = tpu.matmul %280, %281, %cst_112 {dimension_numbers = #tpu.dot_dimension_numbers<[1], [0], [0], [1], [0, 0, 1, 1], [], []>} : vector<16x8xf32>, vector<8x32xf32>, vector<16x32xf32> -> vector<16x32xf32>
    %283 = arith.addf %261, %282 : vector<16x32xf32>
    %284 = vector.extract_strided_slice %216 {offsets = [0, 0, 24], sizes = [2, 8, 8], strides = [1, 1, 1]} : vector<2x8x96xf32> to vector<2x8x8xf32>
    %285 = vector.extract_strided_slice %216 {offsets = [0, 0, 56], sizes = [2, 8, 8], strides = [1, 1, 1]} : vector<2x8x96xf32> to vector<2x8x8xf32>
    %286 = vector.extract_strided_slice %216 {offsets = [0, 0, 88], sizes = [2, 8, 8], strides = [1, 1, 1]} : vector<2x8x96xf32> to vector<2x8x8xf32>
    "tpu.trace_start"() <{level = 10 : i32, message = "bqd,bkd->bqk"}> : () -> ()
    %cst_113 = arith.constant dense<0.000000e+00> : vector<2x8x8xf32>
    %287 = tpu.matmul %284, %285, %cst_113 {dimension_numbers = #tpu.dot_dimension_numbers<[2], [2], [1], [1], [0, 0, 0, 1, 1, 1], [0], [0]>} : vector<2x8x8xf32>, vector<2x8x8xf32>, vector<2x8x8xf32> -> vector<2x8x8xf32>
    "tpu.trace_stop"() : () -> ()
    %cst_114 = arith.constant 0.176776692 : f32
    %288 = vector.broadcast %cst_114 : f32 to vector<2x8x8xf32>
    %289 = arith.mulf %287, %288 : vector<2x8x8xf32>
    %290 = arith.addf %289, %19 : vector<2x8x8xf32>
    %cst_115 = arith.constant dense<0xFF800000> : vector<2x8xf32>
    %291 = vector.multi_reduction <maximumf>, %290, %cst_115 [2] : vector<2x8x8xf32> to vector<2x8xf32>
    %292 = vector.shape_cast %291 : vector<2x8xf32> to vector<2x8x1xf32>
    %293 = vector.broadcast %292 : vector<2x8x1xf32> to vector<2x8x8xf32>
    %294 = arith.subf %290, %293 : vector<2x8x8xf32>
    %295 = math.exp %294 : vector<2x8x8xf32>
    %cst_116 = arith.constant dense<0.000000e+00> : vector<2x8xf32>
    %296 = vector.multi_reduction <add>, %295, %cst_116 [2] : vector<2x8x8xf32> to vector<2x8xf32>
    %297 = vector.shape_cast %296 : vector<2x8xf32> to vector<2x8x1xf32>
    %298 = tpu.reciprocal %297 {approx = true} : vector<2x8x1xf32> -> vector<2x8x1xf32>
    %299 = vector.broadcast %298 : vector<2x8x1xf32> to vector<2x8x8xf32>
    %300 = arith.mulf %295, %299 : vector<2x8x8xf32>
    "tpu.trace_start"() <{level = 10 : i32, message = "bqk,bkd->bqd"}> : () -> ()
    %cst_117 = arith.constant dense<0.000000e+00> : vector<2x8x8xf32>
    %301 = tpu.matmul %300, %286, %cst_117 {dimension_numbers = #tpu.dot_dimension_numbers<[2], [1], [1], [2], [0, 0, 0, 1, 1, 2], [0], [0]>} : vector<2x8x8xf32>, vector<2x8x8xf32>, vector<2x8x8xf32> -> vector<2x8x8xf32>
    "tpu.trace_stop"() : () -> ()
    %302 = vector.shape_cast %301 : vector<2x8x8xf32> to vector<16x8xf32>
    %303 = vector.extract_strided_slice %218 {offsets = [24, 0], sizes = [8, 32], strides = [1, 1]} : vector<32x32xf32> to vector<8x32xf32>
    %cst_118 = arith.constant dense<0.000000e+00> : vector<16x32xf32>
    %304 = tpu.matmul %302, %303, %cst_118 {dimension_numbers = #tpu.dot_dimension_numbers<[1], [0], [0], [1], [0, 0, 1, 1], [], []>} : vector<16x8xf32>, vector<8x32xf32>, vector<16x32xf32> -> vector<16x32xf32>
    %305 = arith.addf %283, %304 : vector<16x32xf32>
    %306 = arith.addf %186, %305 : vector<16x32xf32>
    %c1_119 = arith.constant 1 : index
    %c0_120 = arith.constant 0 : index
    %c0_121 = arith.constant 0 : index
    %307 = vector.load %arg8[%c1_119, %c0_120, %c0_121] : memref<2x1x32xf32, #tpu.memory_space<vmem>>, vector<1x1x32xf32>
    %308 = vector.shape_cast %307 : vector<1x1x32xf32> to vector<1x32xf32>
    %309 = vector.broadcast %308 : vector<1x32xf32> to vector<16x32xf32>
    %310 = arith.addf %306, %309 : vector<16x32xf32>
    %c1_122 = arith.constant 1 : index
    %c0_123 = arith.constant 0 : index
    %c0_124 = arith.constant 0 : index
    %311 = vector.load %arg9[%c1_122, %c0_123, %c0_124] : memref<2x1x32xf32, #tpu.memory_space<vmem>>, vector<1x1x32xf32>
    %312 = vector.shape_cast %311 : vector<1x1x32xf32> to vector<1x32xf32>
    %c1_125 = arith.constant 1 : index
    %c0_126 = arith.constant 0 : index
    %c0_127 = arith.constant 0 : index
    %313 = vector.load %arg10[%c1_125, %c0_126, %c0_127] : memref<2x1x32xf32, #tpu.memory_space<vmem>>, vector<1x1x32xf32>
    %314 = vector.shape_cast %313 : vector<1x1x32xf32> to vector<1x32xf32>
    %cst_128 = arith.constant dense<0.000000e+00> : vector<16xf32>
    %315 = vector.multi_reduction <add>, %310, %cst_128 [1] : vector<16x32xf32> to vector<16xf32>
    %316 = vector.shape_cast %315 : vector<16xf32> to vector<16x1xf32>
    %cst_129 = arith.constant 3.200000e+01 : f32
    %317 = vector.broadcast %cst_129 : f32 to vector<16x1xf32>
    %318 = arith.divf %316, %317 : vector<16x1xf32>
    %319 = vector.broadcast %318 : vector<16x1xf32> to vector<16x32xf32>
    %320 = arith.subf %310, %319 : vector<16x32xf32>
    %321 = arith.mulf %320, %320 : vector<16x32xf32>
    %cst_130 = arith.constant dense<0.000000e+00> : vector<16xf32>
    %322 = vector.multi_reduction <add>, %321, %cst_130 [1] : vector<16x32xf32> to vector<16xf32>
    %323 = vector.shape_cast %322 : vector<16xf32> to vector<16x1xf32>
    %cst_131 = arith.constant 3.200000e+01 : f32
    %324 = vector.broadcast %cst_131 : f32 to vector<16x1xf32>
    %325 = arith.divf %323, %324 : vector<16x1xf32>
    %326 = vector.broadcast %318 : vector<16x1xf32> to vector<16x32xf32>
    %327 = arith.subf %310, %326 : vector<16x32xf32>
    %cst_132 = arith.constant 9.99999974E-6 : f32
    %328 = vector.broadcast %cst_132 : f32 to vector<16x1xf32>
    %329 = arith.addf %325, %328 : vector<16x1xf32>
    %330 = math.rsqrt %329 : vector<16x1xf32>
    %331 = vector.broadcast %330 : vector<16x1xf32> to vector<16x32xf32>
    %332 = arith.mulf %327, %331 : vector<16x32xf32>
    %333 = vector.broadcast %312 : vector<1x32xf32> to vector<16x32xf32>
    %334 = arith.mulf %332, %333 : vector<16x32xf32>
    %335 = vector.broadcast %314 : vector<1x32xf32> to vector<16x32xf32>
    %336 = arith.addf %334, %335 : vector<16x32xf32>
    %c1_133 = arith.constant 1 : index
    %c0_134 = arith.constant 0 : index
    %c0_135 = arith.constant 0 : index
    %337 = vector.load %arg11[%c1_133, %c0_134, %c0_135] : memref<2x32x128xf32, #tpu.memory_space<vmem>>, vector<1x32x128xf32>
    %338 = vector.shape_cast %337 : vector<1x32x128xf32> to vector<32x128xf32>
    %cst_136 = arith.constant dense<0.000000e+00> : vector<16x128xf32>
    %339 = tpu.matmul %336, %338, %cst_136 {dimension_numbers = #tpu.dot_dimension_numbers<[1], [0], [0], [1], [0, 0, 1, 1], [], []>} : vector<16x32xf32>, vector<32x128xf32>, vector<16x128xf32> -> vector<16x128xf32>
    %c1_137 = arith.constant 1 : index
    %c0_138 = arith.constant 0 : index
    %c0_139 = arith.constant 0 : index
    %340 = vector.load %arg12[%c1_137, %c0_138, %c0_139] : memref<2x1x128xf32, #tpu.memory_space<vmem>>, vector<1x1x128xf32>
    %341 = vector.shape_cast %340 : vector<1x1x128xf32> to vector<1x128xf32>
    %342 = vector.broadcast %341 : vector<1x128xf32> to vector<16x128xf32>
    %343 = arith.addf %339, %342 : vector<16x128xf32>
    %cst_140 = arith.constant 0.000000e+00 : f32
    %344 = vector.broadcast %cst_140 : f32 to vector<16x128xf32>
    %345 = arith.maximumf %343, %344 : vector<16x128xf32>
    %c1_141 = arith.constant 1 : index
    %c0_142 = arith.constant 0 : index
    %c0_143 = arith.constant 0 : index
    %346 = vector.load %arg13[%c1_141, %c0_142, %c0_143] : memref<2x128x32xf32, #tpu.memory_space<vmem>>, vector<1x128x32xf32>
    %347 = vector.shape_cast %346 : vector<1x128x32xf32> to vector<128x32xf32>
    %cst_144 = arith.constant dense<0.000000e+00> : vector<16x32xf32>
    %348 = tpu.matmul %345, %347, %cst_144 {dimension_numbers = #tpu.dot_dimension_numbers<[1], [0], [0], [1], [0, 0, 1, 1], [], []>} : vector<16x128xf32>, vector<128x32xf32>, vector<16x32xf32> -> vector<16x32xf32>
    %349 = arith.addf %310, %348 : vector<16x32xf32>
    %c1_145 = arith.constant 1 : index
    %c0_146 = arith.constant 0 : index
    %c0_147 = arith.constant 0 : index
    %350 = vector.load %arg14[%c1_145, %c0_146, %c0_147] : memref<2x1x32xf32, #tpu.memory_space<vmem>>, vector<1x1x32xf32>
    %351 = vector.shape_cast %350 : vector<1x1x32xf32> to vector<1x32xf32>
    %352 = vector.broadcast %351 : vector<1x32xf32> to vector<16x32xf32>
    %353 = arith.addf %349, %352 : vector<16x32xf32>
    %c0_148 = arith.constant 0 : index
    %c0_149 = arith.constant 0 : index
    %354 = vector.load %arg15[%c0_148, %c0_149] : memref<1x32xf32, #tpu.memory_space<vmem>>, vector<1x32xf32>
    %c0_150 = arith.constant 0 : index
    %c0_151 = arith.constant 0 : index
    %355 = vector.load %arg16[%c0_150, %c0_151] : memref<1x32xf32, #tpu.memory_space<vmem>>, vector<1x32xf32>
    %cst_152 = arith.constant dense<0.000000e+00> : vector<16xf32>
    %356 = vector.multi_reduction <add>, %353, %cst_152 [1] : vector<16x32xf32> to vector<16xf32>
    %357 = vector.shape_cast %356 : vector<16xf32> to vector<16x1xf32>
    %cst_153 = arith.constant 3.200000e+01 : f32
    %358 = vector.broadcast %cst_153 : f32 to vector<16x1xf32>
    %359 = arith.divf %357, %358 : vector<16x1xf32>
    %360 = vector.broadcast %359 : vector<16x1xf32> to vector<16x32xf32>
    %361 = arith.subf %353, %360 : vector<16x32xf32>
    %362 = arith.mulf %361, %361 : vector<16x32xf32>
    %cst_154 = arith.constant dense<0.000000e+00> : vector<16xf32>
    %363 = vector.multi_reduction <add>, %362, %cst_154 [1] : vector<16x32xf32> to vector<16xf32>
    %364 = vector.shape_cast %363 : vector<16xf32> to vector<16x1xf32>
    %cst_155 = arith.constant 3.200000e+01 : f32
    %365 = vector.broadcast %cst_155 : f32 to vector<16x1xf32>
    %366 = arith.divf %364, %365 : vector<16x1xf32>
    %367 = vector.broadcast %359 : vector<16x1xf32> to vector<16x32xf32>
    %368 = arith.subf %353, %367 : vector<16x32xf32>
    %cst_156 = arith.constant 9.99999974E-6 : f32
    %369 = vector.broadcast %cst_156 : f32 to vector<16x1xf32>
    %370 = arith.addf %366, %369 : vector<16x1xf32>
    %371 = math.rsqrt %370 : vector<16x1xf32>
    %372 = vector.broadcast %371 : vector<16x1xf32> to vector<16x32xf32>
    %373 = arith.mulf %368, %372 : vector<16x32xf32>
    %374 = vector.broadcast %354 : vector<1x32xf32> to vector<16x32xf32>
    %375 = arith.mulf %373, %374 : vector<16x32xf32>
    %376 = vector.broadcast %355 : vector<1x32xf32> to vector<16x32xf32>
    %377 = arith.addf %375, %376 : vector<16x32xf32>
    %c0_157 = arith.constant 0 : index
    %c0_158 = arith.constant 0 : index
    %378 = vector.load %arg17[%c0_157, %c0_158] : memref<32x128xf32, #tpu.memory_space<vmem>>, vector<32x128xf32>
    %cst_159 = arith.constant dense<0.000000e+00> : vector<16x128xf32>
    %379 = tpu.matmul %377, %378, %cst_159 {dimension_numbers = #tpu.dot_dimension_numbers<[1], [0], [0], [1], [0, 0, 1, 1], [], []>} : vector<16x32xf32>, vector<32x128xf32>, vector<16x128xf32> -> vector<16x128xf32>
    %c0_160 = arith.constant 0 : index
    %c0_161 = arith.constant 0 : index
    %380 = vector.load %arg18[%c0_160, %c0_161] : memref<1x128xf32, #tpu.memory_space<vmem>>, vector<1x128xf32>
    %381 = vector.broadcast %380 : vector<1x128xf32> to vector<16x128xf32>
    %382 = arith.addf %379, %381 : vector<16x128xf32>
    %c0_162 = arith.constant 0 : index
    %c0_163 = arith.constant 0 : index
    %383 = vector.load %arg19[%c0_162, %c0_163] : memref<16x128xf32, #tpu.memory_space<vmem>>, vector<16x128xf32>
    tpu.vector_store %arg19[%c0_162, %c0_163], %382 {strides = array<i32>} : memref<16x128xf32, #tpu.memory_space<vmem>>, vector<16x128xf32>,
    return
  }
  func.func @transform_0(%arg0: i32) -> (i32, i32) {
    %c0_i32 = arith.constant 0 : i32
    %c0_i32_0 = arith.constant 0 : i32
    %c0_i32_1 = arith.constant 0 : i32
    return %c0_i32, %c0_i32_0 : i32, i32
  }
  func.func @transform_1(%arg0: i32) -> (i32, i32) {
    %c0_i32 = arith.constant 0 : i32
    %c0_i32_0 = arith.constant 0 : i32
    %c0_i32_1 = arith.constant 0 : i32
    return %c0_i32, %c0_i32_0 : i32, i32
  }
  func.func @transform_2(%arg0: i32) -> (i32, i32) {
    %c0_i32 = arith.constant 0 : i32
    %c0_i32_0 = arith.constant 0 : i32
    %c0_i32_1 = arith.constant 0 : i32
    return %c0_i32, %c0_i32_0 : i32, i32
  }
  func.func @transform_3(%arg0: i32) -> (i32, i32, i32) {
    %c0_i32 = arith.constant 0 : i32
    %c0_i32_0 = arith.constant 0 : i32
    %c0_i32_1 = arith.constant 0 : i32
    %c0_i32_2 = arith.constant 0 : i32
    return %c0_i32, %c0_i32_0, %c0_i32_1 : i32, i32, i32
  }
  func.func @transform_4(%arg0: i32) -> (i32, i32, i32) {
    %c0_i32 = arith.constant 0 : i32
    %c0_i32_0 = arith.constant 0 : i32
    %c0_i32_1 = arith.constant 0 : i32
    %c0_i32_2 = arith.constant 0 : i32
    return %c0_i32, %c0_i32_0, %c0_i32_1 : i32, i32, i32
  }
  func.func @transform_5(%arg0: i32) -> (i32, i32, i32) {
    %c0_i32 = arith.constant 0 : i32
    %c0_i32_0 = arith.constant 0 : i32
    %c0_i32_1 = arith.constant 0 : i32
    %c0_i32_2 = arith.constant 0 : i32
    return %c0_i32, %c0_i32_0, %c0_i32_1 : i32, i32, i32
  }
  func.func @transform_6(%arg0: i32) -> (i32, i32, i32) {
    %c0_i32 = arith.constant 0 : i32
    %c0_i32_0 = arith.constant 0 : i32
    %c0_i32_1 = arith.constant 0 : i32
    %c0_i32_2 = arith.constant 0 : i32
    return %c0_i32, %c0_i32_0, %c0_i32_1 : i32, i32, i32
  }
  func.func @transform_7(%arg0: i32) -> (i32, i32, i32) {
    %c0_i32 = arith.constant 0 : i32
    %c0_i32_0 = arith.constant 0 : i32
    %c0_i32_1 = arith.constant 0 : i32
    %c0_i32_2 = arith.constant 0 : i32
    return %c0_i32, %c0_i32_0, %c0_i32_1 : i32, i32, i32
  }
  func.func @transform_8(%arg0: i32) -> (i32, i32, i32) {
    %c0_i32 = arith.constant 0 : i32
    %c0_i32_0 = arith.constant 0 : i32
    %c0_i32_1 = arith.constant 0 : i32
    %c0_i32_2 = arith.constant 0 : i32
    return %c0_i32, %c0_i32_0, %c0_i32_1 : i32, i32, i32
  }
  func.func @transform_9(%arg0: i32) -> (i32, i32, i32) {
    %c0_i32 = arith.constant 0 : i32
    %c0_i32_0 = arith.constant 0 : i32
    %c0_i32_1 = arith.constant 0 : i32
    %c0_i32_2 = arith.constant 0 : i32
    return %c0_i32, %c0_i32_0, %c0_i32_1 : i32, i32, i32
  }
  func.func @transform_10(%arg0: i32) -> (i32, i32, i32) {
    %c0_i32 = arith.constant 0 : i32
    %c0_i32_0 = arith.constant 0 : i32
    %c0_i32_1 = arith.constant 0 : i32
    %c0_i32_2 = arith.constant 0 : i32
    return %c0_i32, %c0_i32_0, %c0_i32_1 : i32, i32, i32
  }
  func.func @transform_11(%arg0: i32) -> (i32, i32, i32) {
    %c0_i32 = arith.constant 0 : i32
    %c0_i32_0 = arith.constant 0 : i32
    %c0_i32_1 = arith.constant 0 : i32
    %c0_i32_2 = arith.constant 0 : i32
    return %c0_i32, %c0_i32_0, %c0_i32_1 : i32, i32, i32
  }
  func.func @transform_12(%arg0: i32) -> (i32, i32, i32) {
    %c0_i32 = arith.constant 0 : i32
    %c0_i32_0 = arith.constant 0 : i32
    %c0_i32_1 = arith.constant 0 : i32
    %c0_i32_2 = arith.constant 0 : i32
    return %c0_i32, %c0_i32_0, %c0_i32_1 : i32, i32, i32
  }
  func.func @transform_13(%arg0: i32) -> (i32, i32, i32) {
    %c0_i32 = arith.constant 0 : i32
    %c0_i32_0 = arith.constant 0 : i32
    %c0_i32_1 = arith.constant 0 : i32
    %c0_i32_2 = arith.constant 0 : i32
    return %c0_i32, %c0_i32_0, %c0_i32_1 : i32, i32, i32
  }
  func.func @transform_14(%arg0: i32) -> (i32, i32) {
    %c0_i32 = arith.constant 0 : i32
    %c0_i32_0 = arith.constant 0 : i32
    %c0_i32_1 = arith.constant 0 : i32
    return %c0_i32, %c0_i32_0 : i32, i32
  }
  func.func @transform_15(%arg0: i32) -> (i32, i32) {
    %c0_i32 = arith.constant 0 : i32
    %c0_i32_0 = arith.constant 0 : i32
    %c0_i32_1 = arith.constant 0 : i32
    return %c0_i32, %c0_i32_0 : i32, i32
  }
  func.func @transform_16(%arg0: i32) -> (i32, i32) {
    %c0_i32 = arith.constant 0 : i32
    %c0_i32_0 = arith.constant 0 : i32
    %c0_i32_1 = arith.constant 0 : i32
    return %c0_i32, %c0_i32_0 : i32, i32
  }
  func.func @transform_17(%arg0: i32) -> (i32, i32) {
    %c0_i32 = arith.constant 0 : i32
    %c0_i32_0 = arith.constant 0 : i32
    %c0_i32_1 = arith.constant 0 : i32
    return %c0_i32, %c0_i32_0 : i32, i32
  }
  func.func @transform_18(%arg0: i32) -> (i32, i32) {
    %c0_i32 = arith.constant 0 : i32
    %c0_i32_0 = arith.constant 0 : i32
    %c0_i32_1 = arith.constant 0 : i32
    return %c0_i32, %c0_i32_0 : i32, i32
  }
}

</mosaic_0001>

<llo_original>
// kernel: tpu_custom_call.1
$region0: #{tpu_custom_call.1}
  #allocation0 [shape = 'u32[]', space=smem, size = 0x4, offset = 0x4, fixed_abs, tag = 'smem constant byte address 0x4 - core index']
  #allocation1 [shape = 'u32[144,128]{1,0:T(1,128)}', space=vmem, size = 0x12000, scoped, tag = 'internal scratch']
  %s0 = inlined_call_operand.vmem [shape: s32[16,1], index: 0, kind: input, shape index: {}]
  %s1 = inlined_call_operand.vmem [shape: f32[128,32], index: 1, kind: input, shape index: {}]
  %s2 = inlined_call_operand.vmem [shape: f32[8,32], index: 2, kind: input, shape index: {}]
  %s3 = inlined_call_operand.vmem [shape: f32[2,1,32], index: 3, kind: input, shape index: {}]
  %s4 = inlined_call_operand.vmem [shape: f32[2,1,32], index: 4, kind: input, shape index: {}]
  %s5 = inlined_call_operand.vmem [shape: f32[2,32,96], index: 5, kind: input, shape index: {}]
  %s6 = inlined_call_operand.vmem [shape: f32[2,32,32], index: 6, kind: input, shape index: {}]
  %s7 = inlined_call_operand.vmem [shape: f32[2,1,32], index: 7, kind: input, shape index: {}]
  %s8 = inlined_call_operand.vmem [shape: f32[2,1,32], index: 8, kind: input, shape index: {}]
  %s9 = inlined_call_operand.vmem [shape: f32[2,1,32], index: 9, kind: input, shape index: {}]
  %s10 = inlined_call_operand.vmem [shape: f32[2,32,128], index: 10, kind: input, shape index: {}]
  %s11 = inlined_call_operand.vmem [shape: f32[2,1,128], index: 11, kind: input, shape index: {}]
  %s12 = inlined_call_operand.vmem [shape: f32[2,128,32], index: 12, kind: input, shape index: {}]
  %s13 = inlined_call_operand.vmem [shape: f32[2,1,32], index: 13, kind: input, shape index: {}]
  %s14 = inlined_call_operand.vmem [shape: f32[1,32], index: 14, kind: input, shape index: {}]
  %s15 = inlined_call_operand.vmem [shape: f32[1,32], index: 15, kind: input, shape index: {}]
  %s16 = inlined_call_operand.vmem [shape: f32[32,128], index: 16, kind: input, shape index: {}]
  %s17 = inlined_call_operand.vmem [shape: f32[1,128], index: 17, kind: input, shape index: {}]
  %s18 = inlined_call_operand.hbm [shape: f32[16,128], index: 18, kind: output, shape index: {}]
  %s19 = sld [smem:[#allocation0]]
  $region82: #{tpu_custom_call.1} parent=0
    _
  %s21 = ssub.s32 1, %s19
  %s22 = scalar_select 0, %s21, %s19
  $region1: #{tpu_custom_call.1} parent=0
    #allocation2 [shape = 'u8[8192]{0}', space=vmem, size = 0x2000, scoped, tag = 'output window, operand 0, single buffered']
    #allocation3 [shape = 's32[1]{0}', space=sflag, size = 0x4, scoped, tag = 'scoped memory for tpu_custom_call.1']
    %23 = vsyncpa [#allocation3], 0
    // Predicated region
    $region2: #{tpu_custom_call.1} parent=1 // pred_check
      _
    $region3: #{tpu_custom_call.1} parent=1 // pred_check_branch
      %25 = sbr.rel (0) target = $region5
    $region4: #{tpu_custom_call.1} parent=1 // pred_region
      _
    $region5: #{tpu_custom_call.1} parent=1 // pred_fallthru
      _
    // Predicated region
    $region6: #{tpu_custom_call.1} parent=1 // pred_check
      _
    $region7: #{tpu_custom_call.1} parent=1 // pred_check_branch
      %27 = sbr.rel (0) target = $region9
    $region8: #{tpu_custom_call.1} parent=1 // pred_region
      _
    $region9: #{tpu_custom_call.1} parent=1 // pred_fallthru
      _
    // Predicated region
    $region10: #{tpu_custom_call.1} parent=1 // pred_check
      _
    $region11: #{tpu_custom_call.1} parent=1 // pred_check_branch
      %29 = sbr.rel (0) target = $region13
    $region12: #{tpu_custom_call.1} parent=1 // pred_region
      _
    $region13: #{tpu_custom_call.1} parent=1 // pred_fallthru
      _
    // Predicated region
    $region14: #{tpu_custom_call.1} parent=1 // pred_check
      _
    $region15: #{tpu_custom_call.1} parent=1 // pred_check_branch
      %31 = sbr.rel (0) target = $region17
    $region16: #{tpu_custom_call.1} parent=1 // pred_region
      _
    $region17: #{tpu_custom_call.1} parent=1 // pred_fallthru
      _
    // Predicated region
    $region18: #{tpu_custom_call.1} parent=1 // pred_check
      _
    $region19: #{tpu_custom_call.1} parent=1 // pred_check_branch
      %33 = sbr.rel (0) target = $region21
    $region20: #{tpu_custom_call.1} parent=1 // pred_region
      _
    $region21: #{tpu_custom_call.1} parent=1 // pred_fallthru
      _
    // Predicated region
    $region22: #{tpu_custom_call.1} parent=1 // pred_check
      _
    $region23: #{tpu_custom_call.1} parent=1 // pred_check_branch
      %35 = sbr.rel (0) target = $region25
    $region24: #{tpu_custom_call.1} parent=1 // pred_region
      _
    $region25: #{tpu_custom_call.1} parent=1 // pred_fallthru
      _
    // Predicated region
    $region26: #{tpu_custom_call.1} parent=1 // pred_check
      _
    $region27: #{tpu_custom_call.1} parent=1 // pred_check_branch
      %37 = sbr.rel (0) target = $region29
    $region28: #{tpu_custom_call.1} parent=1 // pred_region
      _
    $region29: #{tpu_custom_call.1} parent=1 // pred_fallthru
      _
    // Predicated region
    $region30: #{tpu_custom_call.1} parent=1 // pred_check
      _
    $region31: #{tpu_custom_call.1} parent=1 // pred_check_branch
      %39 = sbr.rel (0) target = $region33
    $region32: #{tpu_custom_call.1} parent=1 // pred_region
      _
    $region33: #{tpu_custom_call.1} parent=1 // pred_fallthru
      _
    // Predicated region
    $region34: #{tpu_custom_call.1} parent=1 // pred_check
      _
    $region35: #{tpu_custom_call.1} parent=1 // pred_check_branch
      %41 = sbr.rel (0) target = $region37
    $region36: #{tpu_custom_call.1} parent=1 // pred_region
      _
    $region37: #{tpu_custom_call.1} parent=1 // pred_fallthru
      _
    // Predicated region
    $region38: #{tpu_custom_call.1} parent=1 // pred_check
      _
    $region39: #{tpu_custom_call.1} parent=1 // pred_check_branch
      %43 = sbr.rel (0) target = $region41
    $region40: #{tpu_custom_call.1} parent=1 // pred_region
      _
    $region41: #{tpu_custom_call.1} parent=1 // pred_fallthru
      _
    // Predicated region
    $region42: #{tpu_custom_call.1} parent=1 // pred_check
      _
    $region43: #{tpu_custom_call.1} parent=1 // pred_check_branch
      %45 = sbr.rel (0) target = $region45
    $region44: #{tpu_custom_call.1} parent=1 // pred_region
      _
    $region45: #{tpu_custom_call.1} parent=1 // pred_fallthru
      _
    // Predicated region
    $region46: #{tpu_custom_call.1} parent=1 // pred_check
      _
    $region47: #{tpu_custom_call.1} parent=1 // pred_check_branch
      %47 = sbr.rel (0) target = $region49
    $region48: #{tpu_custom_call.1} parent=1 // pred_region
      _
    $region49: #{tpu_custom_call.1} parent=1 // pred_fallthru
      _
    // Predicated region
    $region50: #{tpu_custom_call.1} parent=1 // pred_check
      _
    $region51: #{tpu_custom_call.1} parent=1 // pred_check_branch
      %49 = sbr.rel (0) target = $region53
    $region52: #{tpu_custom_call.1} parent=1 // pred_region
      _
    $region53: #{tpu_custom_call.1} parent=1 // pred_fallthru
      _
    // Predicated region
    $region54: #{tpu_custom_call.1} parent=1 // pred_check
      _
    $region55: #{tpu_custom_call.1} parent=1 // pred_check_branch
      %51 = sbr.rel (0) target = $region57
    $region56: #{tpu_custom_call.1} parent=1 // pred_region
      _
    $region57: #{tpu_custom_call.1} parent=1 // pred_fallthru
      _
    // Predicated region
    $region58: #{tpu_custom_call.1} parent=1 // pred_check
      _
    $region59: #{tpu_custom_call.1} parent=1 // pred_check_branch
      %53 = sbr.rel (0) target = $region61
    $region60: #{tpu_custom_call.1} parent=1 // pred_region
      _
    $region61: #{tpu_custom_call.1} parent=1 // pred_fallthru
      _
    // Predicated region
    $region62: #{tpu_custom_call.1} parent=1 // pred_check
      _
    $region63: #{tpu_custom_call.1} parent=1 // pred_check_branch
      %55 = sbr.rel (0) target = $region65
    $region64: #{tpu_custom_call.1} parent=1 // pred_region
      _
    $region65: #{tpu_custom_call.1} parent=1 // pred_fallthru
      _
    // Predicated region
    $region66: #{tpu_custom_call.1} parent=1 // pred_check
      _
    $region67: #{tpu_custom_call.1} parent=1 // pred_check_branch
      %57 = sbr.rel (0) target = $region69
    $region68: #{tpu_custom_call.1} parent=1 // pred_region
      _
    $region69: #{tpu_custom_call.1} parent=1 // pred_fallthru
      _
    // Predicated region
    $region70: #{tpu_custom_call.1} parent=1 // pred_check
      _
    $region71: #{tpu_custom_call.1} parent=1 // pred_check_branch
      %59 = sbr.rel (0) target = $region73
    $region72: #{tpu_custom_call.1} parent=1 // pred_region
      _
    $region73: #{tpu_custom_call.1} parent=1 // pred_fallthru
      _
    %v60 = vld [vmem:[%s0] sm:$0xff]
    %v61 = vld [vmem:[%s0 + $0x8] sm:$0xff]
    %v62 = vlaneseq
    %v63 = vand.u32 %v62, 127
    %64 = vset.pattern.permute.xlu0 0
    %65 = vperm.xlu0 %64, %v60
    %v66 = vpop.permute.xlu0 %65
    %67 = vset.pattern.permute.xlu0 0
    %68 = vperm.xlu0 %67, %v61
    %v69 = vpop.permute.xlu0 %68
    %vm70 = vcmp.eq.s32.totalorder %v63, %v66
    %vm71 = vcmp.eq.s32.totalorder %v63, %v69
    %v72 = vsel %vm70, 1, 0
    %v73 = vsel %vm71, 1, 0
    %v74 = vcvt.s32.f32 %v72
    %v75 = vcvt.s32.f32 %v73
    %v76 = vld [vmem:[%s1] sm:$0xff]
    %v77 = vld [vmem:[%s1 + $0x8] sm:$0xff]
    %v78 = vld [vmem:[%s1 + $0x10] sm:$0xff]
    %v79 = vld [vmem:[%s1 + $0x18] sm:$0xff]
    %v80 = vld [vmem:[%s1 + $0x20] sm:$0xff]
    %v81 = vld [vmem:[%s1 + $0x28] sm:$0xff]
    %v82 = vld [vmem:[%s1 + $0x30] sm:$0xff]
    %v83 = vld [vmem:[%s1 + $0x38] sm:$0xff]
    %v84 = vld [vmem:[%s1 + $0x40] sm:$0xff]
    %v85 = vld [vmem:[%s1 + $0x48] sm:$0xff]
    %v86 = vld [vmem:[%s1 + $0x50] sm:$0xff]
    %v87 = vld [vmem:[%s1 + $0x58] sm:$0xff]
    %v88 = vld [vmem:[%s1 + $0x60] sm:$0xff]
    %v89 = vld [vmem:[%s1 + $0x68] sm:$0xff]
    %v90 = vld [vmem:[%s1 + $0x70] sm:$0xff]
    %v91 = vld [vmem:[%s1 + $0x78] sm:$0xff]
    %v92 = vld [vmem:[%s2] sm:$0xff]
    %93 = vmatprep.subr.mxu0 0.0
    %94 = vmatpush1.msra.mxu0 %v76
    %95 = vmatprep.subr.mxu0 0.0
    %96 = vmatpush1.msra.mxu0 %v77
    %97 = vmatprep.subr.mxu0 0.0
    %98 = vmatpush1.msra.mxu0 %v78
    %99 = vmatprep.subr.mxu0 0.0
    %100 = vmatpush1.msra.mxu0 %v79
    %101 = vmatprep.subr.mxu0 0.0
    %102 = vmatpush1.msra.mxu0 %v80
    %103 = vmatprep.subr.mxu0 0.0
    %104 = vmatpush1.msra.mxu0 %v81
    %105 = vmatprep.subr.mxu0 0.0
    %106 = vmatpush1.msra.mxu0 %v82
    %107 = vmatprep.subr.mxu0 0.0
    %108 = vmatpush1.msra.mxu0 %v83
    %109 = vmatprep.subr.mxu0 0.0
    %110 = vmatpush1.msra.mxu0 %v84
    %111 = vmatprep.subr.mxu0 0.0
    %112 = vmatpush1.msra.mxu0 %v85
    %113 = vmatprep.subr.mxu0 0.0
    %114 = vmatpush1.msra.mxu0 %v86
    %115 = vmatprep.subr.mxu0 0.0
    %116 = vmatpush1.msra.mxu0 %v87
    %117 = vmatprep.subr.mxu0 0.0
    %118 = vmatpush1.msra.mxu0 %v88
    %119 = vmatprep.subr.mxu0 0.0
    %120 = vmatpush1.msra.mxu0 %v89
    %121 = vmatprep.subr.mxu0 0.0
    %122 = vmatpush1.msra.mxu0 %v90
    %123 = vmatprep.subr.mxu0 0.0
    %124 = vmatpush1.msra.mxu0 %v91
    %125 = vmatprep.subr.mxu0 0.0
    %126 = vmatpush1.msra.mxu0 0.0
    %127 = vmatprep.subr.mxu0 0.0
    %128 = vmatpush1.msra.mxu0 0.0
    %129 = vmatprep.subr.mxu0 0.0
    %130 = vmatpush1.msra.mxu0 0.0
    %131 = vmatprep.subr.mxu0 0.0
    %132 = vmatpush1.msra.mxu0 0.0
    %133 = vmatprep.subr.mxu0 0.0
    %134 = vmatpush1.msra.mxu0 0.0
    %135 = vmatprep.subr.mxu0 0.0
    %136 = vmatpush1.msra.mxu0 0.0
    %137 = vmatprep.subr.mxu0 0.0
    %138 = vmatpush1.msra.mxu0 0.0
    %139 = vmatprep.subr.mxu0 0.0
    %140 = vmatpush1.msra.mxu0 0.0
    %141 = vmatprep.subr.mxu0 0.0
    %142 = vmatpush1.msra.mxu0 0.0
    %143 = vmatprep.subr.mxu0 0.0
    %144 = vmatpush1.msra.mxu0 0.0
    %145 = vmatprep.subr.mxu0 0.0
    %146 = vmatpush1.msra.mxu0 0.0
    %147 = vmatprep.subr.mxu0 0.0
    %148 = vmatpush1.msra.mxu0 0.0
    %149 = vmatprep.subr.mxu0 0.0
    %150 = vmatpush1.msra.mxu0 0.0
    %151 = vmatprep.subr.mxu0 0.0
    %152 = vmatpush1.msra.mxu0 0.0
    %153 = vmatprep.subr.mxu0 0.0
    %154 = vmatpush1.msra.mxu0 0.0
    %155 = vmatprep.subr.mxu0 0.0
    %156 = vmatpush1.msra.mxu0 0.0
    %157 = vmatprep.mubr.f32.mxu0 0.0
    %158 = vmatmul.mubr.f32.gmra.mrb[0].mxu0 %v74
    %v159 = vpop.f32.mrb[0].mxu0
    %v160 = vadd.f32 %v92, %v159
    %v161 = vpop.f32.mrb[0].mxu0
    %162 = vmatprep.mubr.f32.mxu0 0.0
    %163 = vmatmul.mubr.f32.gmra.mrb[0].mxu0 %v75
    %v164 = vpop.f32.mrb[0].mxu0
    %v165 = vadd.f32 %v92, %v164
    %v166 = vpop.f32.mrb[0].mxu0
    %167 = vdwg.mxu0
    %v168 = vlaneseq
    %v169 = vshrl.u32 %v168, 7
    %vm170 = vcmp.ge.s32.totalorder %v169, %v63
    %v171 = vsel %vm170, 0.0, -1e+30
    %v172 = vld [vmem:[%s3] sm:$0x1]
    %v173 = vld [vmem:[%s4] sm:$0x1]
    %vm174 = vcmask 261120
    %v175 = vsel %vm174, %v160, 0.0
    %176 = vadd.xlane.f32.xlu0 %v175
    %v177 = vpop.xlane.xlu0 %176
    %v178 = vsel %vm174, %v165, 0.0
    %179 = vadd.xlane.f32.xlu0 %v178
    %v180 = vpop.xlane.xlu0 %179
    %v181 = vrcp.pop 32.0
    %v182 = vmul.f32 %v177, %v181
    %v183 = vmul.f32 %v180, %v181
    %v184 = vsub.f32 %v160, %v182
    %v185 = vsub.f32 %v165, %v183
    %v186 = vmul.f32 %v184, %v184
    %v187 = vmul.f32 %v185, %v185
    %v188 = vsel %vm174, %v186, 0.0
    %189 = vadd.xlane.f32.xlu0 %v188
    %v190 = vpop.xlane.xlu0 %189
    %v191 = vsel %vm174, %v187, 0.0
    %192 = vadd.xlane.f32.xlu0 %v191
    %v193 = vpop.xlane.xlu0 %192
    %v194 = vmul.f32 %v190, %v181
    %v195 = vmul.f32 %v193, %v181
    %v196 = vadd.f32 %v194, 1e-05
    %v197 = vadd.f32 %v195, 1e-05
    %v198 = vrsqrt.pop %v196
    %v199 = vrsqrt.pop %v197
    %v200 = vmul.f32 %v184, %v198
    %v201 = vmul.f32 %v185, %v199
    %v203 = vlaneseq
    %v204 = vshrl.u32 %v203, 7
    %v205 = vsub.s32 0, %v204
    %v206 = vrot.slane %v172, %v205
    %v208 = vmul.f32 %v200, %v206
    %v209 = vmul.f32 %v201, %v206
    %v211 = vlaneseq
    %v212 = vshrl.u32 %v211, 7
    %v213 = vsub.s32 0, %v212
    %v214 = vrot.slane %v173, %v213
    %v216 = vadd.f32 %v208, %v214
    %v217 = vadd.f32 %v209, %v214
    %v218 = vld [vmem:[%s5] sm:$0xff]
    %v219 = vld [vmem:[%s5 + $0x8] sm:$0xff]
    %v220 = vld [vmem:[%s5 + $0x10] sm:$0xff]
    %v221 = vld [vmem:[%s5 + $0x18] sm:$0xff]
    %v223 = vsel %vm174, %v216, 0
    %v226 = vsel %vm174, %v217, 0
    %228 = vmatprep.subr.mxu0 0.0
    %229 = vmatpush1.msra.mxu0 %v218
    %230 = vmatprep.subr.mxu0 0.0
    %231 = vmatpush1.msra.mxu0 %v219
    %232 = vmatprep.subr.mxu0 0.0
    %233 = vmatpush1.msra.mxu0 %v220
    %234 = vmatprep.subr.mxu0 0.0
    %235 = vmatpush1.msra.mxu0 %v221
    %236 = vmatprep.subr.mxu0 0.0
    %237 = vmatpush1.msra.mxu0 0.0
    %238 = vmatprep.subr.mxu0 0.0
    %239 = vmatpush1.msra.mxu0 0.0
    %240 = vmatprep.subr.mxu0 0.0
    %241 = vmatpush1.msra.mxu0 0.0
    %242 = vmatprep.subr.mxu0 0.0
    %243 = vmatpush1.msra.mxu0 0.0
    %244 = vmatprep.subr.mxu0 0.0
    %245 = vmatpush1.msra.mxu0 0.0
    %246 = vmatprep.subr.mxu0 0.0
    %247 = vmatpush1.msra.mxu0 0.0
    %248 = vmatprep.subr.mxu0 0.0
    %249 = vmatpush1.msra.mxu0 0.0
    %250 = vmatprep.subr.mxu0 0.0
    %251 = vmatpush1.msra.mxu0 0.0
    %252 = vmatprep.subr.mxu0 0.0
    %253 = vmatpush1.msra.mxu0 0.0
    %254 = vmatprep.subr.mxu0 0.0
    %255 = vmatpush1.msra.mxu0 0.0
    %256 = vmatprep.subr.mxu0 0.0
    %257 = vmatpush1.msra.mxu0 0.0
    %258 = vmatprep.subr.mxu0 0.0
    %259 = vmatpush1.msra.mxu0 0.0
    %260 = vmatprep.subr.mxu0 0.0
    %261 = vmatpush1.msra.mxu0 0.0
    %262 = vmatprep.subr.mxu0 0.0
    %263 = vmatpush1.msra.mxu0 0.0
    %264 = vmatprep.subr.mxu0 0.0
    %265 = vmatpush1.msra.mxu0 0.0
    %266 = vmatprep.subr.mxu0 0.0
    %267 = vmatpush1.msra.mxu0 0.0
    %268 = vmatprep.subr.mxu0 0.0
    %269 = vmatpush1.msra.mxu0 0.0
    %270 = vmatprep.subr.mxu0 0.0
    %271 = vmatpush1.msra.mxu0 0.0
    %272 = vmatprep.subr.mxu0 0.0
    %273 = vmatpush1.msra.mxu0 0.0
    %274 = vmatprep.subr.mxu0 0.0
    %275 = vmatpush1.msra.mxu0 0.0
    %276 = vmatprep.subr.mxu0 0.0
    %277 = vmatpush1.msra.mxu0 0.0
    %278 = vmatprep.subr.mxu0 0.0
    %279 = vmatpush1.msra.mxu0 0.0
    %280 = vmatprep.subr.mxu0 0.0
    %281 = vmatpush1.msra.mxu0 0.0
    %282 = vmatprep.subr.mxu0 0.0
    %283 = vmatpush1.msra.mxu0 0.0
    %284 = vmatprep.subr.mxu0 0.0
    %285 = vmatpush1.msra.mxu0 0.0
    %286 = vmatprep.subr.mxu0 0.0
    %287 = vmatpush1.msra.mxu0 0.0
    %288 = vmatprep.subr.mxu0 0.0
    %289 = vmatpush1.msra.mxu0 0.0
    %290 = vmatprep.subr.mxu0 0.0
    %291 = vmatpush1.msra.mxu0 0.0
    %292 = vmatprep.mubr.f32.mxu0 0.0
    %293 = vmatmul.mubr.f32.gmra.mrb[0].mxu0 %v223
    %v294 = vpop.f32.mrb[0].mxu0
    %v295 = vadd.f32 0.0, %v294
    %v296 = vpop.f32.mrb[0].mxu0
    %297 = vmatprep.mubr.f32.mxu0 0.0
    %298 = vmatmul.mubr.f32.gmra.mrb[0].mxu0 %v226
    %v299 = vpop.f32.mrb[0].mxu0
    %v300 = vadd.f32 0.0, %v299
    %v301 = vpop.f32.mrb[0].mxu0
    %302 = vdwg.mxu0
    %v303 = vld [vmem:[%s6] sm:$0xff]
    %v304 = vld [vmem:[%s6 + $0x8] sm:$0xff]
    %v305 = vld [vmem:[%s6 + $0x10] sm:$0xff]
    %v306 = vld [vmem:[%s6 + $0x18] sm:$0xff]
    %308 = vrot.lane.b32.xlu0 %v295, 96
    %v309 = vpop.permute.xlu0 %308
    %vm310 = vcmask 64512
    %v311 = vsel %vm310, %v295, 0
    %v313 = vsel %vm310, %v309, 0
    %315 = vmatprep.subr.mxu0 0.0
    %316 = vmatpush1.xpose.msra.mxu0 %v313
    %317 = vmatprep.subr.mxu0 0.0
    %318 = vmatpush1.xpose.msra.mxu0 0.0
    %319 = vmatprep.subr.mxu0 0.0
    %320 = vmatpush1.xpose.msra.mxu0 0.0
    %321 = vmatprep.subr.mxu0 0.0
    %322 = vmatpush1.xpose.msra.mxu0 0.0
    %323 = vmatprep.subr.mxu0 0.0
    %324 = vmatpush1.xpose.msra.mxu0 0.0
    %325 = vmatprep.subr.mxu0 0.0
    %326 = vmatpush1.xpose.msra.mxu0 0.0
    %327 = vmatprep.subr.mxu0 0.0
    %328 = vmatpush1.xpose.msra.mxu0 0.0
    %329 = vmatprep.subr.mxu0 0.0
    %330 = vmatpush1.xpose.msra.mxu0 0.0
    %331 = vmatprep.subr.mxu0 0.0
    %332 = vmatpush1.xpose.msra.mxu0 0.0
    %333 = vmatprep.subr.mxu0 0.0
    %334 = vmatpush1.xpose.msra.mxu0 0.0
    %335 = vmatprep.subr.mxu0 0.0
    %336 = vmatpush1.xpose.msra.mxu0 0.0
    %337 = vmatprep.subr.mxu0 0.0
    %338 = vmatpush1.xpose.msra.mxu0 0.0
    %339 = vmatprep.subr.mxu0 0.0
    %340 = vmatpush1.xpose.msra.mxu0 0.0
    %341 = vmatprep.subr.mxu0 0.0
    %342 = vmatpush1.xpose.msra.mxu0 0.0
    %343 = vmatprep.subr.mxu0 0.0
    %344 = vmatpush1.xpose.msra.mxu0 0.0
    %345 = vmatprep.subr.mxu0 0.0
    %346 = vmatpush1.xpose.msra.mxu0 0.0
    %347 = vmatprep.subr.mxu0 0.0
    %348 = vmatpush1.xpose.msra.mxu0 0.0
    %349 = vmatprep.subr.mxu0 0.0
    %350 = vmatpush1.xpose.msra.mxu0 0.0
    %351 = vmatprep.subr.mxu0 0.0
    %352 = vmatpush1.xpose.msra.mxu0 0.0
    %353 = vmatprep.subr.mxu0 0.0
    %354 = vmatpush1.xpose.msra.mxu0 0.0
    %355 = vmatprep.subr.mxu0 0.0
    %356 = vmatpush1.xpose.msra.mxu0 0.0
    %357 = vmatprep.subr.mxu0 0.0
    %358 = vmatpush1.xpose.msra.mxu0 0.0
    %359 = vmatprep.subr.mxu0 0.0
    %360 = vmatpush1.xpose.msra.mxu0 0.0
    %361 = vmatprep.subr.mxu0 0.0
    %362 = vmatpush1.xpose.msra.mxu0 0.0
    %363 = vmatprep.subr.mxu0 0.0
    %364 = vmatpush1.xpose.msra.mxu0 0.0
    %365 = vmatprep.subr.mxu0 0.0
    %366 = vmatpush1.xpose.msra.mxu0 0.0
    %367 = vmatprep.subr.mxu0 0.0
    %368 = vmatpush1.xpose.msra.mxu0 0.0
    %369 = vmatprep.subr.mxu0 0.0
    %370 = vmatpush1.xpose.msra.mxu0 0.0
    %371 = vmatprep.subr.mxu0 0.0
    %372 = vmatpush1.xpose.msra.mxu0 0.0
    %373 = vmatprep.subr.mxu0 0.0
    %374 = vmatpush1.xpose.msra.mxu0 0.0
    %375 = vmatprep.subr.mxu0 0.0
    %376 = vmatpush1.xpose.msra.mxu0 0.0
    %377 = vmatprep.subr.mxu0 0.0
    %378 = vmatpush1.xpose.msra.mxu0 0.0
    %379 = vmatprep.mubr.f32.mxu0 0.0
    %380 = vmatmul.mubr.f32.gmra.mrb[0].mxu0 %v311
    %v381 = vpop.f32.mrb[0].mxu0
    %v382 = vadd.f32 0.0, %v381
    %v383 = vpop.f32.mrb[0].mxu0
    %384 = vdwg.mxu0
    %386 = vrot.lane.b32.xlu0 %v300, 96
    %v387 = vpop.permute.xlu0 %386
    %v388 = vsel %vm310, %v300, 0
    %v390 = vsel %vm310, %v387, 0
    %392 = vmatprep.subr.mxu0 0.0
    %393 = vmatpush1.xpose.msra.mxu0 %v390
    %394 = vmatprep.subr.mxu0 0.0
    %395 = vmatpush1.xpose.msra.mxu0 0.0
    %396 = vmatprep.subr.mxu0 0.0
    %397 = vmatpush1.xpose.msra.mxu0 0.0
    %398 = vmatprep.subr.mxu0 0.0
    %399 = vmatpush1.xpose.msra.mxu0 0.0
    %400 = vmatprep.subr.mxu0 0.0
    %401 = vmatpush1.xpose.msra.mxu0 0.0
    %402 = vmatprep.subr.mxu0 0.0
    %403 = vmatpush1.xpose.msra.mxu0 0.0
    %404 = vmatprep.subr.mxu0 0.0
    %405 = vmatpush1.xpose.msra.mxu0 0.0
    %406 = vmatprep.subr.mxu0 0.0
    %407 = vmatpush1.xpose.msra.mxu0 0.0
    %408 = vmatprep.subr.mxu0 0.0
    %409 = vmatpush1.xpose.msra.mxu0 0.0
    %410 = vmatprep.subr.mxu0 0.0
    %411 = vmatpush1.xpose.msra.mxu0 0.0
    %412 = vmatprep.subr.mxu0 0.0
    %413 = vmatpush1.xpose.msra.mxu0 0.0
    %414 = vmatprep.subr.mxu0 0.0
    %415 = vmatpush1.xpose.msra.mxu0 0.0
    %416 = vmatprep.subr.mxu0 0.0
    %417 = vmatpush1.xpose.msra.mxu0 0.0
    %418 = vmatprep.subr.mxu0 0.0
    %419 = vmatpush1.xpose.msra.mxu0 0.0
    %420 = vmatprep.subr.mxu0 0.0
    %421 = vmatpush1.xpose.msra.mxu0 0.0
    %422 = vmatprep.subr.mxu0 0.0
    %423 = vmatpush1.xpose.msra.mxu0 0.0
    %424 = vmatprep.subr.mxu0 0.0
    %425 = vmatpush1.xpose.msra.mxu0 0.0
    %426 = vmatprep.subr.mxu0 0.0
    %427 = vmatpush1.xpose.msra.mxu0 0.0
    %428 = vmatprep.subr.mxu0 0.0
    %429 = vmatpush1.xpose.msra.mxu0 0.0
    %430 = vmatprep.subr.mxu0 0.0
    %431 = vmatpush1.xpose.msra.mxu0 0.0
    %432 = vmatprep.subr.mxu0 0.0
    %433 = vmatpush1.xpose.msra.mxu0 0.0
    %434 = vmatprep.subr.mxu0 0.0
    %435 = vmatpush1.xpose.msra.mxu0 0.0
    %436 = vmatprep.subr.mxu0 0.0
    %437 = vmatpush1.xpose.msra.mxu0 0.0
    %438 = vmatprep.subr.mxu0 0.0
    %439 = vmatpush1.xpose.msra.mxu0 0.0
    %440 = vmatprep.subr.mxu0 0.0
    %441 = vmatpush1.xpose.msra.mxu0 0.0
    %442 = vmatprep.subr.mxu0 0.0
    %443 = vmatpush1.xpose.msra.mxu0 0.0
    %444 = vmatprep.subr.mxu0 0.0
    %445 = vmatpush1.xpose.msra.mxu0 0.0
    %446 = vmatprep.subr.mxu0 0.0
    %447 = vmatpush1.xpose.msra.mxu0 0.0
    %448 = vmatprep.subr.mxu0 0.0
    %449 = vmatpush1.xpose.msra.mxu0 0.0
    %450 = vmatprep.subr.mxu0 0.0
    %451 = vmatpush1.xpose.msra.mxu0 0.0
    %452 = vmatprep.subr.mxu0 0.0
    %453 = vmatpush1.xpose.msra.mxu0 0.0
    %454 = vmatprep.subr.mxu0 0.0
    %455 = vmatpush1.xpose.msra.mxu0 0.0
    %456 = vmatprep.mubr.f32.mxu0 0.0
    %457 = vmatmul.mubr.f32.gmra.mrb[0].mxu0 %v388
    %v458 = vpop.f32.mrb[0].mxu0
    %v459 = vadd.f32 0.0, %v458
    %v460 = vpop.f32.mrb[0].mxu0
    %461 = vdwg.mxu0
    %v462 = vmul.f32 %v382, 0.17677669
    %v463 = vmul.f32 %v459, 0.17677669
    %v464 = vadd.f32 %v462, %v171
    %v465 = vadd.f32 %v463, %v171
    %v466 = vsel %vm310, %v464, -inf
    %467 = vmax.xlane.f32.xlu0 %v466
    %v468 = vpop.xlane.xlu0 %467
    %v469 = vsel %vm310, %v465, -inf
    %470 = vmax.xlane.f32.xlu0 %v469
    %v471 = vpop.xlane.xlu0 %470
    %v472 = vsub.f32 %v464, %v468
    %v473 = vsub.f32 %v465, %v471
    %v474 = vmul.f32 %v472, 1.442695
    %v475 = vpow.pop %v474
    %v476 = vmul.f32 %v473, 1.442695
    %v477 = vpow.pop %v476
    %v478 = vsel %vm310, %v475, 0.0
    %479 = vadd.xlane.f32.xlu0 %v478
    %v480 = vpop.xlane.xlu0 %479
    %v481 = vsel %vm310, %v477, 0.0
    %482 = vadd.xlane.f32.xlu0 %v481
    %v483 = vpop.xlane.xlu0 %482
    %v484 = vrcp.pop %v480
    %v485 = vrcp.pop %v483
    %v486 = vmul.f32 %v475, %v484
    %v487 = vmul.f32 %v477, %v485
    %488 = vrot.lane.b32.xlu0 %v295, 64
    %v489 = vpop.permute.xlu0 %488
    %v492 = vsel %vm310, %v486, 0
    %494 = vmatprep.subr.mxu0 0.0
    %495 = vmatpush1.msra.mxu0 %v489
    %496 = vmatprep.subr.mxu0 0.0
    %497 = vmatpush1.msra.mxu0 0.0
    %498 = vmatprep.subr.mxu0 0.0
    %499 = vmatpush1.msra.mxu0 0.0
    %500 = vmatprep.subr.mxu0 0.0
    %501 = vmatpush1.msra.mxu0 0.0
    %502 = vmatprep.subr.mxu0 0.0
    %503 = vmatpush1.msra.mxu0 0.0
    %504 = vmatprep.subr.mxu0 0.0
    %505 = vmatpush1.msra.mxu0 0.0
    %506 = vmatprep.subr.mxu0 0.0
    %507 = vmatpush1.msra.mxu0 0.0
    %508 = vmatprep.subr.mxu0 0.0
    %509 = vmatpush1.msra.mxu0 0.0
    %510 = vmatprep.subr.mxu0 0.0
    %511 = vmatpush1.msra.mxu0 0.0
    %512 = vmatprep.subr.mxu0 0.0
    %513 = vmatpush1.msra.mxu0 0.0
    %514 = vmatprep.subr.mxu0 0.0
    %515 = vmatpush1.msra.mxu0 0.0
    %516 = vmatprep.subr.mxu0 0.0
    %517 = vmatpush1.msra.mxu0 0.0
    %518 = vmatprep.subr.mxu0 0.0
    %519 = vmatpush1.msra.mxu0 0.0
    %520 = vmatprep.subr.mxu0 0.0
    %521 = vmatpush1.msra.mxu0 0.0
    %522 = vmatprep.subr.mxu0 0.0
    %523 = vmatpush1.msra.mxu0 0.0
    %524 = vmatprep.subr.mxu0 0.0
    %525 = vmatpush1.msra.mxu0 0.0
    %526 = vmatprep.subr.mxu0 0.0
    %527 = vmatpush1.msra.mxu0 0.0
    %528 = vmatprep.subr.mxu0 0.0
    %529 = vmatpush1.msra.mxu0 0.0
    %530 = vmatprep.subr.mxu0 0.0
    %531 = vmatpush1.msra.mxu0 0.0
    %532 = vmatprep.subr.mxu0 0.0
    %533 = vmatpush1.msra.mxu0 0.0
    %534 = vmatprep.subr.mxu0 0.0
    %535 = vmatpush1.msra.mxu0 0.0
    %536 = vmatprep.subr.mxu0 0.0
    %537 = vmatpush1.msra.mxu0 0.0
    %538 = vmatprep.subr.mxu0 0.0
    %539 = vmatpush1.msra.mxu0 0.0
    %540 = vmatprep.subr.mxu0 0.0
    %541 = vmatpush1.msra.mxu0 0.0
    %542 = vmatprep.subr.mxu0 0.0
    %543 = vmatpush1.msra.mxu0 0.0
    %544 = vmatprep.subr.mxu0 0.0
    %545 = vmatpush1.msra.mxu0 0.0
    %546 = vmatprep.subr.mxu0 0.0
    %547 = vmatpush1.msra.mxu0 0.0
    %548 = vmatprep.subr.mxu0 0.0
    %549 = vmatpush1.msra.mxu0 0.0
    %550 = vmatprep.subr.mxu0 0.0
    %551 = vmatpush1.msra.mxu0 0.0
    %552 = vmatprep.subr.mxu0 0.0
    %553 = vmatpush1.msra.mxu0 0.0
    %554 = vmatprep.subr.mxu0 0.0
    %555 = vmatpush1.msra.mxu0 0.0
    %556 = vmatprep.subr.mxu0 0.0
    %557 = vmatpush1.msra.mxu0 0.0
    %558 = vmatprep.mubr.f32.mxu0 0.0
    %559 = vmatmul.mubr.f32.gmra.mrb[0].mxu0 %v492
    %v560 = vpop.f32.mrb[0].mxu0
    %v561 = vadd.f32 0.0, %v560
    %v562 = vpop.f32.mrb[0].mxu0
    %563 = vdwg.mxu0
    %564 = vrot.lane.b32.xlu0 %v300, 64
    %v565 = vpop.permute.xlu0 %564
    %v568 = vsel %vm310, %v487, 0
    %570 = vmatprep.subr.mxu0 0.0
    %571 = vmatpush1.msra.mxu0 %v565
    %572 = vmatprep.subr.mxu0 0.0
    %573 = vmatpush1.msra.mxu0 0.0
    %574 = vmatprep.subr.mxu0 0.0
    %575 = vmatpush1.msra.mxu0 0.0
    %576 = vmatprep.subr.mxu0 0.0
    %577 = vmatpush1.msra.mxu0 0.0
    %578 = vmatprep.subr.mxu0 0.0
    %579 = vmatpush1.msra.mxu0 0.0
    %580 = vmatprep.subr.mxu0 0.0
    %581 = vmatpush1.msra.mxu0 0.0
    %582 = vmatprep.subr.mxu0 0.0
    %583 = vmatpush1.msra.mxu0 0.0
    %584 = vmatprep.subr.mxu0 0.0
    %585 = vmatpush1.msra.mxu0 0.0
    %586 = vmatprep.subr.mxu0 0.0
    %587 = vmatpush1.msra.mxu0 0.0
    %588 = vmatprep.subr.mxu0 0.0
    %589 = vmatpush1.msra.mxu0 0.0
    %590 = vmatprep.subr.mxu0 0.0
    %591 = vmatpush1.msra.mxu0 0.0
    %592 = vmatprep.subr.mxu0 0.0
    %593 = vmatpush1.msra.mxu0 0.0
    %594 = vmatprep.subr.mxu0 0.0
    %595 = vmatpush1.msra.mxu0 0.0
    %596 = vmatprep.subr.mxu0 0.0
    %597 = vmatpush1.msra.mxu0 0.0
    %598 = vmatprep.subr.mxu0 0.0
    %599 = vmatpush1.msra.mxu0 0.0
    %600 = vmatprep.subr.mxu0 0.0
    %601 = vmatpush1.msra.mxu0 0.0
    %602 = vmatprep.subr.mxu0 0.0
    %603 = vmatpush1.msra.mxu0 0.0
    %604 = vmatprep.subr.mxu0 0.0
    %605 = vmatpush1.msra.mxu0 0.0
    %606 = vmatprep.subr.mxu0 0.0
    %607 = vmatpush1.msra.mxu0 0.0
    %608 = vmatprep.subr.mxu0 0.0
    %609 = vmatpush1.msra.mxu0 0.0
    %610 = vmatprep.subr.mxu0 0.0
    %611 = vmatpush1.msra.mxu0 0.0
    %612 = vmatprep.subr.mxu0 0.0
    %613 = vmatpush1.msra.mxu0 0.0
    %614 = vmatprep.subr.mxu0 0.0
    %615 = vmatpush1.msra.mxu0 0.0
    %616 = vmatprep.subr.mxu0 0.0
    %617 = vmatpush1.msra.mxu0 0.0
    %618 = vmatprep.subr.mxu0 0.0
    %619 = vmatpush1.msra.mxu0 0.0
    %620 = vmatprep.subr.mxu0 0.0
    %621 = vmatpush1.msra.mxu0 0.0
    %622 = vmatprep.subr.mxu0 0.0
    %623 = vmatpush1.msra.mxu0 0.0
    %624 = vmatprep.subr.mxu0 0.0
    %625 = vmatpush1.msra.mxu0 0.0
    %626 = vmatprep.subr.mxu0 0.0
    %627 = vmatpush1.msra.mxu0 0.0
    %628 = vmatprep.subr.mxu0 0.0
    %629 = vmatpush1.msra.mxu0 0.0
    %630 = vmatprep.subr.mxu0 0.0
    %631 = vmatpush1.msra.mxu0 0.0
    %632 = vmatprep.subr.mxu0 0.0
    %633 = vmatpush1.msra.mxu0 0.0
    %634 = vmatprep.mubr.f32.mxu0 0.0
    %635 = vmatmul.mubr.f32.gmra.mrb[0].mxu0 %v568
    %v636 = vpop.f32.mrb[0].mxu0
    %v637 = vadd.f32 0.0, %v636
    %v638 = vpop.f32.mrb[0].mxu0
    %639 = vdwg.mxu0
    %640 = vrot.lane.b32.xlu0 %v295, 120
    %v641 = vpop.permute.xlu0 %640
    %642 = vrot.lane.b32.xlu0 %v295, 88
    %v643 = vpop.permute.xlu0 %642
    %v644 = vsel %vm310, %v641, 0
    %v646 = vsel %vm310, %v643, 0
    %648 = vmatprep.subr.mxu0 0.0
    %649 = vmatpush1.xpose.msra.mxu0 %v646
    %650 = vmatprep.subr.mxu0 0.0
    %651 = vmatpush1.xpose.msra.mxu0 0.0
    %652 = vmatprep.subr.mxu0 0.0
    %653 = vmatpush1.xpose.msra.mxu0 0.0
    %654 = vmatprep.subr.mxu0 0.0
    %655 = vmatpush1.xpose.msra.mxu0 0.0
    %656 = vmatprep.subr.mxu0 0.0
    %657 = vmatpush1.xpose.msra.mxu0 0.0
    %658 = vmatprep.subr.mxu0 0.0
    %659 = vmatpush1.xpose.msra.mxu0 0.0
    %660 = vmatprep.subr.mxu0 0.0
    %661 = vmatpush1.xpose.msra.mxu0 0.0
    %662 = vmatprep.subr.mxu0 0.0
    %663 = vmatpush1.xpose.msra.mxu0 0.0
    %664 = vmatprep.subr.mxu0 0.0
    %665 = vmatpush1.xpose.msra.mxu0 0.0
    %666 = vmatprep.subr.mxu0 0.0
    %667 = vmatpush1.xpose.msra.mxu0 0.0
    %668 = vmatprep.subr.mxu0 0.0
    %669 = vmatpush1.xpose.msra.mxu0 0.0
    %670 = vmatprep.subr.mxu0 0.0
    %671 = vmatpush1.xpose.msra.mxu0 0.0
    %672 = vmatprep.subr.mxu0 0.0
    %673 = vmatpush1.xpose.msra.mxu0 0.0
    %674 = vmatprep.subr.mxu0 0.0
    %675 = vmatpush1.xpose.msra.mxu0 0.0
    %676 = vmatprep.subr.mxu0 0.0
    %677 = vmatpush1.xpose.msra.mxu0 0.0
    %678 = vmatprep.subr.mxu0 0.0
    %679 = vmatpush1.xpose.msra.mxu0 0.0
    %680 = vmatprep.subr.mxu0 0.0
    %681 = vmatpush1.xpose.msra.mxu0 0.0
    %682 = vmatprep.subr.mxu0 0.0
    %683 = vmatpush1.xpose.msra.mxu0 0.0
    %684 = vmatprep.subr.mxu0 0.0
    %685 = vmatpush1.xpose.msra.mxu0 0.0
    %686 = vmatprep.subr.mxu0 0.0
    %687 = vmatpush1.xpose.msra.mxu0 0.0
    %688 = vmatprep.subr.mxu0 0.0
    %689 = vmatpush1.xpose.msra.mxu0 0.0
    %690 = vmatprep.subr.mxu0 0.0
    %691 = vmatpush1.xpose.msra.mxu0 0.0
    %692 = vmatprep.subr.mxu0 0.0
    %693 = vmatpush1.xpose.msra.mxu0 0.0
    %694 = vmatprep.subr.mxu0 0.0
    %695 = vmatpush1.xpose.msra.mxu0 0.0
    %696 = vmatprep.subr.mxu0 0.0
    %697 = vmatpush1.xpose.msra.mxu0 0.0
    %698 = vmatprep.subr.mxu0 0.0
    %699 = vmatpush1.xpose.msra.mxu0 0.0
    %700 = vmatprep.subr.mxu0 0.0
    %701 = vmatpush1.xpose.msra.mxu0 0.0
    %702 = vmatprep.subr.mxu0 0.0
    %703 = vmatpush1.xpose.msra.mxu0 0.0
    %704 = vmatprep.subr.mxu0 0.0
    %705 = vmatpush1.xpose.msra.mxu0 0.0
    %706 = vmatprep.subr.mxu0 0.0
    %707 = vmatpush1.xpose.msra.mxu0 0.0
    %708 = vmatprep.subr.mxu0 0.0
    %709 = vmatpush1.xpose.msra.mxu0 0.0
    %710 = vmatprep.subr.mxu0 0.0
    %711 = vmatpush1.xpose.msra.mxu0 0.0
    %712 = vmatprep.mubr.f32.mxu0 0.0
    %713 = vmatmul.mubr.f32.gmra.mrb[0].mxu0 %v644
    %v714 = vpop.f32.mrb[0].mxu0
    %v715 = vadd.f32 0.0, %v714
    %v716 = vpop.f32.mrb[0].mxu0
    %717 = vdwg.mxu0
    %718 = vrot.lane.b32.xlu0 %v300, 120
    %v719 = vpop.permute.xlu0 %718
    %720 = vrot.lane.b32.xlu0 %v300, 88
    %v721 = vpop.permute.xlu0 %720
    %v722 = vsel %vm310, %v719, 0
    %v724 = vsel %vm310, %v721, 0
    %726 = vmatprep.subr.mxu0 0.0
    %727 = vmatpush1.xpose.msra.mxu0 %v724
    %728 = vmatprep.subr.mxu0 0.0
    %729 = vmatpush1.xpose.msra.mxu0 0.0
    %730 = vmatprep.subr.mxu0 0.0
    %731 = vmatpush1.xpose.msra.mxu0 0.0
    %732 = vmatprep.subr.mxu0 0.0
    %733 = vmatpush1.xpose.msra.mxu0 0.0
    %734 = vmatprep.subr.mxu0 0.0
    %735 = vmatpush1.xpose.msra.mxu0 0.0
    %736 = vmatprep.subr.mxu0 0.0
    %737 = vmatpush1.xpose.msra.mxu0 0.0
    %738 = vmatprep.subr.mxu0 0.0
    %739 = vmatpush1.xpose.msra.mxu0 0.0
    %740 = vmatprep.subr.mxu0 0.0
    %741 = vmatpush1.xpose.msra.mxu0 0.0
    %742 = vmatprep.subr.mxu0 0.0
    %743 = vmatpush1.xpose.msra.mxu0 0.0
    %744 = vmatprep.subr.mxu0 0.0
    %745 = vmatpush1.xpose.msra.mxu0 0.0
    %746 = vmatprep.subr.mxu0 0.0
    %747 = vmatpush1.xpose.msra.mxu0 0.0
    %748 = vmatprep.subr.mxu0 0.0
    %749 = vmatpush1.xpose.msra.mxu0 0.0
    %750 = vmatprep.subr.mxu0 0.0
    %751 = vmatpush1.xpose.msra.mxu0 0.0
    %752 = vmatprep.subr.mxu0 0.0
    %753 = vmatpush1.xpose.msra.mxu0 0.0
    %754 = vmatprep.subr.mxu0 0.0
    %755 = vmatpush1.xpose.msra.mxu0 0.0
    %756 = vmatprep.subr.mxu0 0.0
    %757 = vmatpush1.xpose.msra.mxu0 0.0
    %758 = vmatprep.subr.mxu0 0.0
    %759 = vmatpush1.xpose.msra.mxu0 0.0
    %760 = vmatprep.subr.mxu0 0.0
    %761 = vmatpush1.xpose.msra.mxu0 0.0
    %762 = vmatprep.subr.mxu0 0.0
    %763 = vmatpush1.xpose.msra.mxu0 0.0
    %764 = vmatprep.subr.mxu0 0.0
    %765 = vmatpush1.xpose.msra.mxu0 0.0
    %766 = vmatprep.subr.mxu0 0.0
    %767 = vmatpush1.xpose.msra.mxu0 0.0
    %768 = vmatprep.subr.mxu0 0.0
    %769 = vmatpush1.xpose.msra.mxu0 0.0
    %770 = vmatprep.subr.mxu0 0.0
    %771 = vmatpush1.xpose.msra.mxu0 0.0
    %772 = vmatprep.subr.mxu0 0.0
    %773 = vmatpush1.xpose.msra.mxu0 0.0
    %774 = vmatprep.subr.mxu0 0.0
    %775 = vmatpush1.xpose.msra.mxu0 0.0
    %776 = vmatprep.subr.mxu0 0.0
    %777 = vmatpush1.xpose.msra.mxu0 0.0
    %778 = vmatprep.subr.mxu0 0.0
    %779 = vmatpush1.xpose.msra.mxu0 0.0
    %780 = vmatprep.subr.mxu0 0.0
    %781 = vmatpush1.xpose.msra.mxu0 0.0
    %782 = vmatprep.subr.mxu0 0.0
    %783 = vmatpush1.xpose.msra.mxu0 0.0
    %784 = vmatprep.subr.mxu0 0.0
    %785 = vmatpush1.xpose.msra.mxu0 0.0
    %786 = vmatprep.subr.mxu0 0.0
    %787 = vmatpush1.xpose.msra.mxu0 0.0
    %788 = vmatprep.subr.mxu0 0.0
    %789 = vmatpush1.xpose.msra.mxu0 0.0
    %790 = vmatprep.mubr.f32.mxu0 0.0
    %791 = vmatmul.mubr.f32.gmra.mrb[0].mxu0 %v722
    %v792 = vpop.f32.mrb[0].mxu0
    %v793 = vadd.f32 0.0, %v792
    %v794 = vpop.f32.mrb[0].mxu0
    %795 = vdwg.mxu0
    %v796 = vmul.f32 %v715, 0.17677669
    %v797 = vmul.f32 %v793, 0.17677669
    %v798 = vadd.f32 %v796, %v171
    %v799 = vadd.f32 %v797, %v171
    %v800 = vsel %vm310, %v798, -inf
    %801 = vmax.xlane.f32.xlu0 %v800
    %v802 = vpop.xlane.xlu0 %801
    %v803 = vsel %vm310, %v799, -inf
    %804 = vmax.xlane.f32.xlu0 %v803
    %v805 = vpop.xlane.xlu0 %804
    %v806 = vsub.f32 %v798, %v802
    %v807 = vsub.f32 %v799, %v805
    %v808 = vmul.f32 %v806, 1.442695
    %v809 = vpow.pop %v808
    %v810 = vmul.f32 %v807, 1.442695
    %v811 = vpow.pop %v810
    %v812 = vsel %vm310, %v809, 0.0
    %813 = vadd.xlane.f32.xlu0 %v812
    %v814 = vpop.xlane.xlu0 %813
    %v815 = vsel %vm310, %v811, 0.0
    %816 = vadd.xlane.f32.xlu0 %v815
    %v817 = vpop.xlane.xlu0 %816
    %v818 = vrcp.pop %v814
    %v819 = vrcp.pop %v817
    %v820 = vmul.f32 %v809, %v818
    %v821 = vmul.f32 %v811, %v819
    %822 = vrot.lane.b32.xlu0 %v295, 56
    %v823 = vpop.permute.xlu0 %822
    %v826 = vsel %vm310, %v820, 0
    %828 = vmatprep.subr.mxu0 0.0
    %829 = vmatpush1.msra.mxu0 %v823
    %830 = vmatprep.subr.mxu0 0.0
    %831 = vmatpush1.msra.mxu0 0.0
    %832 = vmatprep.subr.mxu0 0.0
    %833 = vmatpush1.msra.mxu0 0.0
    %834 = vmatprep.subr.mxu0 0.0
    %835 = vmatpush1.msra.mxu0 0.0
    %836 = vmatprep.subr.mxu0 0.0
    %837 = vmatpush1.msra.mxu0 0.0
    %838 = vmatprep.subr.mxu0 0.0
    %839 = vmatpush1.msra.mxu0 0.0
    %840 = vmatprep.subr.mxu0 0.0
    %841 = vmatpush1.msra.mxu0 0.0
    %842 = vmatprep.subr.mxu0 0.0
    %843 = vmatpush1.msra.mxu0 0.0
    %844 = vmatprep.subr.mxu0 0.0
    %845 = vmatpush1.msra.mxu0 0.0
    %846 = vmatprep.subr.mxu0 0.0
    %847 = vmatpush1.msra.mxu0 0.0
    %848 = vmatprep.subr.mxu0 0.0
    %849 = vmatpush1.msra.mxu0 0.0
    %850 = vmatprep.subr.mxu0 0.0
    %851 = vmatpush1.msra.mxu0 0.0
    %852 = vmatprep.subr.mxu0 0.0
    %853 = vmatpush1.msra.mxu0 0.0
    %854 = vmatprep.subr.mxu0 0.0
    %855 = vmatpush1.msra.mxu0 0.0
    %856 = vmatprep.subr.mxu0 0.0
    %857 = vmatpush1.msra.mxu0 0.0
    %858 = vmatprep.subr.mxu0 0.0
    %859 = vmatpush1.msra.mxu0 0.0
    %860 = vmatprep.subr.mxu0 0.0
    %861 = vmatpush1.msra.mxu0 0.0
    %862 = vmatprep.subr.mxu0 0.0
    %863 = vmatpush1.msra.mxu0 0.0
    %864 = vmatprep.subr.mxu0 0.0
    %865 = vmatpush1.msra.mxu0 0.0
    %866 = vmatprep.subr.mxu0 0.0
    %867 = vmatpush1.msra.mxu0 0.0
    %868 = vmatprep.subr.mxu0 0.0
    %869 = vmatpush1.msra.mxu0 0.0
    %870 = vmatprep.subr.mxu0 0.0
    %871 = vmatpush1.msra.mxu0 0.0
    %872 = vmatprep.subr.mxu0 0.0
    %873 = vmatpush1.msra.mxu0 0.0
    %874 = vmatprep.subr.mxu0 0.0
    %875 = vmatpush1.msra.mxu0 0.0
    %876 = vmatprep.subr.mxu0 0.0
    %877 = vmatpush1.msra.mxu0 0.0
    %878 = vmatprep.subr.mxu0 0.0
    %879 = vmatpush1.msra.mxu0 0.0
    %880 = vmatprep.subr.mxu0 0.0
    %881 = vmatpush1.msra.mxu0 0.0
    %882 = vmatprep.subr.mxu0 0.0
    %883 = vmatpush1.msra.mxu0 0.0
    %884 = vmatprep.subr.mxu0 0.0
    %885 = vmatpush1.msra.mxu0 0.0
    %886 = vmatprep.subr.mxu0 0.0
    %887 = vmatpush1.msra.mxu0 0.0
    %888 = vmatprep.subr.mxu0 0.0
    %889 = vmatpush1.msra.mxu0 0.0
    %890 = vmatprep.subr.mxu0 0.0
    %891 = vmatpush1.msra.mxu0 0.0
    %892 = vmatprep.mubr.f32.mxu0 0.0
    %893 = vmatmul.mubr.f32.gmra.mrb[0].mxu0 %v826
    %v894 = vpop.f32.mrb[0].mxu0
    %v895 = vadd.f32 0.0, %v894
    %v896 = vpop.f32.mrb[0].mxu0
    %897 = vdwg.mxu0
    %898 = vrot.lane.b32.xlu0 %v300, 56
    %v899 = vpop.permute.xlu0 %898
    %v902 = vsel %vm310, %v821, 0
    %904 = vmatprep.subr.mxu0 0.0
    %905 = vmatpush1.msra.mxu0 %v899
    %906 = vmatprep.subr.mxu0 0.0
    %907 = vmatpush1.msra.mxu0 0.0
    %908 = vmatprep.subr.mxu0 0.0
    %909 = vmatpush1.msra.mxu0 0.0
    %910 = vmatprep.subr.mxu0 0.0
    %911 = vmatpush1.msra.mxu0 0.0
    %912 = vmatprep.subr.mxu0 0.0
    %913 = vmatpush1.msra.mxu0 0.0
    %914 = vmatprep.subr.mxu0 0.0
    %915 = vmatpush1.msra.mxu0 0.0
    %916 = vmatprep.subr.mxu0 0.0
    %917 = vmatpush1.msra.mxu0 0.0
    %918 = vmatprep.subr.mxu0 0.0
    %919 = vmatpush1.msra.mxu0 0.0
    %920 = vmatprep.subr.mxu0 0.0
    %921 = vmatpush1.msra.mxu0 0.0
    %922 = vmatprep.subr.mxu0 0.0
    %923 = vmatpush1.msra.mxu0 0.0
    %924 = vmatprep.subr.mxu0 0.0
    %925 = vmatpush1.msra.mxu0 0.0
    %926 = vmatprep.subr.mxu0 0.0
    %927 = vmatpush1.msra.mxu0 0.0
    %928 = vmatprep.subr.mxu0 0.0
    %929 = vmatpush1.msra.mxu0 0.0
    %930 = vmatprep.subr.mxu0 0.0
    %931 = vmatpush1.msra.mxu0 0.0
    %932 = vmatprep.subr.mxu0 0.0
    %933 = vmatpush1.msra.mxu0 0.0
    %934 = vmatprep.subr.mxu0 0.0
    %935 = vmatpush1.msra.mxu0 0.0
    %936 = vmatprep.subr.mxu0 0.0
    %937 = vmatpush1.msra.mxu0 0.0
    %938 = vmatprep.subr.mxu0 0.0
    %939 = vmatpush1.msra.mxu0 0.0
    %940 = vmatprep.subr.mxu0 0.0
    %941 = vmatpush1.msra.mxu0 0.0
    %942 = vmatprep.subr.mxu0 0.0
    %943 = vmatpush1.msra.mxu0 0.0
    %944 = vmatprep.subr.mxu0 0.0
    %945 = vmatpush1.msra.mxu0 0.0
    %946 = vmatprep.subr.mxu0 0.0
    %947 = vmatpush1.msra.mxu0 0.0
    %948 = vmatprep.subr.mxu0 0.0
    %949 = vmatpush1.msra.mxu0 0.0
    %950 = vmatprep.subr.mxu0 0.0
    %951 = vmatpush1.msra.mxu0 0.0
    %952 = vmatprep.subr.mxu0 0.0
    %953 = vmatpush1.msra.mxu0 0.0
    %954 = vmatprep.subr.mxu0 0.0
    %955 = vmatpush1.msra.mxu0 0.0
    %956 = vmatprep.subr.mxu0 0.0
    %957 = vmatpush1.msra.mxu0 0.0
    %958 = vmatprep.subr.mxu0 0.0
    %959 = vmatpush1.msra.mxu0 0.0
    %960 = vmatprep.subr.mxu0 0.0
    %961 = vmatpush1.msra.mxu0 0.0
    %962 = vmatprep.subr.mxu0 0.0
    %963 = vmatpush1.msra.mxu0 0.0
    %964 = vmatprep.subr.mxu0 0.0
    %965 = vmatpush1.msra.mxu0 0.0
    %966 = vmatprep.subr.mxu0 0.0
    %967 = vmatpush1.msra.mxu0 0.0
    %968 = vmatprep.mubr.f32.mxu0 0.0
    %969 = vmatmul.mubr.f32.gmra.mrb[0].mxu0 %v902
    %v970 = vpop.f32.mrb[0].mxu0
    %v971 = vadd.f32 0.0, %v970
    %v972 = vpop.f32.mrb[0].mxu0
    %973 = vdwg.mxu0
    %v975 = vsel %vm310, %v895, 0
    %v978 = vsel %vm310, %v971, 0
    %980 = vmatprep.subr.mxu0 0.0
    %981 = vmatpush1.msra.mxu0 %v304
    %982 = vmatprep.subr.mxu0 0.0
    %983 = vmatpush1.msra.mxu0 0.0
    %984 = vmatprep.subr.mxu0 0.0
    %985 = vmatpush1.msra.mxu0 0.0
    %986 = vmatprep.subr.mxu0 0.0
    %987 = vmatpush1.msra.mxu0 0.0
    %988 = vmatprep.subr.mxu0 0.0
    %989 = vmatpush1.msra.mxu0 0.0
    %990 = vmatprep.subr.mxu0 0.0
    %991 = vmatpush1.msra.mxu0 0.0
    %992 = vmatprep.subr.mxu0 0.0
    %993 = vmatpush1.msra.mxu0 0.0
    %994 = vmatprep.subr.mxu0 0.0
    %995 = vmatpush1.msra.mxu0 0.0
    %996 = vmatprep.subr.mxu0 0.0
    %997 = vmatpush1.msra.mxu0 0.0
    %998 = vmatprep.subr.mxu0 0.0
    %999 = vmatpush1.msra.mxu0 0.0
    %1000 = vmatprep.subr.mxu0 0.0
    %1001 = vmatpush1.msra.mxu0 0.0
    %1002 = vmatprep.subr.mxu0 0.0
    %1003 = vmatpush1.msra.mxu0 0.0
    %1004 = vmatprep.subr.mxu0 0.0
    %1005 = vmatpush1.msra.mxu0 0.0
    %1006 = vmatprep.subr.mxu0 0.0
    %1007 = vmatpush1.msra.mxu0 0.0
    %1008 = vmatprep.subr.mxu0 0.0
    %1009 = vmatpush1.msra.mxu0 0.0
    %1010 = vmatprep.subr.mxu0 0.0
    %1011 = vmatpush1.msra.mxu0 0.0
    %1012 = vmatprep.subr.mxu0 0.0
    %1013 = vmatpush1.msra.mxu0 0.0
    %1014 = vmatprep.subr.mxu0 0.0
    %1015 = vmatpush1.msra.mxu0 0.0
    %1016 = vmatprep.subr.mxu0 0.0
    %1017 = vmatpush1.msra.mxu0 0.0
    %1018 = vmatprep.subr.mxu0 0.0
    %1019 = vmatpush1.msra.mxu0 0.0
    %1020 = vmatprep.subr.mxu0 0.0
    %1021 = vmatpush1.msra.mxu0 0.0
    %1022 = vmatprep.subr.mxu0 0.0
    %1023 = vmatpush1.msra.mxu0 0.0
    %1024 = vmatprep.subr.mxu0 0.0
    %1025 = vmatpush1.msra.mxu0 0.0
    %1026 = vmatprep.subr.mxu0 0.0
    %1027 = vmatpush1.msra.mxu0 0.0
    %1028 = vmatprep.subr.mxu0 0.0
    %1029 = vmatpush1.msra.mxu0 0.0
    %1030 = vmatprep.subr.mxu0 0.0
    %1031 = vmatpush1.msra.mxu0 0.0
    %1032 = vmatprep.subr.mxu0 0.0
    %1033 = vmatpush1.msra.mxu0 0.0
    %1034 = vmatprep.subr.mxu0 0.0
    %1035 = vmatpush1.msra.mxu0 0.0
    %1036 = vmatprep.subr.mxu0 0.0
    %1037 = vmatpush1.msra.mxu0 0.0
    %1038 = vmatprep.subr.mxu0 0.0
    %1039 = vmatpush1.msra.mxu0 0.0
    %1040 = vmatprep.subr.mxu0 0.0
    %1041 = vmatpush1.msra.mxu0 0.0
    %1042 = vmatprep.subr.mxu0 0.0
    %1043 = vmatpush1.msra.mxu0 0.0
    %1044 = vmatprep.mubr.f32.mxu0 0.0
    %1045 = vmatmul.mubr.f32.gmra.mrb[0].mxu0 %v975
    %v1046 = vpop.f32.mrb[0].mxu0
    %v1047 = vadd.f32 0.0, %v1046
    %v1048 = vpop.f32.mrb[0].mxu0
    %1049 = vmatprep.mubr.f32.mxu0 0.0
    %1050 = vmatmul.mubr.f32.gmra.mrb[0].mxu0 %v978
    %v1051 = vpop.f32.mrb[0].mxu0
    %v1052 = vadd.f32 0.0, %v1051
    %v1053 = vpop.f32.mrb[0].mxu0
    %1054 = vdwg.mxu0
    %v1056 = vsel %vm310, %v561, 0
    %v1059 = vsel %vm310, %v637, 0
    %1061 = vmatprep.subr.mxu0 0.0
    %1062 = vmatpush1.msra.mxu0 %v303
    %1063 = vmatprep.subr.mxu0 0.0
    %1064 = vmatpush1.msra.mxu0 0.0
    %1065 = vmatprep.subr.mxu0 0.0
    %1066 = vmatpush1.msra.mxu0 0.0
    %1067 = vmatprep.subr.mxu0 0.0
    %1068 = vmatpush1.msra.mxu0 0.0
    %1069 = vmatprep.subr.mxu0 0.0
    %1070 = vmatpush1.msra.mxu0 0.0
    %1071 = vmatprep.subr.mxu0 0.0
    %1072 = vmatpush1.msra.mxu0 0.0
    %1073 = vmatprep.subr.mxu0 0.0
    %1074 = vmatpush1.msra.mxu0 0.0
    %1075 = vmatprep.subr.mxu0 0.0
    %1076 = vmatpush1.msra.mxu0 0.0
    %1077 = vmatprep.subr.mxu0 0.0
    %1078 = vmatpush1.msra.mxu0 0.0
    %1079 = vmatprep.subr.mxu0 0.0
    %1080 = vmatpush1.msra.mxu0 0.0
    %1081 = vmatprep.subr.mxu0 0.0
    %1082 = vmatpush1.msra.mxu0 0.0
    %1083 = vmatprep.subr.mxu0 0.0
    %1084 = vmatpush1.msra.mxu0 0.0
    %1085 = vmatprep.subr.mxu0 0.0
    %1086 = vmatpush1.msra.mxu0 0.0
    %1087 = vmatprep.subr.mxu0 0.0
    %1088 = vmatpush1.msra.mxu0 0.0
    %1089 = vmatprep.subr.mxu0 0.0
    %1090 = vmatpush1.msra.mxu0 0.0
    %1091 = vmatprep.subr.mxu0 0.0
    %1092 = vmatpush1.msra.mxu0 0.0
    %1093 = vmatprep.subr.mxu0 0.0
    %1094 = vmatpush1.msra.mxu0 0.0
    %1095 = vmatprep.subr.mxu0 0.0
    %1096 = vmatpush1.msra.mxu0 0.0
    %1097 = vmatprep.subr.mxu0 0.0
    %1098 = vmatpush1.msra.mxu0 0.0
    %1099 = vmatprep.subr.mxu0 0.0
    %1100 = vmatpush1.msra.mxu0 0.0
    %1101 = vmatprep.subr.mxu0 0.0
    %1102 = vmatpush1.msra.mxu0 0.0
    %1103 = vmatprep.subr.mxu0 0.0
    %1104 = vmatpush1.msra.mxu0 0.0
    %1105 = vmatprep.subr.mxu0 0.0
    %1106 = vmatpush1.msra.mxu0 0.0
    %1107 = vmatprep.subr.mxu0 0.0
    %1108 = vmatpush1.msra.mxu0 0.0
    %1109 = vmatprep.subr.mxu0 0.0
    %1110 = vmatpush1.msra.mxu0 0.0
    %1111 = vmatprep.subr.mxu0 0.0
    %1112 = vmatpush1.msra.mxu0 0.0
    %1113 = vmatprep.subr.mxu0 0.0
    %1114 = vmatpush1.msra.mxu0 0.0
    %1115 = vmatprep.subr.mxu0 0.0
    %1116 = vmatpush1.msra.mxu0 0.0
    %1117 = vmatprep.subr.mxu0 0.0
    %1118 = vmatpush1.msra.mxu0 0.0
    %1119 = vmatprep.subr.mxu0 0.0
    %1120 = vmatpush1.msra.mxu0 0.0
    %1121 = vmatprep.subr.mxu0 0.0
    %1122 = vmatpush1.msra.mxu0 0.0
    %1123 = vmatprep.subr.mxu0 0.0
    %1124 = vmatpush1.msra.mxu0 0.0
    %1125 = vmatprep.mubr.f32.mxu0 0.0
    %1126 = vmatmul.mubr.f32.gmra.mrb[0].mxu0 %v1056
    %v1127 = vpop.f32.mrb[0].mxu0
    %v1128 = vadd.f32 %v1047, %v1127
    %v1129 = vpop.f32.mrb[0].mxu0
    %1130 = vmatprep.mubr.f32.mxu0 0.0
    %1131 = vmatmul.mubr.f32.gmra.mrb[0].mxu0 %v1059
    %v1132 = vpop.f32.mrb[0].mxu0
    %v1133 = vadd.f32 %v1052, %v1132
    %v1134 = vpop.f32.mrb[0].mxu0
    %1135 = vdwg.mxu0
    %1136 = vrot.lane.b32.xlu0 %v295, 112
    %v1137 = vpop.permute.xlu0 %1136
    %1138 = vrot.lane.b32.xlu0 %v295, 80
    %v1139 = vpop.permute.xlu0 %1138
    %v1140 = vsel %vm310, %v1137, 0
    %v1142 = vsel %vm310, %v1139, 0
    %1144 = vmatprep.subr.mxu0 0.0
    %1145 = vmatpush1.xpose.msra.mxu0 %v1142
    %1146 = vmatprep.subr.mxu0 0.0
    %1147 = vmatpush1.xpose.msra.mxu0 0.0
    %1148 = vmatprep.subr.mxu0 0.0
    %1149 = vmatpush1.xpose.msra.mxu0 0.0
    %1150 = vmatprep.subr.mxu0 0.0
    %1151 = vmatpush1.xpose.msra.mxu0 0.0
    %1152 = vmatprep.subr.mxu0 0.0
    %1153 = vmatpush1.xpose.msra.mxu0 0.0
    %1154 = vmatprep.subr.mxu0 0.0
    %1155 = vmatpush1.xpose.msra.mxu0 0.0
    %1156 = vmatprep.subr.mxu0 0.0
    %1157 = vmatpush1.xpose.msra.mxu0 0.0
    %1158 = vmatprep.subr.mxu0 0.0
    %1159 = vmatpush1.xpose.msra.mxu0 0.0
    %1160 = vmatprep.subr.mxu0 0.0
    %1161 = vmatpush1.xpose.msra.mxu0 0.0
    %1162 = vmatprep.subr.mxu0 0.0
    %1163 = vmatpush1.xpose.msra.mxu0 0.0
    %1164 = vmatprep.subr.mxu0 0.0
    %1165 = vmatpush1.xpose.msra.mxu0 0.0
    %1166 = vmatprep.subr.mxu0 0.0
    %1167 = vmatpush1.xpose.msra.mxu0 0.0
    %1168 = vmatprep.subr.mxu0 0.0
    %1169 = vmatpush1.xpose.msra.mxu0 0.0
    %1170 = vmatprep.subr.mxu0 0.0
    %1171 = vmatpush1.xpose.msra.mxu0 0.0
    %1172 = vmatprep.subr.mxu0 0.0
    %1173 = vmatpush1.xpose.msra.mxu0 0.0
    %1174 = vmatprep.subr.mxu0 0.0
    %1175 = vmatpush1.xpose.msra.mxu0 0.0
    %1176 = vmatprep.subr.mxu0 0.0
    %1177 = vmatpush1.xpose.msra.mxu0 0.0
    %1178 = vmatprep.subr.mxu0 0.0
    %1179 = vmatpush1.xpose.msra.mxu0 0.0
    %1180 = vmatprep.subr.mxu0 0.0
    %1181 = vmatpush1.xpose.msra.mxu0 0.0
    %1182 = vmatprep.subr.mxu0 0.0
    %1183 = vmatpush1.xpose.msra.mxu0 0.0
    %1184 = vmatprep.subr.mxu0 0.0
    %1185 = vmatpush1.xpose.msra.mxu0 0.0
    %1186 = vmatprep.subr.mxu0 0.0
    %1187 = vmatpush1.xpose.msra.mxu0 0.0
    %1188 = vmatprep.subr.mxu0 0.0
    %1189 = vmatpush1.xpose.msra.mxu0 0.0
    %1190 = vmatprep.subr.mxu0 0.0
    %1191 = vmatpush1.xpose.msra.mxu0 0.0
    %1192 = vmatprep.subr.mxu0 0.0
    %1193 = vmatpush1.xpose.msra.mxu0 0.0
    %1194 = vmatprep.subr.mxu0 0.0
    %1195 = vmatpush1.xpose.msra.mxu0 0.0
    %1196 = vmatprep.subr.mxu0 0.0
    %1197 = vmatpush1.xpose.msra.mxu0 0.0
    %1198 = vmatprep.subr.mxu0 0.0
    %1199 = vmatpush1.xpose.msra.mxu0 0.0
    %1200 = vmatprep.subr.mxu0 0.0
    %1201 = vmatpush1.xpose.msra.mxu0 0.0
    %1202 = vmatprep.subr.mxu0 0.0
    %1203 = vmatpush1.xpose.msra.mxu0 0.0
    %1204 = vmatprep.subr.mxu0 0.0
    %1205 = vmatpush1.xpose.msra.mxu0 0.0
    %1206 = vmatprep.subr.mxu0 0.0
    %1207 = vmatpush1.xpose.msra.mxu0 0.0
    %1208 = vmatprep.mubr.f32.mxu0 0.0
    %1209 = vmatmul.mubr.f32.gmra.mrb[0].mxu0 %v1140
    %v1210 = vpop.f32.mrb[0].mxu0
    %v1211 = vadd.f32 0.0, %v1210
    %v1212 = vpop.f32.mrb[0].mxu0
    %1213 = vdwg.mxu0
    %1214 = vrot.lane.b32.xlu0 %v300, 112
    %v1215 = vpop.permute.xlu0 %1214
    %1216 = vrot.lane.b32.xlu0 %v300, 80
    %v1217 = vpop.permute.xlu0 %1216
    %v1218 = vsel %vm310, %v1215, 0
    %v1220 = vsel %vm310, %v1217, 0
    %1222 = vmatprep.subr.mxu0 0.0
    %1223 = vmatpush1.xpose.msra.mxu0 %v1220
    %1224 = vmatprep.subr.mxu0 0.0
    %1225 = vmatpush1.xpose.msra.mxu0 0.0
    %1226 = vmatprep.subr.mxu0 0.0
    %1227 = vmatpush1.xpose.msra.mxu0 0.0
    %1228 = vmatprep.subr.mxu0 0.0
    %1229 = vmatpush1.xpose.msra.mxu0 0.0
    %1230 = vmatprep.subr.mxu0 0.0
    %1231 = vmatpush1.xpose.msra.mxu0 0.0
    %1232 = vmatprep.subr.mxu0 0.0
    %1233 = vmatpush1.xpose.msra.mxu0 0.0
    %1234 = vmatprep.subr.mxu0 0.0
    %1235 = vmatpush1.xpose.msra.mxu0 0.0
    %1236 = vmatprep.subr.mxu0 0.0
    %1237 = vmatpush1.xpose.msra.mxu0 0.0
    %1238 = vmatprep.subr.mxu0 0.0
    %1239 = vmatpush1.xpose.msra.mxu0 0.0
    %1240 = vmatprep.subr.mxu0 0.0
    %1241 = vmatpush1.xpose.msra.mxu0 0.0
    %1242 = vmatprep.subr.mxu0 0.0
    %1243 = vmatpush1.xpose.msra.mxu0 0.0
    %1244 = vmatprep.subr.mxu0 0.0
    %1245 = vmatpush1.xpose.msra.mxu0 0.0
    %1246 = vmatprep.subr.mxu0 0.0
    %1247 = vmatpush1.xpose.msra.mxu0 0.0
    %1248 = vmatprep.subr.mxu0 0.0
    %1249 = vmatpush1.xpose.msra.mxu0 0.0
    %1250 = vmatprep.subr.mxu0 0.0
    %1251 = vmatpush1.xpose.msra.mxu0 0.0
    %1252 = vmatprep.subr.mxu0 0.0
    %1253 = vmatpush1.xpose.msra.mxu0 0.0
    %1254 = vmatprep.subr.mxu0 0.0
    %1255 = vmatpush1.xpose.msra.mxu0 0.0
    %1256 = vmatprep.subr.mxu0 0.0
    %1257 = vmatpush1.xpose.msra.mxu0 0.0
    %1258 = vmatprep.subr.mxu0 0.0
    %1259 = vmatpush1.xpose.msra.mxu0 0.0
    %1260 = vmatprep.subr.mxu0 0.0
    %1261 = vmatpush1.xpose.msra.mxu0 0.0
    %1262 = vmatprep.subr.mxu0 0.0
    %1263 = vmatpush1.xpose.msra.mxu0 0.0
    %1264 = vmatprep.subr.mxu0 0.0
    %1265 = vmatpush1.xpose.msra.mxu0 0.0
    %1266 = vmatprep.subr.mxu0 0.0
    %1267 = vmatpush1.xpose.msra.mxu0 0.0
    %1268 = vmatprep.subr.mxu0 0.0
    %1269 = vmatpush1.xpose.msra.mxu0 0.0
    %1270 = vmatprep.subr.mxu0 0.0
    %1271 = vmatpush1.xpose.msra.mxu0 0.0
    %1272 = vmatprep.subr.mxu0 0.0
    %1273 = vmatpush1.xpose.msra.mxu0 0.0
    %1274 = vmatprep.subr.mxu0 0.0
    %1275 = vmatpush1.xpose.msra.mxu0 0.0
    %1276 = vmatprep.subr.mxu0 0.0
    %1277 = vmatpush1.xpose.msra.mxu0 0.0
    %1278 = vmatprep.subr.mxu0 0.0
    %1279 = vmatpush1.xpose.msra.mxu0 0.0
    %1280 = vmatprep.subr.mxu0 0.0
    %1281 = vmatpush1.xpose.msra.mxu0 0.0
    %1282 = vmatprep.subr.mxu0 0.0
    %1283 = vmatpush1.xpose.msra.mxu0 0.0
    %1284 = vmatprep.subr.mxu0 0.0
    %1285 = vmatpush1.xpose.msra.mxu0 0.0
    %1286 = vmatprep.mubr.f32.mxu0 0.0
    %1287 = vmatmul.mubr.f32.gmra.mrb[0].mxu0 %v1218
    %v1288 = vpop.f32.mrb[0].mxu0
    %v1289 = vadd.f32 0.0, %v1288
    %v1290 = vpop.f32.mrb[0].mxu0
    %1291 = vdwg.mxu0
    %v1292 = vmul.f32 %v1211, 0.17677669
    %v1293 = vmul.f32 %v1289, 0.17677669
    %v1294 = vadd.f32 %v1292, %v171
    %v1295 = vadd.f32 %v1293, %v171
    %v1296 = vsel %vm310, %v1294, -inf
    %1297 = vmax.xlane.f32.xlu0 %v1296
    %v1298 = vpop.xlane.xlu0 %1297
    %v1299 = vsel %vm310, %v1295, -inf
    %1300 = vmax.xlane.f32.xlu0 %v1299
    %v1301 = vpop.xlane.xlu0 %1300
    %v1302 = vsub.f32 %v1294, %v1298
    %v1303 = vsub.f32 %v1295, %v1301
    %v1304 = vmul.f32 %v1302, 1.442695
    %v1305 = vpow.pop %v1304
    %v1306 = vmul.f32 %v1303, 1.442695
    %v1307 = vpow.pop %v1306
    %v1308 = vsel %vm310, %v1305, 0.0
    %1309 = vadd.xlane.f32.xlu0 %v1308
    %v1310 = vpop.xlane.xlu0 %1309
    %v1311 = vsel %vm310, %v1307, 0.0
    %1312 = vadd.xlane.f32.xlu0 %v1311
    %v1313 = vpop.xlane.xlu0 %1312
    %v1314 = vrcp.pop %v1310
    %v1315 = vrcp.pop %v1313
    %v1316 = vmul.f32 %v1305, %v1314
    %v1317 = vmul.f32 %v1307, %v1315
    %1318 = vrot.lane.b32.xlu0 %v295, 48
    %v1319 = vpop.permute.xlu0 %1318
    %v1322 = vsel %vm310, %v1316, 0
    %1324 = vmatprep.subr.mxu0 0.0
    %1325 = vmatpush1.msra.mxu0 %v1319
    %1326 = vmatprep.subr.mxu0 0.0
    %1327 = vmatpush1.msra.mxu0 0.0
    %1328 = vmatprep.subr.mxu0 0.0
    %1329 = vmatpush1.msra.mxu0 0.0
    %1330 = vmatprep.subr.mxu0 0.0
    %1331 = vmatpush1.msra.mxu0 0.0
    %1332 = vmatprep.subr.mxu0 0.0
    %1333 = vmatpush1.msra.mxu0 0.0
    %1334 = vmatprep.subr.mxu0 0.0
    %1335 = vmatpush1.msra.mxu0 0.0
    %1336 = vmatprep.subr.mxu0 0.0
    %1337 = vmatpush1.msra.mxu0 0.0
    %1338 = vmatprep.subr.mxu0 0.0
    %1339 = vmatpush1.msra.mxu0 0.0
    %1340 = vmatprep.subr.mxu0 0.0
    %1341 = vmatpush1.msra.mxu0 0.0
    %1342 = vmatprep.subr.mxu0 0.0
    %1343 = vmatpush1.msra.mxu0 0.0
    %1344 = vmatprep.subr.mxu0 0.0
    %1345 = vmatpush1.msra.mxu0 0.0
    %1346 = vmatprep.subr.mxu0 0.0
    %1347 = vmatpush1.msra.mxu0 0.0
    %1348 = vmatprep.subr.mxu0 0.0
    %1349 = vmatpush1.msra.mxu0 0.0
    %1350 = vmatprep.subr.mxu0 0.0
    %1351 = vmatpush1.msra.mxu0 0.0
    %1352 = vmatprep.subr.mxu0 0.0
    %1353 = vmatpush1.msra.mxu0 0.0
    %1354 = vmatprep.subr.mxu0 0.0
    %1355 = vmatpush1.msra.mxu0 0.0
    %1356 = vmatprep.subr.mxu0 0.0
    %1357 = vmatpush1.msra.mxu0 0.0
    %1358 = vmatprep.subr.mxu0 0.0
    %1359 = vmatpush1.msra.mxu0 0.0
    %1360 = vmatprep.subr.mxu0 0.0
    %1361 = vmatpush1.msra.mxu0 0.0
    %1362 = vmatprep.subr.mxu0 0.0
    %1363 = vmatpush1.msra.mxu0 0.0
    %1364 = vmatprep.subr.mxu0 0.0
    %1365 = vmatpush1.msra.mxu0 0.0
    %1366 = vmatprep.subr.mxu0 0.0
    %1367 = vmatpush1.msra.mxu0 0.0
    %1368 = vmatprep.subr.mxu0 0.0
    %1369 = vmatpush1.msra.mxu0 0.0
    %1370 = vmatprep.subr.mxu0 0.0
    %1371 = vmatpush1.msra.mxu0 0.0
    %1372 = vmatprep.subr.mxu0 0.0
    %1373 = vmatpush1.msra.mxu0 0.0
    %1374 = vmatprep.subr.mxu0 0.0
    %1375 = vmatpush1.msra.mxu0 0.0
    %1376 = vmatprep.subr.mxu0 0.0
    %1377 = vmatpush1.msra.mxu0 0.0
    %1378 = vmatprep.subr.mxu0 0.0
    %1379 = vmatpush1.msra.mxu0 0.0
    %1380 = vmatprep.subr.mxu0 0.0
    %1381 = vmatpush1.msra.mxu0 0.0
    %1382 = vmatprep.subr.mxu0 0.0
    %1383 = vmatpush1.msra.mxu0 0.0
    %1384 = vmatprep.subr.mxu0 0.0
    %1385 = vmatpush1.msra.mxu0 0.0
    %1386 = vmatprep.subr.mxu0 0.0
    %1387 = vmatpush1.msra.mxu0 0.0
    %1388 = vmatprep.mubr.f32.mxu0 0.0
    %1389 = vmatmul.mubr.f32.gmra.mrb[0].mxu0 %v1322
    %v1390 = vpop.f32.mrb[0].mxu0
    %v1391 = vadd.f32 0.0, %v1390
    %v1392 = vpop.f32.mrb[0].mxu0
    %1393 = vdwg.mxu0
    %1394 = vrot.lane.b32.xlu0 %v300, 48
    %v1395 = vpop.permute.xlu0 %1394
    %v1398 = vsel %vm310, %v1317, 0
    %1400 = vmatprep.subr.mxu0 0.0
    %1401 = vmatpush1.msra.mxu0 %v1395
    %1402 = vmatprep.subr.mxu0 0.0
    %1403 = vmatpush1.msra.mxu0 0.0
    %1404 = vmatprep.subr.mxu0 0.0
    %1405 = vmatpush1.msra.mxu0 0.0
    %1406 = vmatprep.subr.mxu0 0.0
    %1407 = vmatpush1.msra.mxu0 0.0
    %1408 = vmatprep.subr.mxu0 0.0
    %1409 = vmatpush1.msra.mxu0 0.0
    %1410 = vmatprep.subr.mxu0 0.0
    %1411 = vmatpush1.msra.mxu0 0.0
    %1412 = vmatprep.subr.mxu0 0.0
    %1413 = vmatpush1.msra.mxu0 0.0
    %1414 = vmatprep.subr.mxu0 0.0
    %1415 = vmatpush1.msra.mxu0 0.0
    %1416 = vmatprep.subr.mxu0 0.0
    %1417 = vmatpush1.msra.mxu0 0.0
    %1418 = vmatprep.subr.mxu0 0.0
    %1419 = vmatpush1.msra.mxu0 0.0
    %1420 = vmatprep.subr.mxu0 0.0
    %1421 = vmatpush1.msra.mxu0 0.0
    %1422 = vmatprep.subr.mxu0 0.0
    %1423 = vmatpush1.msra.mxu0 0.0
    %1424 = vmatprep.subr.mxu0 0.0
    %1425 = vmatpush1.msra.mxu0 0.0
    %1426 = vmatprep.subr.mxu0 0.0
    %1427 = vmatpush1.msra.mxu0 0.0
    %1428 = vmatprep.subr.mxu0 0.0
    %1429 = vmatpush1.msra.mxu0 0.0
    %1430 = vmatprep.subr.mxu0 0.0
    %1431 = vmatpush1.msra.mxu0 0.0
    %1432 = vmatprep.subr.mxu0 0.0
    %1433 = vmatpush1.msra.mxu0 0.0
    %1434 = vmatprep.subr.mxu0 0.0
    %1435 = vmatpush1.msra.mxu0 0.0
    %1436 = vmatprep.subr.mxu0 0.0
    %1437 = vmatpush1.msra.mxu0 0.0
    %1438 = vmatprep.subr.mxu0 0.0
    %1439 = vmatpush1.msra.mxu0 0.0
    %1440 = vmatprep.subr.mxu0 0.0
    %1441 = vmatpush1.msra.mxu0 0.0
    %1442 = vmatprep.subr.mxu0 0.0
    %1443 = vmatpush1.msra.mxu0 0.0
    %1444 = vmatprep.subr.mxu0 0.0
    %1445 = vmatpush1.msra.mxu0 0.0
    %1446 = vmatprep.subr.mxu0 0.0
    %1447 = vmatpush1.msra.mxu0 0.0
    %1448 = vmatprep.subr.mxu0 0.0
    %1449 = vmatpush1.msra.mxu0 0.0
    %1450 = vmatprep.subr.mxu0 0.0
    %1451 = vmatpush1.msra.mxu0 0.0
    %1452 = vmatprep.subr.mxu0 0.0
    %1453 = vmatpush1.msra.mxu0 0.0
    %1454 = vmatprep.subr.mxu0 0.0
    %1455 = vmatpush1.msra.mxu0 0.0
    %1456 = vmatprep.subr.mxu0 0.0
    %1457 = vmatpush1.msra.mxu0 0.0
    %1458 = vmatprep.subr.mxu0 0.0
    %1459 = vmatpush1.msra.mxu0 0.0
    %1460 = vmatprep.subr.mxu0 0.0
    %1461 = vmatpush1.msra.mxu0 0.0
    %1462 = vmatprep.subr.mxu0 0.0
    %1463 = vmatpush1.msra.mxu0 0.0
    %1464 = vmatprep.mubr.f32.mxu0 0.0
    %1465 = vmatmul.mubr.f32.gmra.mrb[0].mxu0 %v1398
    %v1466 = vpop.f32.mrb[0].mxu0
    %v1467 = vadd.f32 0.0, %v1466
    %v1468 = vpop.f32.mrb[0].mxu0
    %1469 = vdwg.mxu0
    %v1471 = vsel %vm310, %v1391, 0
    %v1474 = vsel %vm310, %v1467, 0
    %1476 = vmatprep.subr.mxu0 0.0
    %1477 = vmatpush1.msra.mxu0 %v305
    %1478 = vmatprep.subr.mxu0 0.0
    %1479 = vmatpush1.msra.mxu0 0.0
    %1480 = vmatprep.subr.mxu0 0.0
    %1481 = vmatpush1.msra.mxu0 0.0
    %1482 = vmatprep.subr.mxu0 0.0
    %1483 = vmatpush1.msra.mxu0 0.0
    %1484 = vmatprep.subr.mxu0 0.0
    %1485 = vmatpush1.msra.mxu0 0.0
    %1486 = vmatprep.subr.mxu0 0.0
    %1487 = vmatpush1.msra.mxu0 0.0
    %1488 = vmatprep.subr.mxu0 0.0
    %1489 = vmatpush1.msra.mxu0 0.0
    %1490 = vmatprep.subr.mxu0 0.0
    %1491 = vmatpush1.msra.mxu0 0.0
    %1492 = vmatprep.subr.mxu0 0.0
    %1493 = vmatpush1.msra.mxu0 0.0
    %1494 = vmatprep.subr.mxu0 0.0
    %1495 = vmatpush1.msra.mxu0 0.0
    %1496 = vmatprep.subr.mxu0 0.0
    %1497 = vmatpush1.msra.mxu0 0.0
    %1498 = vmatprep.subr.mxu0 0.0
    %1499 = vmatpush1.msra.mxu0 0.0
    %1500 = vmatprep.subr.mxu0 0.0
    %1501 = vmatpush1.msra.mxu0 0.0
    %1502 = vmatprep.subr.mxu0 0.0
    %1503 = vmatpush1.msra.mxu0 0.0
    %1504 = vmatprep.subr.mxu0 0.0
    %1505 = vmatpush1.msra.mxu0 0.0
    %1506 = vmatprep.subr.mxu0 0.0
    %1507 = vmatpush1.msra.mxu0 0.0
    %1508 = vmatprep.subr.mxu0 0.0
    %1509 = vmatpush1.msra.mxu0 0.0
    %1510 = vmatprep.subr.mxu0 0.0
    %1511 = vmatpush1.msra.mxu0 0.0
    %1512 = vmatprep.subr.mxu0 0.0
    %1513 = vmatpush1.msra.mxu0 0.0
    %1514 = vmatprep.subr.mxu0 0.0
    %1515 = vmatpush1.msra.mxu0 0.0
    %1516 = vmatprep.subr.mxu0 0.0
    %1517 = vmatpush1.msra.mxu0 0.0
    %1518 = vmatprep.subr.mxu0 0.0
    %1519 = vmatpush1.msra.mxu0 0.0
    %1520 = vmatprep.subr.mxu0 0.0
    %1521 = vmatpush1.msra.mxu0 0.0
    %1522 = vmatprep.subr.mxu0 0.0
    %1523 = vmatpush1.msra.mxu0 0.0
    %1524 = vmatprep.subr.mxu0 0.0
    %1525 = vmatpush1.msra.mxu0 0.0
    %1526 = vmatprep.subr.mxu0 0.0
    %1527 = vmatpush1.msra.mxu0 0.0
    %1528 = vmatprep.subr.mxu0 0.0
    %1529 = vmatpush1.msra.mxu0 0.0
    %1530 = vmatprep.subr.mxu0 0.0
    %1531 = vmatpush1.msra.mxu0 0.0
    %1532 = vmatprep.subr.mxu0 0.0
    %1533 = vmatpush1.msra.mxu0 0.0
    %1534 = vmatprep.subr.mxu0 0.0
    %1535 = vmatpush1.msra.mxu0 0.0
    %1536 = vmatprep.subr.mxu0 0.0
    %1537 = vmatpush1.msra.mxu0 0.0
    %1538 = vmatprep.subr.mxu0 0.0
    %1539 = vmatpush1.msra.mxu0 0.0
    %1540 = vmatprep.mubr.f32.mxu0 0.0
    %1541 = vmatmul.mubr.f32.gmra.mrb[0].mxu0 %v1471
    %v1542 = vpop.f32.mrb[0].mxu0
    %v1543 = vadd.f32 0.0, %v1542
    %v1544 = vpop.f32.mrb[0].mxu0
    %1545 = vmatprep.mubr.f32.mxu0 0.0
    %1546 = vmatmul.mubr.f32.gmra.mrb[0].mxu0 %v1474
    %v1547 = vpop.f32.mrb[0].mxu0
    %v1548 = vadd.f32 0.0, %v1547
    %v1549 = vpop.f32.mrb[0].mxu0
    %1550 = vdwg.mxu0
    %v1551 = vadd.f32 %v1128, %v1543
    %v1552 = vadd.f32 %v1133, %v1548
    %1553 = vrot.lane.b32.xlu0 %v295, 104
    %v1554 = vpop.permute.xlu0 %1553
    %1555 = vrot.lane.b32.xlu0 %v295, 72
    %v1556 = vpop.permute.xlu0 %1555
    %v1557 = vsel %vm310, %v1554, 0
    %v1559 = vsel %vm310, %v1556, 0
    %1561 = vmatprep.subr.mxu0 0.0
    %1562 = vmatpush1.xpose.msra.mxu0 %v1559
    %1563 = vmatprep.subr.mxu0 0.0
    %1564 = vmatpush1.xpose.msra.mxu0 0.0
    %1565 = vmatprep.subr.mxu0 0.0
    %1566 = vmatpush1.xpose.msra.mxu0 0.0
    %1567 = vmatprep.subr.mxu0 0.0
    %1568 = vmatpush1.xpose.msra.mxu0 0.0
    %1569 = vmatprep.subr.mxu0 0.0
    %1570 = vmatpush1.xpose.msra.mxu0 0.0
    %1571 = vmatprep.subr.mxu0 0.0
    %1572 = vmatpush1.xpose.msra.mxu0 0.0
    %1573 = vmatprep.subr.mxu0 0.0
    %1574 = vmatpush1.xpose.msra.mxu0 0.0
    %1575 = vmatprep.subr.mxu0 0.0
    %1576 = vmatpush1.xpose.msra.mxu0 0.0
    %1577 = vmatprep.subr.mxu0 0.0
    %1578 = vmatpush1.xpose.msra.mxu0 0.0
    %1579 = vmatprep.subr.mxu0 0.0
    %1580 = vmatpush1.xpose.msra.mxu0 0.0
    %1581 = vmatprep.subr.mxu0 0.0
    %1582 = vmatpush1.xpose.msra.mxu0 0.0
    %1583 = vmatprep.subr.mxu0 0.0
    %1584 = vmatpush1.xpose.msra.mxu0 0.0
    %1585 = vmatprep.subr.mxu0 0.0
    %1586 = vmatpush1.xpose.msra.mxu0 0.0
    %1587 = vmatprep.subr.mxu0 0.0
    %1588 = vmatpush1.xpose.msra.mxu0 0.0
    %1589 = vmatprep.subr.mxu0 0.0
    %1590 = vmatpush1.xpose.msra.mxu0 0.0
    %1591 = vmatprep.subr.mxu0 0.0
    %1592 = vmatpush1.xpose.msra.mxu0 0.0
    %1593 = vmatprep.subr.mxu0 0.0
    %1594 = vmatpush1.xpose.msra.mxu0 0.0
    %1595 = vmatprep.subr.mxu0 0.0
    %1596 = vmatpush1.xpose.msra.mxu0 0.0
    %1597 = vmatprep.subr.mxu0 0.0
    %1598 = vmatpush1.xpose.msra.mxu0 0.0
    %1599 = vmatprep.subr.mxu0 0.0
    %1600 = vmatpush1.xpose.msra.mxu0 0.0
    %1601 = vmatprep.subr.mxu0 0.0
    %1602 = vmatpush1.xpose.msra.mxu0 0.0
    %1603 = vmatprep.subr.mxu0 0.0
    %1604 = vmatpush1.xpose.msra.mxu0 0.0
    %1605 = vmatprep.subr.mxu0 0.0
    %1606 = vmatpush1.xpose.msra.mxu0 0.0
    %1607 = vmatprep.subr.mxu0 0.0
    %1608 = vmatpush1.xpose.msra.mxu0 0.0
    %1609 = vmatprep.subr.mxu0 0.0
    %1610 = vmatpush1.xpose.msra.mxu0 0.0
    %1611 = vmatprep.subr.mxu0 0.0
    %1612 = vmatpush1.xpose.msra.mxu0 0.0
    %1613 = vmatprep.subr.mxu0 0.0
    %1614 = vmatpush1.xpose.msra.mxu0 0.0
    %1615 = vmatprep.subr.mxu0 0.0
    %1616 = vmatpush1.xpose.msra.mxu0 0.0
    %1617 = vmatprep.subr.mxu0 0.0
    %1618 = vmatpush1.xpose.msra.mxu0 0.0
    %1619 = vmatprep.subr.mxu0 0.0
    %1620 = vmatpush1.xpose.msra.mxu0 0.0
    %1621 = vmatprep.subr.mxu0 0.0
    %1622 = vmatpush1.xpose.msra.mxu0 0.0
    %1623 = vmatprep.subr.mxu0 0.0
    %1624 = vmatpush1.xpose.msra.mxu0 0.0
    %1625 = vmatprep.mubr.f32.mxu0 0.0
    %1626 = vmatmul.mubr.f32.gmra.mrb[0].mxu0 %v1557
    %v1627 = vpop.f32.mrb[0].mxu0
    %v1628 = vadd.f32 0.0, %v1627
    %v1629 = vpop.f32.mrb[0].mxu0
    %1630 = vdwg.mxu0
    %1631 = vrot.lane.b32.xlu0 %v300, 104
    %v1632 = vpop.permute.xlu0 %1631
    %1633 = vrot.lane.b32.xlu0 %v300, 72
    %v1634 = vpop.permute.xlu0 %1633
    %v1635 = vsel %vm310, %v1632, 0
    %v1637 = vsel %vm310, %v1634, 0
    %1639 = vmatprep.subr.mxu0 0.0
    %1640 = vmatpush1.xpose.msra.mxu0 %v1637
    %1641 = vmatprep.subr.mxu0 0.0
    %1642 = vmatpush1.xpose.msra.mxu0 0.0
    %1643 = vmatprep.subr.mxu0 0.0
    %1644 = vmatpush1.xpose.msra.mxu0 0.0
    %1645 = vmatprep.subr.mxu0 0.0
    %1646 = vmatpush1.xpose.msra.mxu0 0.0
    %1647 = vmatprep.subr.mxu0 0.0
    %1648 = vmatpush1.xpose.msra.mxu0 0.0
    %1649 = vmatprep.subr.mxu0 0.0
    %1650 = vmatpush1.xpose.msra.mxu0 0.0
    %1651 = vmatprep.subr.mxu0 0.0
    %1652 = vmatpush1.xpose.msra.mxu0 0.0
    %1653 = vmatprep.subr.mxu0 0.0
    %1654 = vmatpush1.xpose.msra.mxu0 0.0
    %1655 = vmatprep.subr.mxu0 0.0
    %1656 = vmatpush1.xpose.msra.mxu0 0.0
    %1657 = vmatprep.subr.mxu0 0.0
    %1658 = vmatpush1.xpose.msra.mxu0 0.0
    %1659 = vmatprep.subr.mxu0 0.0
    %1660 = vmatpush1.xpose.msra.mxu0 0.0
    %1661 = vmatprep.subr.mxu0 0.0
    %1662 = vmatpush1.xpose.msra.mxu0 0.0
    %1663 = vmatprep.subr.mxu0 0.0
    %1664 = vmatpush1.xpose.msra.mxu0 0.0
    %1665 = vmatprep.subr.mxu0 0.0
    %1666 = vmatpush1.xpose.msra.mxu0 0.0
    %1667 = vmatprep.subr.mxu0 0.0
    %1668 = vmatpush1.xpose.msra.mxu0 0.0
    %1669 = vmatprep.subr.mxu0 0.0
    %1670 = vmatpush1.xpose.msra.mxu0 0.0
    %1671 = vmatprep.subr.mxu0 0.0
    %1672 = vmatpush1.xpose.msra.mxu0 0.0
    %1673 = vmatprep.subr.mxu0 0.0
    %1674 = vmatpush1.xpose.msra.mxu0 0.0
    %1675 = vmatprep.subr.mxu0 0.0
    %1676 = vmatpush1.xpose.msra.mxu0 0.0
    %1677 = vmatprep.subr.mxu0 0.0
    %1678 = vmatpush1.xpose.msra.mxu0 0.0
    %1679 = vmatprep.subr.mxu0 0.0
    %1680 = vmatpush1.xpose.msra.mxu0 0.0
    %1681 = vmatprep.subr.mxu0 0.0
    %1682 = vmatpush1.xpose.msra.mxu0 0.0
    %1683 = vmatprep.subr.mxu0 0.0
    %1684 = vmatpush1.xpose.msra.mxu0 0.0
    %1685 = vmatprep.subr.mxu0 0.0
    %1686 = vmatpush1.xpose.msra.mxu0 0.0
    %1687 = vmatprep.subr.mxu0 0.0
    %1688 = vmatpush1.xpose.msra.mxu0 0.0
    %1689 = vmatprep.subr.mxu0 0.0
    %1690 = vmatpush1.xpose.msra.mxu0 0.0
    %1691 = vmatprep.subr.mxu0 0.0
    %1692 = vmatpush1.xpose.msra.mxu0 0.0
    %1693 = vmatprep.subr.mxu0 0.0
    %1694 = vmatpush1.xpose.msra.mxu0 0.0
    %1695 = vmatprep.subr.mxu0 0.0
    %1696 = vmatpush1.xpose.msra.mxu0 0.0
    %1697 = vmatprep.subr.mxu0 0.0
    %1698 = vmatpush1.xpose.msra.mxu0 0.0
    %1699 = vmatprep.subr.mxu0 0.0
    %1700 = vmatpush1.xpose.msra.mxu0 0.0
    %1701 = vmatprep.subr.mxu0 0.0
    %1702 = vmatpush1.xpose.msra.mxu0 0.0
    %1703 = vmatprep.mubr.f32.mxu0 0.0
    %1704 = vmatmul.mubr.f32.gmra.mrb[0].mxu0 %v1635
    %v1705 = vpop.f32.mrb[0].mxu0
    %v1706 = vadd.f32 0.0, %v1705
    %v1707 = vpop.f32.mrb[0].mxu0
    %1708 = vdwg.mxu0
    %v1709 = vmul.f32 %v1628, 0.17677669
    %v1710 = vmul.f32 %v1706, 0.17677669
    %v1711 = vadd.f32 %v1709, %v171
    %v1712 = vadd.f32 %v1710, %v171
    %v1713 = vsel %vm310, %v1711, -inf
    %1714 = vmax.xlane.f32.xlu0 %v1713
    %v1715 = vpop.xlane.xlu0 %1714
    %v1716 = vsel %vm310, %v1712, -inf
    %1717 = vmax.xlane.f32.xlu0 %v1716
    %v1718 = vpop.xlane.xlu0 %1717
    %v1719 = vsub.f32 %v1711, %v1715
    %v1720 = vsub.f32 %v1712, %v1718
    %v1721 = vmul.f32 %v1719, 1.442695
    %v1722 = vpow.pop %v1721
    %v1723 = vmul.f32 %v1720, 1.442695
    %v1724 = vpow.pop %v1723
    %v1725 = vsel %vm310, %v1722, 0.0
    %1726 = vadd.xlane.f32.xlu0 %v1725
    %v1727 = vpop.xlane.xlu0 %1726
    %v1728 = vsel %vm310, %v1724, 0.0
    %1729 = vadd.xlane.f32.xlu0 %v1728
    %v1730 = vpop.xlane.xlu0 %1729
    %v1731 = vrcp.pop %v1727
    %v1732 = vrcp.pop %v1730
    %v1733 = vmul.f32 %v1722, %v1731
    %v1734 = vmul.f32 %v1724, %v1732
    %1735 = vrot.lane.b32.xlu0 %v295, 40
    %v1736 = vpop.permute.xlu0 %1735
    %v1739 = vsel %vm310, %v1733, 0
    %1741 = vmatprep.subr.mxu0 0.0
    %1742 = vmatpush1.msra.mxu0 %v1736
    %1743 = vmatprep.subr.mxu0 0.0
    %1744 = vmatpush1.msra.mxu0 0.0
    %1745 = vmatprep.subr.mxu0 0.0
    %1746 = vmatpush1.msra.mxu0 0.0
    %1747 = vmatprep.subr.mxu0 0.0
    %1748 = vmatpush1.msra.mxu0 0.0
    %1749 = vmatprep.subr.mxu0 0.0
    %1750 = vmatpush1.msra.mxu0 0.0
    %1751 = vmatprep.subr.mxu0 0.0
    %1752 = vmatpush1.msra.mxu0 0.0
    %1753 = vmatprep.subr.mxu0 0.0
    %1754 = vmatpush1.msra.mxu0 0.0
    %1755 = vmatprep.subr.mxu0 0.0
    %1756 = vmatpush1.msra.mxu0 0.0
    %1757 = vmatprep.subr.mxu0 0.0
    %1758 = vmatpush1.msra.mxu0 0.0
    %1759 = vmatprep.subr.mxu0 0.0
    %1760 = vmatpush1.msra.mxu0 0.0
    %1761 = vmatprep.subr.mxu0 0.0
    %1762 = vmatpush1.msra.mxu0 0.0
    %1763 = vmatprep.subr.mxu0 0.0
    %1764 = vmatpush1.msra.mxu0 0.0
    %1765 = vmatprep.subr.mxu0 0.0
    %1766 = vmatpush1.msra.mxu0 0.0
    %1767 = vmatprep.subr.mxu0 0.0
    %1768 = vmatpush1.msra.mxu0 0.0
    %1769 = vmatprep.subr.mxu0 0.0
    %1770 = vmatpush1.msra.mxu0 0.0
    %1771 = vmatprep.subr.mxu0 0.0
    %1772 = vmatpush1.msra.mxu0 0.0
    %1773 = vmatprep.subr.mxu0 0.0
    %1774 = vmatpush1.msra.mxu0 0.0
    %1775 = vmatprep.subr.mxu0 0.0
    %1776 = vmatpush1.msra.mxu0 0.0
    %1777 = vmatprep.subr.mxu0 0.0
    %1778 = vmatpush1.msra.mxu0 0.0
    %1779 = vmatprep.subr.mxu0 0.0
    %1780 = vmatpush1.msra.mxu0 0.0
    %1781 = vmatprep.subr.mxu0 0.0
    %1782 = vmatpush1.msra.mxu0 0.0
    %1783 = vmatprep.subr.mxu0 0.0
    %1784 = vmatpush1.msra.mxu0 0.0
    %1785 = vmatprep.subr.mxu0 0.0
    %1786 = vmatpush1.msra.mxu0 0.0
    %1787 = vmatprep.subr.mxu0 0.0
    %1788 = vmatpush1.msra.mxu0 0.0
    %1789 = vmatprep.subr.mxu0 0.0
    %1790 = vmatpush1.msra.mxu0 0.0
    %1791 = vmatprep.subr.mxu0 0.0
    %1792 = vmatpush1.msra.mxu0 0.0
    %1793 = vmatprep.subr.mxu0 0.0
    %1794 = vmatpush1.msra.mxu0 0.0
    %1795 = vmatprep.subr.mxu0 0.0
    %1796 = vmatpush1.msra.mxu0 0.0
    %1797 = vmatprep.subr.mxu0 0.0
    %1798 = vmatpush1.msra.mxu0 0.0
    %1799 = vmatprep.subr.mxu0 0.0
    %1800 = vmatpush1.msra.mxu0 0.0
    %1801 = vmatprep.subr.mxu0 0.0
    %1802 = vmatpush1.msra.mxu0 0.0
    %1803 = vmatprep.subr.mxu0 0.0
    %1804 = vmatpush1.msra.mxu0 0.0
    %1805 = vmatprep.mubr.f32.mxu0 0.0
    %1806 = vmatmul.mubr.f32.gmra.mrb[0].mxu0 %v1739
    %v1807 = vpop.f32.mrb[0].mxu0
    %v1808 = vadd.f32 0.0, %v1807
    %v1809 = vpop.f32.mrb[0].mxu0
    %1810 = vdwg.mxu0
    %1811 = vrot.lane.b32.xlu0 %v300, 40
    %v1812 = vpop.permute.xlu0 %1811
    %v1815 = vsel %vm310, %v1734, 0
    %1817 = vmatprep.subr.mxu0 0.0
    %1818 = vmatpush1.msra.mxu0 %v1812
    %1819 = vmatprep.subr.mxu0 0.0
    %1820 = vmatpush1.msra.mxu0 0.0
    %1821 = vmatprep.subr.mxu0 0.0
    %1822 = vmatpush1.msra.mxu0 0.0
    %1823 = vmatprep.subr.mxu0 0.0
    %1824 = vmatpush1.msra.mxu0 0.0
    %1825 = vmatprep.subr.mxu0 0.0
    %1826 = vmatpush1.msra.mxu0 0.0
    %1827 = vmatprep.subr.mxu0 0.0
    %1828 = vmatpush1.msra.mxu0 0.0
    %1829 = vmatprep.subr.mxu0 0.0
    %1830 = vmatpush1.msra.mxu0 0.0
    %1831 = vmatprep.subr.mxu0 0.0
    %1832 = vmatpush1.msra.mxu0 0.0
    %1833 = vmatprep.subr.mxu0 0.0
    %1834 = vmatpush1.msra.mxu0 0.0
    %1835 = vmatprep.subr.mxu0 0.0
    %1836 = vmatpush1.msra.mxu0 0.0
    %1837 = vmatprep.subr.mxu0 0.0
    %1838 = vmatpush1.msra.mxu0 0.0
    %1839 = vmatprep.subr.mxu0 0.0
    %1840 = vmatpush1.msra.mxu0 0.0
    %1841 = vmatprep.subr.mxu0 0.0
    %1842 = vmatpush1.msra.mxu0 0.0
    %1843 = vmatprep.subr.mxu0 0.0
    %1844 = vmatpush1.msra.mxu0 0.0
    %1845 = vmatprep.subr.mxu0 0.0
    %1846 = vmatpush1.msra.mxu0 0.0
    %1847 = vmatprep.subr.mxu0 0.0
    %1848 = vmatpush1.msra.mxu0 0.0
    %1849 = vmatprep.subr.mxu0 0.0
    %1850 = vmatpush1.msra.mxu0 0.0
    %1851 = vmatprep.subr.mxu0 0.0
    %1852 = vmatpush1.msra.mxu0 0.0
    %1853 = vmatprep.subr.mxu0 0.0
    %1854 = vmatpush1.msra.mxu0 0.0
    %1855 = vmatprep.subr.mxu0 0.0
    %1856 = vmatpush1.msra.mxu0 0.0
    %1857 = vmatprep.subr.mxu0 0.0
    %1858 = vmatpush1.msra.mxu0 0.0
    %1859 = vmatprep.subr.mxu0 0.0
    %1860 = vmatpush1.msra.mxu0 0.0
    %1861 = vmatprep.subr.mxu0 0.0
    %1862 = vmatpush1.msra.mxu0 0.0
    %1863 = vmatprep.subr.mxu0 0.0
    %1864 = vmatpush1.msra.mxu0 0.0
    %1865 = vmatprep.subr.mxu0 0.0
    %1866 = vmatpush1.msra.mxu0 0.0
    %1867 = vmatprep.subr.mxu0 0.0
    %1868 = vmatpush1.msra.mxu0 0.0
    %1869 = vmatprep.subr.mxu0 0.0
    %1870 = vmatpush1.msra.mxu0 0.0
    %1871 = vmatprep.subr.mxu0 0.0
    %1872 = vmatpush1.msra.mxu0 0.0
    %1873 = vmatprep.subr.mxu0 0.0
    %1874 = vmatpush1.msra.mxu0 0.0
    %1875 = vmatprep.subr.mxu0 0.0
    %1876 = vmatpush1.msra.mxu0 0.0
    %1877 = vmatprep.subr.mxu0 0.0
    %1878 = vmatpush1.msra.mxu0 0.0
    %1879 = vmatprep.subr.mxu0 0.0
    %1880 = vmatpush1.msra.mxu0 0.0
    %1881 = vmatprep.mubr.f32.mxu0 0.0
    %1882 = vmatmul.mubr.f32.gmra.mrb[0].mxu0 %v1815
    %v1883 = vpop.f32.mrb[0].mxu0
    %v1884 = vadd.f32 0.0, %v1883
    %v1885 = vpop.f32.mrb[0].mxu0
    %1886 = vdwg.mxu0
    %v1888 = vsel %vm310, %v1808, 0
    %v1891 = vsel %vm310, %v1884, 0
    %1893 = vmatprep.subr.mxu0 0.0
    %1894 = vmatpush1.msra.mxu0 %v306
    %1895 = vmatprep.subr.mxu0 0.0
    %1896 = vmatpush1.msra.mxu0 0.0
    %1897 = vmatprep.subr.mxu0 0.0
    %1898 = vmatpush1.msra.mxu0 0.0
    %1899 = vmatprep.subr.mxu0 0.0
    %1900 = vmatpush1.msra.mxu0 0.0
    %1901 = vmatprep.subr.mxu0 0.0
    %1902 = vmatpush1.msra.mxu0 0.0
    %1903 = vmatprep.subr.mxu0 0.0
    %1904 = vmatpush1.msra.mxu0 0.0
    %1905 = vmatprep.subr.mxu0 0.0
    %1906 = vmatpush1.msra.mxu0 0.0
    %1907 = vmatprep.subr.mxu0 0.0
    %1908 = vmatpush1.msra.mxu0 0.0
    %1909 = vmatprep.subr.mxu0 0.0
    %1910 = vmatpush1.msra.mxu0 0.0
    %1911 = vmatprep.subr.mxu0 0.0
    %1912 = vmatpush1.msra.mxu0 0.0
    %1913 = vmatprep.subr.mxu0 0.0
    %1914 = vmatpush1.msra.mxu0 0.0
    %1915 = vmatprep.subr.mxu0 0.0
    %1916 = vmatpush1.msra.mxu0 0.0
    %1917 = vmatprep.subr.mxu0 0.0
    %1918 = vmatpush1.msra.mxu0 0.0
    %1919 = vmatprep.subr.mxu0 0.0
    %1920 = vmatpush1.msra.mxu0 0.0
    %1921 = vmatprep.subr.mxu0 0.0
    %1922 = vmatpush1.msra.mxu0 0.0
    %1923 = vmatprep.subr.mxu0 0.0
    %1924 = vmatpush1.msra.mxu0 0.0
    %1925 = vmatprep.subr.mxu0 0.0
    %1926 = vmatpush1.msra.mxu0 0.0
    %1927 = vmatprep.subr.mxu0 0.0
    %1928 = vmatpush1.msra.mxu0 0.0
    %1929 = vmatprep.subr.mxu0 0.0
    %1930 = vmatpush1.msra.mxu0 0.0
    %1931 = vmatprep.subr.mxu0 0.0
    %1932 = vmatpush1.msra.mxu0 0.0
    %1933 = vmatprep.subr.mxu0 0.0
    %1934 = vmatpush1.msra.mxu0 0.0
    %1935 = vmatprep.subr.mxu0 0.0
    %1936 = vmatpush1.msra.mxu0 0.0
    %1937 = vmatprep.subr.mxu0 0.0
    %1938 = vmatpush1.msra.mxu0 0.0
    %1939 = vmatprep.subr.mxu0 0.0
    %1940 = vmatpush1.msra.mxu0 0.0
    %1941 = vmatprep.subr.mxu0 0.0
    %1942 = vmatpush1.msra.mxu0 0.0
    %1943 = vmatprep.subr.mxu0 0.0
    %1944 = vmatpush1.msra.mxu0 0.0
    %1945 = vmatprep.subr.mxu0 0.0
    %1946 = vmatpush1.msra.mxu0 0.0
    %1947 = vmatprep.subr.mxu0 0.0
    %1948 = vmatpush1.msra.mxu0 0.0
    %1949 = vmatprep.subr.mxu0 0.0
    %1950 = vmatpush1.msra.mxu0 0.0
    %1951 = vmatprep.subr.mxu0 0.0
    %1952 = vmatpush1.msra.mxu0 0.0
    %1953 = vmatprep.subr.mxu0 0.0
    %1954 = vmatpush1.msra.mxu0 0.0
    %1955 = vmatprep.subr.mxu0 0.0
    %1956 = vmatpush1.msra.mxu0 0.0
    %1957 = vmatprep.mubr.f32.mxu0 0.0
    %1958 = vmatmul.mubr.f32.gmra.mrb[0].mxu0 %v1888
    %v1959 = vpop.f32.mrb[0].mxu0
    %v1960 = vadd.f32 0.0, %v1959
    %v1961 = vpop.f32.mrb[0].mxu0
    %1962 = vmatprep.mubr.f32.mxu0 0.0
    %1963 = vmatmul.mubr.f32.gmra.mrb[0].mxu0 %v1891
    %v1964 = vpop.f32.mrb[0].mxu0
    %v1965 = vadd.f32 0.0, %v1964
    %v1966 = vpop.f32.mrb[0].mxu0
    %1967 = vdwg.mxu0
    %v1968 = vadd.f32 %v1551, %v1960
    %v1969 = vadd.f32 %v1552, %v1965
    %v1970 = vadd.f32 %v160, %v1968
    %v1971 = vadd.f32 %v165, %v1969
    %v1972 = vld [vmem:[%s7] sm:$0x1]
    %v1974 = vlaneseq
    %v1975 = vshrl.u32 %v1974, 7
    %v1976 = vsub.s32 0, %v1975
    %v1977 = vrot.slane %v1972, %v1976
    %v1979 = vadd.f32 %v1970, %v1977
    %v1980 = vadd.f32 %v1971, %v1977
    %v1981 = vld [vmem:[%s8] sm:$0x1]
    %v1982 = vld [vmem:[%s9] sm:$0x1]
    %v1983 = vsel %vm174, %v1979, 0.0
    %1984 = vadd.xlane.f32.xlu0 %v1983
    %v1985 = vpop.xlane.xlu0 %1984
    %v1986 = vsel %vm174, %v1980, 0.0
    %1987 = vadd.xlane.f32.xlu0 %v1986
    %v1988 = vpop.xlane.xlu0 %1987
    %v1989 = vmul.f32 %v1985, %v181
    %v1990 = vmul.f32 %v1988, %v181
    %v1991 = vsub.f32 %v1979, %v1989
    %v1992 = vsub.f32 %v1980, %v1990
    %v1993 = vmul.f32 %v1991, %v1991
    %v1994 = vmul.f32 %v1992, %v1992
    %v1995 = vsel %vm174, %v1993, 0.0
    %1996 = vadd.xlane.f32.xlu0 %v1995
    %v1997 = vpop.xlane.xlu0 %1996
    %v1998 = vsel %vm174, %v1994, 0.0
    %1999 = vadd.xlane.f32.xlu0 %v1998
    %v2000 = vpop.xlane.xlu0 %1999
    %v2001 = vmul.f32 %v1997, %v181
    %v2002 = vmul.f32 %v2000, %v181
    %v2003 = vadd.f32 %v2001, 1e-05
    %v2004 = vadd.f32 %v2002, 1e-05
    %v2005 = vrsqrt.pop %v2003
    %v2006 = vrsqrt.pop %v2004
    %v2007 = vmul.f32 %v1991, %v2005
    %v2008 = vmul.f32 %v1992, %v2006
    %v2010 = vlaneseq
    %v2011 = vshrl.u32 %v2010, 7
    %v2012 = vsub.s32 0, %v2011
    %v2013 = vrot.slane %v1981, %v2012
    %v2015 = vmul.f32 %v2007, %v2013
    %v2016 = vmul.f32 %v2008, %v2013
    %v2018 = vlaneseq
    %v2019 = vshrl.u32 %v2018, 7
    %v2020 = vsub.s32 0, %v2019
    %v2021 = vrot.slane %v1982, %v2020
    %v2023 = vadd.f32 %v2015, %v2021
    %v2024 = vadd.f32 %v2016, %v2021
    %v2025 = vld [vmem:[%s10] sm:$0xff]
    %v2026 = vld [vmem:[%s10 + $0x8] sm:$0xff]
    %v2027 = vld [vmem:[%s10 + $0x10] sm:$0xff]
    %v2028 = vld [vmem:[%s10 + $0x18] sm:$0xff]
    %v2029 = vld [vmem:[%s11] sm:$0x1]
    %v2031 = vlaneseq
    %v2032 = vshrl.u32 %v2031, 7
    %v2033 = vsub.s32 0, %v2032
    %v2034 = vrot.slane %v2029, %v2033
    %v2037 = vsel %vm174, %v2023, 0
    %v2040 = vsel %vm174, %v2024, 0
    %2042 = vmatprep.subr.mxu0 0.0
    %2043 = vmatpush1.msra.mxu0 %v2025
    %2044 = vmatprep.subr.mxu0 0.0
    %2045 = vmatpush1.msra.mxu0 %v2026
    %2046 = vmatprep.subr.mxu0 0.0
    %2047 = vmatpush1.msra.mxu0 %v2027
    %2048 = vmatprep.subr.mxu0 0.0
    %2049 = vmatpush1.msra.mxu0 %v2028
    %2050 = vmatprep.subr.mxu0 0.0
    %2051 = vmatpush1.msra.mxu0 0.0
    %2052 = vmatprep.subr.mxu0 0.0
    %2053 = vmatpush1.msra.mxu0 0.0
    %2054 = vmatprep.subr.mxu0 0.0
    %2055 = vmatpush1.msra.mxu0 0.0
    %2056 = vmatprep.subr.mxu0 0.0
    %2057 = vmatpush1.msra.mxu0 0.0
    %2058 = vmatprep.subr.mxu0 0.0
    %2059 = vmatpush1.msra.mxu0 0.0
    %2060 = vmatprep.subr.mxu0 0.0
    %2061 = vmatpush1.msra.mxu0 0.0
    %2062 = vmatprep.subr.mxu0 0.0
    %2063 = vmatpush1.msra.mxu0 0.0
    %2064 = vmatprep.subr.mxu0 0.0
    %2065 = vmatpush1.msra.mxu0 0.0
    %2066 = vmatprep.subr.mxu0 0.0
    %2067 = vmatpush1.msra.mxu0 0.0
    %2068 = vmatprep.subr.mxu0 0.0
    %2069 = vmatpush1.msra.mxu0 0.0
    %2070 = vmatprep.subr.mxu0 0.0
    %2071 = vmatpush1.msra.mxu0 0.0
    %2072 = vmatprep.subr.mxu0 0.0
    %2073 = vmatpush1.msra.mxu0 0.0
    %2074 = vmatprep.subr.mxu0 0.0
    %2075 = vmatpush1.msra.mxu0 0.0
    %2076 = vmatprep.subr.mxu0 0.0
    %2077 = vmatpush1.msra.mxu0 0.0
    %2078 = vmatprep.subr.mxu0 0.0
    %2079 = vmatpush1.msra.mxu0 0.0
    %2080 = vmatprep.subr.mxu0 0.0
    %2081 = vmatpush1.msra.mxu0 0.0
    %2082 = vmatprep.subr.mxu0 0.0
    %2083 = vmatpush1.msra.mxu0 0.0
    %2084 = vmatprep.subr.mxu0 0.0
    %2085 = vmatpush1.msra.mxu0 0.0
    %2086 = vmatprep.subr.mxu0 0.0
    %2087 = vmatpush1.msra.mxu0 0.0
    %2088 = vmatprep.subr.mxu0 0.0
    %2089 = vmatpush1.msra.mxu0 0.0
    %2090 = vmatprep.subr.mxu0 0.0
    %2091 = vmatpush1.msra.mxu0 0.0
    %2092 = vmatprep.subr.mxu0 0.0
    %2093 = vmatpush1.msra.mxu0 0.0
    %2094 = vmatprep.subr.mxu0 0.0
    %2095 = vmatpush1.msra.mxu0 0.0
    %2096 = vmatprep.subr.mxu0 0.0
    %2097 = vmatpush1.msra.mxu0 0.0
    %2098 = vmatprep.subr.mxu0 0.0
    %2099 = vmatpush1.msra.mxu0 0.0
    %2100 = vmatprep.subr.mxu0 0.0
    %2101 = vmatpush1.msra.mxu0 0.0
    %2102 = vmatprep.subr.mxu0 0.0
    %2103 = vmatpush1.msra.mxu0 0.0
    %2104 = vmatprep.subr.mxu0 0.0
    %2105 = vmatpush1.msra.mxu0 0.0
    %2106 = vmatprep.mubr.f32.mxu0 0.0
    %2107 = vmatmul.mubr.f32.gmra.mrb[0].mxu0 %v2037
    %v2108 = vpop.f32.mrb[0].mxu0
    %v2109 = vadd.f32 %v2034, %v2108
    %v2110 = vpop.f32.mrb[0].mxu0
    %2111 = vmatprep.mubr.f32.mxu0 0.0
    %2112 = vmatmul.mubr.f32.gmra.mrb[0].mxu0 %v2040
    %v2113 = vpop.f32.mrb[0].mxu0
    %v2114 = vadd.f32 %v2034, %v2113
    %v2115 = vpop.f32.mrb[0].mxu0
    %2116 = vdwg.mxu0
    %v2117 = vmax.f32 %v2109, 0.0
    %v2118 = vmax.f32 %v2114, 0.0
    %v2119 = vld [vmem:[%s12] sm:$0xff]
    %v2120 = vld [vmem:[%s12 + $0x8] sm:$0xff]
    %v2121 = vld [vmem:[%s12 + $0x10] sm:$0xff]
    %v2122 = vld [vmem:[%s12 + $0x18] sm:$0xff]
    %v2123 = vld [vmem:[%s12 + $0x20] sm:$0xff]
    %v2124 = vld [vmem:[%s12 + $0x28] sm:$0xff]
    %v2125 = vld [vmem:[%s12 + $0x30] sm:$0xff]
    %v2126 = vld [vmem:[%s12 + $0x38] sm:$0xff]
    %v2127 = vld [vmem:[%s12 + $0x40] sm:$0xff]
    %v2128 = vld [vmem:[%s12 + $0x48] sm:$0xff]
    %v2129 = vld [vmem:[%s12 + $0x50] sm:$0xff]
    %v2130 = vld [vmem:[%s12 + $0x58] sm:$0xff]
    %v2131 = vld [vmem:[%s12 + $0x60] sm:$0xff]
    %v2132 = vld [vmem:[%s12 + $0x68] sm:$0xff]
    %v2133 = vld [vmem:[%s12 + $0x70] sm:$0xff]
    %v2134 = vld [vmem:[%s12 + $0x78] sm:$0xff]
    %2135 = vmatprep.subr.mxu0 0.0
    %2136 = vmatpush1.msra.mxu0 %v2119
    %2137 = vmatprep.subr.mxu0 0.0
    %2138 = vmatpush1.msra.mxu0 %v2120
    %2139 = vmatprep.subr.mxu0 0.0
    %2140 = vmatpush1.msra.mxu0 %v2121
    %2141 = vmatprep.subr.mxu0 0.0
    %2142 = vmatpush1.msra.mxu0 %v2122
    %2143 = vmatprep.subr.mxu0 0.0
    %2144 = vmatpush1.msra.mxu0 %v2123
    %2145 = vmatprep.subr.mxu0 0.0
    %2146 = vmatpush1.msra.mxu0 %v2124
    %2147 = vmatprep.subr.mxu0 0.0
    %2148 = vmatpush1.msra.mxu0 %v2125
    %2149 = vmatprep.subr.mxu0 0.0
    %2150 = vmatpush1.msra.mxu0 %v2126
    %2151 = vmatprep.subr.mxu0 0.0
    %2152 = vmatpush1.msra.mxu0 %v2127
    %2153 = vmatprep.subr.mxu0 0.0
    %2154 = vmatpush1.msra.mxu0 %v2128
    %2155 = vmatprep.subr.mxu0 0.0
    %2156 = vmatpush1.msra.mxu0 %v2129
    %2157 = vmatprep.subr.mxu0 0.0
    %2158 = vmatpush1.msra.mxu0 %v2130
    %2159 = vmatprep.subr.mxu0 0.0
    %2160 = vmatpush1.msra.mxu0 %v2131
    %2161 = vmatprep.subr.mxu0 0.0
    %2162 = vmatpush1.msra.mxu0 %v2132
    %2163 = vmatprep.subr.mxu0 0.0
    %2164 = vmatpush1.msra.mxu0 %v2133
    %2165 = vmatprep.subr.mxu0 0.0
    %2166 = vmatpush1.msra.mxu0 %v2134
    %2167 = vmatprep.subr.mxu0 0.0
    %2168 = vmatpush1.msra.mxu0 0.0
    %2169 = vmatprep.subr.mxu0 0.0
    %2170 = vmatpush1.msra.mxu0 0.0
    %2171 = vmatprep.subr.mxu0 0.0
    %2172 = vmatpush1.msra.mxu0 0.0
    %2173 = vmatprep.subr.mxu0 0.0
    %2174 = vmatpush1.msra.mxu0 0.0
    %2175 = vmatprep.subr.mxu0 0.0
    %2176 = vmatpush1.msra.mxu0 0.0
    %2177 = vmatprep.subr.mxu0 0.0
    %2178 = vmatpush1.msra.mxu0 0.0
    %2179 = vmatprep.subr.mxu0 0.0
    %2180 = vmatpush1.msra.mxu0 0.0
    %2181 = vmatprep.subr.mxu0 0.0
    %2182 = vmatpush1.msra.mxu0 0.0
    %2183 = vmatprep.subr.mxu0 0.0
    %2184 = vmatpush1.msra.mxu0 0.0
    %2185 = vmatprep.subr.mxu0 0.0
    %2186 = vmatpush1.msra.mxu0 0.0
    %2187 = vmatprep.subr.mxu0 0.0
    %2188 = vmatpush1.msra.mxu0 0.0
    %2189 = vmatprep.subr.mxu0 0.0
    %2190 = vmatpush1.msra.mxu0 0.0
    %2191 = vmatprep.subr.mxu0 0.0
    %2192 = vmatpush1.msra.mxu0 0.0
    %2193 = vmatprep.subr.mxu0 0.0
    %2194 = vmatpush1.msra.mxu0 0.0
    %2195 = vmatprep.subr.mxu0 0.0
    %2196 = vmatpush1.msra.mxu0 0.0
    %2197 = vmatprep.subr.mxu0 0.0
    %2198 = vmatpush1.msra.mxu0 0.0
    %2199 = vmatprep.mubr.f32.mxu0 0.0
    %2200 = vmatmul.mubr.f32.gmra.mrb[0].mxu0 %v2117
    %v2201 = vpop.f32.mrb[0].mxu0
    %v2202 = vadd.f32 0.0, %v2201
    %v2203 = vpop.f32.mrb[0].mxu0
    %2204 = vmatprep.mubr.f32.mxu0 0.0
    %2205 = vmatmul.mubr.f32.gmra.mrb[0].mxu0 %v2118
    %v2206 = vpop.f32.mrb[0].mxu0
    %v2207 = vadd.f32 0.0, %v2206
    %v2208 = vpop.f32.mrb[0].mxu0
    %2209 = vdwg.mxu0
    %v2210 = vadd.f32 %v1979, %v2202
    %v2211 = vadd.f32 %v1980, %v2207
    %v2212 = vld [vmem:[%s13] sm:$0x1]
    %v2214 = vlaneseq
    %v2215 = vshrl.u32 %v2214, 7
    %v2216 = vsub.s32 0, %v2215
    %v2217 = vrot.slane %v2212, %v2216
    %v2219 = vadd.f32 %v2210, %v2217
    %v2220 = vadd.f32 %v2211, %v2217
    %s2221 = scalar_lea.vmem %s3, 1
    %v2222 = vld [vmem:[%s2221] sm:$0x1]
    %s2223 = scalar_lea.vmem %s4, 1
    %v2224 = vld [vmem:[%s2223] sm:$0x1]
    %v2225 = vsel %vm174, %v2219, 0.0
    %2226 = vadd.xlane.f32.xlu0 %v2225
    %v2227 = vpop.xlane.xlu0 %2226
    %v2228 = vsel %vm174, %v2220, 0.0
    %2229 = vadd.xlane.f32.xlu0 %v2228
    %v2230 = vpop.xlane.xlu0 %2229
    %v2231 = vmul.f32 %v2227, %v181
    %v2232 = vmul.f32 %v2230, %v181
    %v2233 = vsub.f32 %v2219, %v2231
    %v2234 = vsub.f32 %v2220, %v2232
    %v2235 = vmul.f32 %v2233, %v2233
    %v2236 = vmul.f32 %v2234, %v2234
    %v2237 = vsel %vm174, %v2235, 0.0
    %2238 = vadd.xlane.f32.xlu0 %v2237
    %v2239 = vpop.xlane.xlu0 %2238
    %v2240 = vsel %vm174, %v2236, 0.0
    %2241 = vadd.xlane.f32.xlu0 %v2240
    %v2242 = vpop.xlane.xlu0 %2241
    %v2243 = vmul.f32 %v2239, %v181
    %v2244 = vmul.f32 %v2242, %v181
    %v2245 = vadd.f32 %v2243, 1e-05
    %v2246 = vadd.f32 %v2244, 1e-05
    %v2247 = vrsqrt.pop %v2245
    %v2248 = vrsqrt.pop %v2246
    %v2249 = vmul.f32 %v2233, %v2247
    %v2250 = vmul.f32 %v2234, %v2248
    %v2252 = vlaneseq
    %v2253 = vshrl.u32 %v2252, 7
    %v2254 = vsub.s32 0, %v2253
    %v2255 = vrot.slane %v2222, %v2254
    %v2257 = vmul.f32 %v2249, %v2255
    %v2258 = vmul.f32 %v2250, %v2255
    %v2260 = vlaneseq
    %v2261 = vshrl.u32 %v2260, 7
    %v2262 = vsub.s32 0, %v2261
    %v2263 = vrot.slane %v2224, %v2262
    %v2265 = vadd.f32 %v2257, %v2263
    %v2266 = vadd.f32 %v2258, %v2263
    %s2267 = scalar_lea.vmem %s5, 32
    %v2268 = vld [vmem:[%s2267] sm:$0xff]
    %v2269 = vld [vmem:[%s2267 + $0x8] sm:$0xff]
    %v2270 = vld [vmem:[%s2267 + $0x10] sm:$0xff]
    %v2271 = vld [vmem:[%s2267 + $0x18] sm:$0xff]
    %v2273 = vsel %vm174, %v2265, 0
    %v2276 = vsel %vm174, %v2266, 0
    %2278 = vmatprep.subr.mxu0 0.0
    %2279 = vmatpush1.msra.mxu0 %v2268
    %2280 = vmatprep.subr.mxu0 0.0
    %2281 = vmatpush1.msra.mxu0 %v2269
    %2282 = vmatprep.subr.mxu0 0.0
    %2283 = vmatpush1.msra.mxu0 %v2270
    %2284 = vmatprep.subr.mxu0 0.0
    %2285 = vmatpush1.msra.mxu0 %v2271
    %2286 = vmatprep.subr.mxu0 0.0
    %2287 = vmatpush1.msra.mxu0 0.0
    %2288 = vmatprep.subr.mxu0 0.0
    %2289 = vmatpush1.msra.mxu0 0.0
    %2290 = vmatprep.subr.mxu0 0.0
    %2291 = vmatpush1.msra.mxu0 0.0
    %2292 = vmatprep.subr.mxu0 0.0
    %2293 = vmatpush1.msra.mxu0 0.0
    %2294 = vmatprep.subr.mxu0 0.0
    %2295 = vmatpush1.msra.mxu0 0.0
    %2296 = vmatprep.subr.mxu0 0.0
    %2297 = vmatpush1.msra.mxu0 0.0
    %2298 = vmatprep.subr.mxu0 0.0
    %2299 = vmatpush1.msra.mxu0 0.0
    %2300 = vmatprep.subr.mxu0 0.0
    %2301 = vmatpush1.msra.mxu0 0.0
    %2302 = vmatprep.subr.mxu0 0.0
    %2303 = vmatpush1.msra.mxu0 0.0
    %2304 = vmatprep.subr.mxu0 0.0
    %2305 = vmatpush1.msra.mxu0 0.0
    %2306 = vmatprep.subr.mxu0 0.0
    %2307 = vmatpush1.msra.mxu0 0.0
    %2308 = vmatprep.subr.mxu0 0.0
    %2309 = vmatpush1.msra.mxu0 0.0
    %2310 = vmatprep.subr.mxu0 0.0
    %2311 = vmatpush1.msra.mxu0 0.0
    %2312 = vmatprep.subr.mxu0 0.0
    %2313 = vmatpush1.msra.mxu0 0.0
    %2314 = vmatprep.subr.mxu0 0.0
    %2315 = vmatpush1.msra.mxu0 0.0
    %2316 = vmatprep.subr.mxu0 0.0
    %2317 = vmatpush1.msra.mxu0 0.0
    %2318 = vmatprep.subr.mxu0 0.0
    %2319 = vmatpush1.msra.mxu0 0.0
    %2320 = vmatprep.subr.mxu0 0.0
    %2321 = vmatpush1.msra.mxu0 0.0
    %2322 = vmatprep.subr.mxu0 0.0
    %2323 = vmatpush1.msra.mxu0 0.0
    %2324 = vmatprep.subr.mxu0 0.0
    %2325 = vmatpush1.msra.mxu0 0.0
    %2326 = vmatprep.subr.mxu0 0.0
    %2327 = vmatpush1.msra.mxu0 0.0
    %2328 = vmatprep.subr.mxu0 0.0
    %2329 = vmatpush1.msra.mxu0 0.0
    %2330 = vmatprep.subr.mxu0 0.0
    %2331 = vmatpush1.msra.mxu0 0.0
    %2332 = vmatprep.subr.mxu0 0.0
    %2333 = vmatpush1.msra.mxu0 0.0
    %2334 = vmatprep.subr.mxu0 0.0
    %2335 = vmatpush1.msra.mxu0 0.0
    %2336 = vmatprep.subr.mxu0 0.0
    %2337 = vmatpush1.msra.mxu0 0.0
    %2338 = vmatprep.subr.mxu0 0.0
    %2339 = vmatpush1.msra.mxu0 0.0
    %2340 = vmatprep.subr.mxu0 0.0
    %2341 = vmatpush1.msra.mxu0 0.0
    %2342 = vmatprep.mubr.f32.mxu0 0.0
    %2343 = vmatmul.mubr.f32.gmra.mrb[0].mxu0 %v2273
    %v2344 = vpop.f32.mrb[0].mxu0
    %v2345 = vadd.f32 0.0, %v2344
    %v2346 = vpop.f32.mrb[0].mxu0
    %2347 = vmatprep.mubr.f32.mxu0 0.0
    %2348 = vmatmul.mubr.f32.gmra.mrb[0].mxu0 %v2276
    %v2349 = vpop.f32.mrb[0].mxu0
    %v2350 = vadd.f32 0.0, %v2349
    %v2351 = vpop.f32.mrb[0].mxu0
    %2352 = vdwg.mxu0
    %s2353 = scalar_lea.vmem %s6, 32
    %v2354 = vld [vmem:[%s2353] sm:$0xff]
    %v2355 = vld [vmem:[%s2353 + $0x8] sm:$0xff]
    %v2356 = vld [vmem:[%s2353 + $0x10] sm:$0xff]
    %v2357 = vld [vmem:[%s2353 + $0x18] sm:$0xff]
    %2359 = vrot.lane.b32.xlu0 %v2345, 96
    %v2360 = vpop.permute.xlu0 %2359
    %v2361 = vsel %vm310, %v2345, 0
    %v2363 = vsel %vm310, %v2360, 0
    %2365 = vmatprep.subr.mxu0 0.0
    %2366 = vmatpush1.xpose.msra.mxu0 %v2363
    %2367 = vmatprep.subr.mxu0 0.0
    %2368 = vmatpush1.xpose.msra.mxu0 0.0
    %2369 = vmatprep.subr.mxu0 0.0
    %2370 = vmatpush1.xpose.msra.mxu0 0.0
    %2371 = vmatprep.subr.mxu0 0.0
    %2372 = vmatpush1.xpose.msra.mxu0 0.0
    %2373 = vmatprep.subr.mxu0 0.0
    %2374 = vmatpush1.xpose.msra.mxu0 0.0
    %2375 = vmatprep.subr.mxu0 0.0
    %2376 = vmatpush1.xpose.msra.mxu0 0.0
    %2377 = vmatprep.subr.mxu0 0.0
    %2378 = vmatpush1.xpose.msra.mxu0 0.0
    %2379 = vmatprep.subr.mxu0 0.0
    %2380 = vmatpush1.xpose.msra.mxu0 0.0
    %2381 = vmatprep.subr.mxu0 0.0
    %2382 = vmatpush1.xpose.msra.mxu0 0.0
    %2383 = vmatprep.subr.mxu0 0.0
    %2384 = vmatpush1.xpose.msra.mxu0 0.0
    %2385 = vmatprep.subr.mxu0 0.0
    %2386 = vmatpush1.xpose.msra.mxu0 0.0
    %2387 = vmatprep.subr.mxu0 0.0
    %2388 = vmatpush1.xpose.msra.mxu0 0.0
    %2389 = vmatprep.subr.mxu0 0.0
    %2390 = vmatpush1.xpose.msra.mxu0 0.0
    %2391 = vmatprep.subr.mxu0 0.0
    %2392 = vmatpush1.xpose.msra.mxu0 0.0
    %2393 = vmatprep.subr.mxu0 0.0
    %2394 = vmatpush1.xpose.msra.mxu0 0.0
    %2395 = vmatprep.subr.mxu0 0.0
    %2396 = vmatpush1.xpose.msra.mxu0 0.0
    %2397 = vmatprep.subr.mxu0 0.0
    %2398 = vmatpush1.xpose.msra.mxu0 0.0
    %2399 = vmatprep.subr.mxu0 0.0
    %2400 = vmatpush1.xpose.msra.mxu0 0.0
    %2401 = vmatprep.subr.mxu0 0.0
    %2402 = vmatpush1.xpose.msra.mxu0 0.0
    %2403 = vmatprep.subr.mxu0 0.0
    %2404 = vmatpush1.xpose.msra.mxu0 0.0
    %2405 = vmatprep.subr.mxu0 0.0
    %2406 = vmatpush1.xpose.msra.mxu0 0.0
    %2407 = vmatprep.subr.mxu0 0.0
    %2408 = vmatpush1.xpose.msra.mxu0 0.0
    %2409 = vmatprep.subr.mxu0 0.0
    %2410 = vmatpush1.xpose.msra.mxu0 0.0
    %2411 = vmatprep.subr.mxu0 0.0
    %2412 = vmatpush1.xpose.msra.mxu0 0.0
    %2413 = vmatprep.subr.mxu0 0.0
    %2414 = vmatpush1.xpose.msra.mxu0 0.0
    %2415 = vmatprep.subr.mxu0 0.0
    %2416 = vmatpush1.xpose.msra.mxu0 0.0
    %2417 = vmatprep.subr.mxu0 0.0
    %2418 = vmatpush1.xpose.msra.mxu0 0.0
    %2419 = vmatprep.subr.mxu0 0.0
    %2420 = vmatpush1.xpose.msra.mxu0 0.0
    %2421 = vmatprep.subr.mxu0 0.0
    %2422 = vmatpush1.xpose.msra.mxu0 0.0
    %2423 = vmatprep.subr.mxu0 0.0
    %2424 = vmatpush1.xpose.msra.mxu0 0.0
    %2425 = vmatprep.subr.mxu0 0.0
    %2426 = vmatpush1.xpose.msra.mxu0 0.0
    %2427 = vmatprep.subr.mxu0 0.0
    %2428 = vmatpush1.xpose.msra.mxu0 0.0
    %2429 = vmatprep.mubr.f32.mxu0 0.0
    %2430 = vmatmul.mubr.f32.gmra.mrb[0].mxu0 %v2361
    %v2431 = vpop.f32.mrb[0].mxu0
    %v2432 = vadd.f32 0.0, %v2431
    %v2433 = vpop.f32.mrb[0].mxu0
    %2434 = vdwg.mxu0
    %2436 = vrot.lane.b32.xlu0 %v2350, 96
    %v2437 = vpop.permute.xlu0 %2436
    %v2438 = vsel %vm310, %v2350, 0
    %v2440 = vsel %vm310, %v2437, 0
    %2442 = vmatprep.subr.mxu0 0.0
    %2443 = vmatpush1.xpose.msra.mxu0 %v2440
    %2444 = vmatprep.subr.mxu0 0.0
    %2445 = vmatpush1.xpose.msra.mxu0 0.0
    %2446 = vmatprep.subr.mxu0 0.0
    %2447 = vmatpush1.xpose.msra.mxu0 0.0
    %2448 = vmatprep.subr.mxu0 0.0
    %2449 = vmatpush1.xpose.msra.mxu0 0.0
    %2450 = vmatprep.subr.mxu0 0.0
    %2451 = vmatpush1.xpose.msra.mxu0 0.0
    %2452 = vmatprep.subr.mxu0 0.0
    %2453 = vmatpush1.xpose.msra.mxu0 0.0
    %2454 = vmatprep.subr.mxu0 0.0
    %2455 = vmatpush1.xpose.msra.mxu0 0.0
    %2456 = vmatprep.subr.mxu0 0.0
    %2457 = vmatpush1.xpose.msra.mxu0 0.0
    %2458 = vmatprep.subr.mxu0 0.0
    %2459 = vmatpush1.xpose.msra.mxu0 0.0
    %2460 = vmatprep.subr.mxu0 0.0
    %2461 = vmatpush1.xpose.msra.mxu0 0.0
    %2462 = vmatprep.subr.mxu0 0.0
    %2463 = vmatpush1.xpose.msra.mxu0 0.0
    %2464 = vmatprep.subr.mxu0 0.0
    %2465 = vmatpush1.xpose.msra.mxu0 0.0
    %2466 = vmatprep.subr.mxu0 0.0
    %2467 = vmatpush1.xpose.msra.mxu0 0.0
    %2468 = vmatprep.subr.mxu0 0.0
    %2469 = vmatpush1.xpose.msra.mxu0 0.0
    %2470 = vmatprep.subr.mxu0 0.0
    %2471 = vmatpush1.xpose.msra.mxu0 0.0
    %2472 = vmatprep.subr.mxu0 0.0
    %2473 = vmatpush1.xpose.msra.mxu0 0.0
    %2474 = vmatprep.subr.mxu0 0.0
    %2475 = vmatpush1.xpose.msra.mxu0 0.0
    %2476 = vmatprep.subr.mxu0 0.0
    %2477 = vmatpush1.xpose.msra.mxu0 0.0
    %2478 = vmatprep.subr.mxu0 0.0
    %2479 = vmatpush1.xpose.msra.mxu0 0.0
    %2480 = vmatprep.subr.mxu0 0.0
    %2481 = vmatpush1.xpose.msra.mxu0 0.0
    %2482 = vmatprep.subr.mxu0 0.0
    %2483 = vmatpush1.xpose.msra.mxu0 0.0
    %2484 = vmatprep.subr.mxu0 0.0
    %2485 = vmatpush1.xpose.msra.mxu0 0.0
    %2486 = vmatprep.subr.mxu0 0.0
    %2487 = vmatpush1.xpose.msra.mxu0 0.0
    %2488 = vmatprep.subr.mxu0 0.0
    %2489 = vmatpush1.xpose.msra.mxu0 0.0
    %2490 = vmatprep.subr.mxu0 0.0
    %2491 = vmatpush1.xpose.msra.mxu0 0.0
    %2492 = vmatprep.subr.mxu0 0.0
    %2493 = vmatpush1.xpose.msra.mxu0 0.0
    %2494 = vmatprep.subr.mxu0 0.0
    %2495 = vmatpush1.xpose.msra.mxu0 0.0
    %2496 = vmatprep.subr.mxu0 0.0
    %2497 = vmatpush1.xpose.msra.mxu0 0.0
    %2498 = vmatprep.subr.mxu0 0.0
    %2499 = vmatpush1.xpose.msra.mxu0 0.0
    %2500 = vmatprep.subr.mxu0 0.0
    %2501 = vmatpush1.xpose.msra.mxu0 0.0
    %2502 = vmatprep.subr.mxu0 0.0
    %2503 = vmatpush1.xpose.msra.mxu0 0.0
    %2504 = vmatprep.subr.mxu0 0.0
    %2505 = vmatpush1.xpose.msra.mxu0 0.0
    %2506 = vmatprep.mubr.f32.mxu0 0.0
    %2507 = vmatmul.mubr.f32.gmra.mrb[0].mxu0 %v2438
    %v2508 = vpop.f32.mrb[0].mxu0
    %v2509 = vadd.f32 0.0, %v2508
    %v2510 = vpop.f32.mrb[0].mxu0
    %2511 = vdwg.mxu0
    %v2512 = vmul.f32 %v2432, 0.17677669
    %v2513 = vmul.f32 %v2509, 0.17677669
    %v2514 = vadd.f32 %v2512, %v171
    %v2515 = vadd.f32 %v2513, %v171
    %v2516 = vsel %vm310, %v2514, -inf
    %2517 = vmax.xlane.f32.xlu0 %v2516
    %v2518 = vpop.xlane.xlu0 %2517
    %v2519 = vsel %vm310, %v2515, -inf
    %2520 = vmax.xlane.f32.xlu0 %v2519
    %v2521 = vpop.xlane.xlu0 %2520
    %v2522 = vsub.f32 %v2514, %v2518
    %v2523 = vsub.f32 %v2515, %v2521
    %v2524 = vmul.f32 %v2522, 1.442695
    %v2525 = vpow.pop %v2524
    %v2526 = vmul.f32 %v2523, 1.442695
    %v2527 = vpow.pop %v2526
    %v2528 = vsel %vm310, %v2525, 0.0
    %2529 = vadd.xlane.f32.xlu0 %v2528
    %v2530 = vpop.xlane.xlu0 %2529
    %v2531 = vsel %vm310, %v2527, 0.0
    %2532 = vadd.xlane.f32.xlu0 %v2531
    %v2533 = vpop.xlane.xlu0 %2532
    %v2534 = vrcp.pop %v2530
    %v2535 = vrcp.pop %v2533
    %v2536 = vmul.f32 %v2525, %v2534
    %v2537 = vmul.f32 %v2527, %v2535
    %2538 = vrot.lane.b32.xlu0 %v2345, 64
    %v2539 = vpop.permute.xlu0 %2538
    %v2542 = vsel %vm310, %v2536, 0
    %2544 = vmatprep.subr.mxu0 0.0
    %2545 = vmatpush1.msra.mxu0 %v2539
    %2546 = vmatprep.subr.mxu0 0.0
    %2547 = vmatpush1.msra.mxu0 0.0
    %2548 = vmatprep.subr.mxu0 0.0
    %2549 = vmatpush1.msra.mxu0 0.0
    %2550 = vmatprep.subr.mxu0 0.0
    %2551 = vmatpush1.msra.mxu0 0.0
    %2552 = vmatprep.subr.mxu0 0.0
    %2553 = vmatpush1.msra.mxu0 0.0
    %2554 = vmatprep.subr.mxu0 0.0
    %2555 = vmatpush1.msra.mxu0 0.0
    %2556 = vmatprep.subr.mxu0 0.0
    %2557 = vmatpush1.msra.mxu0 0.0
    %2558 = vmatprep.subr.mxu0 0.0
    %2559 = vmatpush1.msra.mxu0 0.0
    %2560 = vmatprep.subr.mxu0 0.0
    %2561 = vmatpush1.msra.mxu0 0.0
    %2562 = vmatprep.subr.mxu0 0.0
    %2563 = vmatpush1.msra.mxu0 0.0
    %2564 = vmatprep.subr.mxu0 0.0
    %2565 = vmatpush1.msra.mxu0 0.0
    %2566 = vmatprep.subr.mxu0 0.0
    %2567 = vmatpush1.msra.mxu0 0.0
    %2568 = vmatprep.subr.mxu0 0.0
    %2569 = vmatpush1.msra.mxu0 0.0
    %2570 = vmatprep.subr.mxu0 0.0
    %2571 = vmatpush1.msra.mxu0 0.0
    %2572 = vmatprep.subr.mxu0 0.0
    %2573 = vmatpush1.msra.mxu0 0.0
    %2574 = vmatprep.subr.mxu0 0.0
    %2575 = vmatpush1.msra.mxu0 0.0
    %2576 = vmatprep.subr.mxu0 0.0
    %2577 = vmatpush1.msra.mxu0 0.0
    %2578 = vmatprep.subr.mxu0 0.0
    %2579 = vmatpush1.msra.mxu0 0.0
    %2580 = vmatprep.subr.mxu0 0.0
    %2581 = vmatpush1.msra.mxu0 0.0
    %2582 = vmatprep.subr.mxu0 0.0
    %2583 = vmatpush1.msra.mxu0 0.0
    %2584 = vmatprep.subr.mxu0 0.0
    %2585 = vmatpush1.msra.mxu0 0.0
    %2586 = vmatprep.subr.mxu0 0.0
    %2587 = vmatpush1.msra.mxu0 0.0
    %2588 = vmatprep.subr.mxu0 0.0
    %2589 = vmatpush1.msra.mxu0 0.0
    %2590 = vmatprep.subr.mxu0 0.0
    %2591 = vmatpush1.msra.mxu0 0.0
    %2592 = vmatprep.subr.mxu0 0.0
    %2593 = vmatpush1.msra.mxu0 0.0
    %2594 = vmatprep.subr.mxu0 0.0
    %2595 = vmatpush1.msra.mxu0 0.0
    %2596 = vmatprep.subr.mxu0 0.0
    %2597 = vmatpush1.msra.mxu0 0.0
    %2598 = vmatprep.subr.mxu0 0.0
    %2599 = vmatpush1.msra.mxu0 0.0
    %2600 = vmatprep.subr.mxu0 0.0
    %2601 = vmatpush1.msra.mxu0 0.0
    %2602 = vmatprep.subr.mxu0 0.0
    %2603 = vmatpush1.msra.mxu0 0.0
    %2604 = vmatprep.subr.mxu0 0.0
    %2605 = vmatpush1.msra.mxu0 0.0
    %2606 = vmatprep.subr.mxu0 0.0
    %2607 = vmatpush1.msra.mxu0 0.0
    %2608 = vmatprep.mubr.f32.mxu0 0.0
    %2609 = vmatmul.mubr.f32.gmra.mrb[0].mxu0 %v2542
    %v2610 = vpop.f32.mrb[0].mxu0
    %v2611 = vadd.f32 0.0, %v2610
    %v2612 = vpop.f32.mrb[0].mxu0
    %2613 = vdwg.mxu0
    %2614 = vrot.lane.b32.xlu0 %v2350, 64
    %v2615 = vpop.permute.xlu0 %2614
    %v2618 = vsel %vm310, %v2537, 0
    %2620 = vmatprep.subr.mxu0 0.0
    %2621 = vmatpush1.msra.mxu0 %v2615
    %2622 = vmatprep.subr.mxu0 0.0
    %2623 = vmatpush1.msra.mxu0 0.0
    %2624 = vmatprep.subr.mxu0 0.0
    %2625 = vmatpush1.msra.mxu0 0.0
    %2626 = vmatprep.subr.mxu0 0.0
    %2627 = vmatpush1.msra.mxu0 0.0
    %2628 = vmatprep.subr.mxu0 0.0
    %2629 = vmatpush1.msra.mxu0 0.0
    %2630 = vmatprep.subr.mxu0 0.0
    %2631 = vmatpush1.msra.mxu0 0.0
    %2632 = vmatprep.subr.mxu0 0.0
    %2633 = vmatpush1.msra.mxu0 0.0
    %2634 = vmatprep.subr.mxu0 0.0
    %2635 = vmatpush1.msra.mxu0 0.0
    %2636 = vmatprep.subr.mxu0 0.0
    %2637 = vmatpush1.msra.mxu0 0.0
    %2638 = vmatprep.subr.mxu0 0.0
    %2639 = vmatpush1.msra.mxu0 0.0
    %2640 = vmatprep.subr.mxu0 0.0
    %2641 = vmatpush1.msra.mxu0 0.0
    %2642 = vmatprep.subr.mxu0 0.0
    %2643 = vmatpush1.msra.mxu0 0.0
    %2644 = vmatprep.subr.mxu0 0.0
    %2645 = vmatpush1.msra.mxu0 0.0
    %2646 = vmatprep.subr.mxu0 0.0
    %2647 = vmatpush1.msra.mxu0 0.0
    %2648 = vmatprep.subr.mxu0 0.0
    %2649 = vmatpush1.msra.mxu0 0.0
    %2650 = vmatprep.subr.mxu0 0.0
    %2651 = vmatpush1.msra.mxu0 0.0
    %2652 = vmatprep.subr.mxu0 0.0
    %2653 = vmatpush1.msra.mxu0 0.0
    %2654 = vmatprep.subr.mxu0 0.0
    %2655 = vmatpush1.msra.mxu0 0.0
    %2656 = vmatprep.subr.mxu0 0.0
    %2657 = vmatpush1.msra.mxu0 0.0
    %2658 = vmatprep.subr.mxu0 0.0
    %2659 = vmatpush1.msra.mxu0 0.0
    %2660 = vmatprep.subr.mxu0 0.0
    %2661 = vmatpush1.msra.mxu0 0.0
    %2662 = vmatprep.subr.mxu0 0.0
    %2663 = vmatpush1.msra.mxu0 0.0
    %2664 = vmatprep.subr.mxu0 0.0
    %2665 = vmatpush1.msra.mxu0 0.0
    %2666 = vmatprep.subr.mxu0 0.0
    %2667 = vmatpush1.msra.mxu0 0.0
    %2668 = vmatprep.subr.mxu0 0.0
    %2669 = vmatpush1.msra.mxu0 0.0
    %2670 = vmatprep.subr.mxu0 0.0
    %2671 = vmatpush1.msra.mxu0 0.0
    %2672 = vmatprep.subr.mxu0 0.0
    %2673 = vmatpush1.msra.mxu0 0.0
    %2674 = vmatprep.subr.mxu0 0.0
    %2675 = vmatpush1.msra.mxu0 0.0
    %2676 = vmatprep.subr.mxu0 0.0
    %2677 = vmatpush1.msra.mxu0 0.0
    %2678 = vmatprep.subr.mxu0 0.0
    %2679 = vmatpush1.msra.mxu0 0.0
    %2680 = vmatprep.subr.mxu0 0.0
    %2681 = vmatpush1.msra.mxu0 0.0
    %2682 = vmatprep.subr.mxu0 0.0
    %2683 = vmatpush1.msra.mxu0 0.0
    %2684 = vmatprep.mubr.f32.mxu0 0.0
    %2685 = vmatmul.mubr.f32.gmra.mrb[0].mxu0 %v2618
    %v2686 = vpop.f32.mrb[0].mxu0
    %v2687 = vadd.f32 0.0, %v2686
    %v2688 = vpop.f32.mrb[0].mxu0
    %2689 = vdwg.mxu0
    %2690 = vrot.lane.b32.xlu0 %v2345, 120
    %v2691 = vpop.permute.xlu0 %2690
    %2692 = vrot.lane.b32.xlu0 %v2345, 88
    %v2693 = vpop.permute.xlu0 %2692
    %v2694 = vsel %vm310, %v2691, 0
    %v2696 = vsel %vm310, %v2693, 0
    %2698 = vmatprep.subr.mxu0 0.0
    %2699 = vmatpush1.xpose.msra.mxu0 %v2696
    %2700 = vmatprep.subr.mxu0 0.0
    %2701 = vmatpush1.xpose.msra.mxu0 0.0
    %2702 = vmatprep.subr.mxu0 0.0
    %2703 = vmatpush1.xpose.msra.mxu0 0.0
    %2704 = vmatprep.subr.mxu0 0.0
    %2705 = vmatpush1.xpose.msra.mxu0 0.0
    %2706 = vmatprep.subr.mxu0 0.0
    %2707 = vmatpush1.xpose.msra.mxu0 0.0
    %2708 = vmatprep.subr.mxu0 0.0
    %2709 = vmatpush1.xpose.msra.mxu0 0.0
    %2710 = vmatprep.subr.mxu0 0.0
    %2711 = vmatpush1.xpose.msra.mxu0 0.0
    %2712 = vmatprep.subr.mxu0 0.0
    %2713 = vmatpush1.xpose.msra.mxu0 0.0
    %2714 = vmatprep.subr.mxu0 0.0
    %2715 = vmatpush1.xpose.msra.mxu0 0.0
    %2716 = vmatprep.subr.mxu0 0.0
    %2717 = vmatpush1.xpose.msra.mxu0 0.0
    %2718 = vmatprep.subr.mxu0 0.0
    %2719 = vmatpush1.xpose.msra.mxu0 0.0
    %2720 = vmatprep.subr.mxu0 0.0
    %2721 = vmatpush1.xpose.msra.mxu0 0.0
    %2722 = vmatprep.subr.mxu0 0.0
    %2723 = vmatpush1.xpose.msra.mxu0 0.0
    %2724 = vmatprep.subr.mxu0 0.0
    %2725 = vmatpush1.xpose.msra.mxu0 0.0
    %2726 = vmatprep.subr.mxu0 0.0
    %2727 = vmatpush1.xpose.msra.mxu0 0.0
    %2728 = vmatprep.subr.mxu0 0.0
    %2729 = vmatpush1.xpose.msra.mxu0 0.0
    %2730 = vmatprep.subr.mxu0 0.0
    %2731 = vmatpush1.xpose.msra.mxu0 0.0
    %2732 = vmatprep.subr.mxu0 0.0
    %2733 = vmatpush1.xpose.msra.mxu0 0.0
    %2734 = vmatprep.subr.mxu0 0.0
    %2735 = vmatpush1.xpose.msra.mxu0 0.0
    %2736 = vmatprep.subr.mxu0 0.0
    %2737 = vmatpush1.xpose.msra.mxu0 0.0
    %2738 = vmatprep.subr.mxu0 0.0
    %2739 = vmatpush1.xpose.msra.mxu0 0.0
    %2740 = vmatprep.subr.mxu0 0.0
    %2741 = vmatpush1.xpose.msra.mxu0 0.0
    %2742 = vmatprep.subr.mxu0 0.0
    %2743 = vmatpush1.xpose.msra.mxu0 0.0
    %2744 = vmatprep.subr.mxu0 0.0
    %2745 = vmatpush1.xpose.msra.mxu0 0.0
    %2746 = vmatprep.subr.mxu0 0.0
    %2747 = vmatpush1.xpose.msra.mxu0 0.0
    %2748 = vmatprep.subr.mxu0 0.0
    %2749 = vmatpush1.xpose.msra.mxu0 0.0
    %2750 = vmatprep.subr.mxu0 0.0
    %2751 = vmatpush1.xpose.msra.mxu0 0.0
    %2752 = vmatprep.subr.mxu0 0.0
    %2753 = vmatpush1.xpose.msra.mxu0 0.0
    %2754 = vmatprep.subr.mxu0 0.0
    %2755 = vmatpush1.xpose.msra.mxu0 0.0
    %2756 = vmatprep.subr.mxu0 0.0
    %2757 = vmatpush1.xpose.msra.mxu0 0.0
    %2758 = vmatprep.subr.mxu0 0.0
    %2759 = vmatpush1.xpose.msra.mxu0 0.0
    %2760 = vmatprep.subr.mxu0 0.0
    %2761 = vmatpush1.xpose.msra.mxu0 0.0
    %2762 = vmatprep.mubr.f32.mxu0 0.0
    %2763 = vmatmul.mubr.f32.gmra.mrb[0].mxu0 %v2694
    %v2764 = vpop.f32.mrb[0].mxu0
    %v2765 = vadd.f32 0.0, %v2764
    %v2766 = vpop.f32.mrb[0].mxu0
    %2767 = vdwg.mxu0
    %2768 = vrot.lane.b32.xlu0 %v2350, 120
    %v2769 = vpop.permute.xlu0 %2768
    %2770 = vrot.lane.b32.xlu0 %v2350, 88
    %v2771 = vpop.permute.xlu0 %2770
    %v2772 = vsel %vm310, %v2769, 0
    %v2774 = vsel %vm310, %v2771, 0
    %2776 = vmatprep.subr.mxu0 0.0
    %2777 = vmatpush1.xpose.msra.mxu0 %v2774
    %2778 = vmatprep.subr.mxu0 0.0
    %2779 = vmatpush1.xpose.msra.mxu0 0.0
    %2780 = vmatprep.subr.mxu0 0.0
    %2781 = vmatpush1.xpose.msra.mxu0 0.0
    %2782 = vmatprep.subr.mxu0 0.0
    %2783 = vmatpush1.xpose.msra.mxu0 0.0
    %2784 = vmatprep.subr.mxu0 0.0
    %2785 = vmatpush1.xpose.msra.mxu0 0.0
    %2786 = vmatprep.subr.mxu0 0.0
    %2787 = vmatpush1.xpose.msra.mxu0 0.0
    %2788 = vmatprep.subr.mxu0 0.0
    %2789 = vmatpush1.xpose.msra.mxu0 0.0
    %2790 = vmatprep.subr.mxu0 0.0
    %2791 = vmatpush1.xpose.msra.mxu0 0.0
    %2792 = vmatprep.subr.mxu0 0.0
    %2793 = vmatpush1.xpose.msra.mxu0 0.0
    %2794 = vmatprep.subr.mxu0 0.0
    %2795 = vmatpush1.xpose.msra.mxu0 0.0
    %2796 = vmatprep.subr.mxu0 0.0
    %2797 = vmatpush1.xpose.msra.mxu0 0.0
    %2798 = vmatprep.subr.mxu0 0.0
    %2799 = vmatpush1.xpose.msra.mxu0 0.0
    %2800 = vmatprep.subr.mxu0 0.0
    %2801 = vmatpush1.xpose.msra.mxu0 0.0
    %2802 = vmatprep.subr.mxu0 0.0
    %2803 = vmatpush1.xpose.msra.mxu0 0.0
    %2804 = vmatprep.subr.mxu0 0.0
    %2805 = vmatpush1.xpose.msra.mxu0 0.0
    %2806 = vmatprep.subr.mxu0 0.0
    %2807 = vmatpush1.xpose.msra.mxu0 0.0
    %2808 = vmatprep.subr.mxu0 0.0
    %2809 = vmatpush1.xpose.msra.mxu0 0.0
    %2810 = vmatprep.subr.mxu0 0.0
    %2811 = vmatpush1.xpose.msra.mxu0 0.0
    %2812 = vmatprep.subr.mxu0 0.0
    %2813 = vmatpush1.xpose.msra.mxu0 0.0
    %2814 = vmatprep.subr.mxu0 0.0
    %2815 = vmatpush1.xpose.msra.mxu0 0.0
    %2816 = vmatprep.subr.mxu0 0.0
    %2817 = vmatpush1.xpose.msra.mxu0 0.0
    %2818 = vmatprep.subr.mxu0 0.0
    %2819 = vmatpush1.xpose.msra.mxu0 0.0
    %2820 = vmatprep.subr.mxu0 0.0
    %2821 = vmatpush1.xpose.msra.mxu0 0.0
    %2822 = vmatprep.subr.mxu0 0.0
    %2823 = vmatpush1.xpose.msra.mxu0 0.0
    %2824 = vmatprep.subr.mxu0 0.0
    %2825 = vmatpush1.xpose.msra.mxu0 0.0
    %2826 = vmatprep.subr.mxu0 0.0
    %2827 = vmatpush1.xpose.msra.mxu0 0.0
    %2828 = vmatprep.subr.mxu0 0.0
    %2829 = vmatpush1.xpose.msra.mxu0 0.0
    %2830 = vmatprep.subr.mxu0 0.0
    %2831 = vmatpush1.xpose.msra.mxu0 0.0
    %2832 = vmatprep.subr.mxu0 0.0
    %2833 = vmatpush1.xpose.msra.mxu0 0.0
    %2834 = vmatprep.subr.mxu0 0.0
    %2835 = vmatpush1.xpose.msra.mxu0 0.0
    %2836 = vmatprep.subr.mxu0 0.0
    %2837 = vmatpush1.xpose.msra.mxu0 0.0
    %2838 = vmatprep.subr.mxu0 0.0
    %2839 = vmatpush1.xpose.msra.mxu0 0.0
    %2840 = vmatprep.mubr.f32.mxu0 0.0
    %2841 = vmatmul.mubr.f32.gmra.mrb[0].mxu0 %v2772
    %v2842 = vpop.f32.mrb[0].mxu0
    %v2843 = vadd.f32 0.0, %v2842
    %v2844 = vpop.f32.mrb[0].mxu0
    %2845 = vdwg.mxu0
    %v2846 = vmul.f32 %v2765, 0.17677669
    %v2847 = vmul.f32 %v2843, 0.17677669
    %v2848 = vadd.f32 %v2846, %v171
    %v2849 = vadd.f32 %v2847, %v171
    %v2850 = vsel %vm310, %v2848, -inf
    %2851 = vmax.xlane.f32.xlu0 %v2850
    %v2852 = vpop.xlane.xlu0 %2851
    %v2853 = vsel %vm310, %v2849, -inf
    %2854 = vmax.xlane.f32.xlu0 %v2853
    %v2855 = vpop.xlane.xlu0 %2854
    %v2856 = vsub.f32 %v2848, %v2852
    %v2857 = vsub.f32 %v2849, %v2855
    %v2858 = vmul.f32 %v2856, 1.442695
    %v2859 = vpow.pop %v2858
    %v2860 = vmul.f32 %v2857, 1.442695
    %v2861 = vpow.pop %v2860
    %v2862 = vsel %vm310, %v2859, 0.0
    %2863 = vadd.xlane.f32.xlu0 %v2862
    %v2864 = vpop.xlane.xlu0 %2863
    %v2865 = vsel %vm310, %v2861, 0.0
    %2866 = vadd.xlane.f32.xlu0 %v2865
    %v2867 = vpop.xlane.xlu0 %2866
    %v2868 = vrcp.pop %v2864
    %v2869 = vrcp.pop %v2867
    %v2870 = vmul.f32 %v2859, %v2868
    %v2871 = vmul.f32 %v2861, %v2869
    %2872 = vrot.lane.b32.xlu0 %v2345, 56
    %v2873 = vpop.permute.xlu0 %2872
    %v2876 = vsel %vm310, %v2870, 0
    %2878 = vmatprep.subr.mxu0 0.0
    %2879 = vmatpush1.msra.mxu0 %v2873
    %2880 = vmatprep.subr.mxu0 0.0
    %2881 = vmatpush1.msra.mxu0 0.0
    %2882 = vmatprep.subr.mxu0 0.0
    %2883 = vmatpush1.msra.mxu0 0.0
    %2884 = vmatprep.subr.mxu0 0.0
    %2885 = vmatpush1.msra.mxu0 0.0
    %2886 = vmatprep.subr.mxu0 0.0
    %2887 = vmatpush1.msra.mxu0 0.0
    %2888 = vmatprep.subr.mxu0 0.0
    %2889 = vmatpush1.msra.mxu0 0.0
    %2890 = vmatprep.subr.mxu0 0.0
    %2891 = vmatpush1.msra.mxu0 0.0
    %2892 = vmatprep.subr.mxu0 0.0
    %2893 = vmatpush1.msra.mxu0 0.0
    %2894 = vmatprep.subr.mxu0 0.0
    %2895 = vmatpush1.msra.mxu0 0.0
    %2896 = vmatprep.subr.mxu0 0.0
    %2897 = vmatpush1.msra.mxu0 0.0
    %2898 = vmatprep.subr.mxu0 0.0
    %2899 = vmatpush1.msra.mxu0 0.0
    %2900 = vmatprep.subr.mxu0 0.0
    %2901 = vmatpush1.msra.mxu0 0.0
    %2902 = vmatprep.subr.mxu0 0.0
    %2903 = vmatpush1.msra.mxu0 0.0
    %2904 = vmatprep.subr.mxu0 0.0
    %2905 = vmatpush1.msra.mxu0 0.0
    %2906 = vmatprep.subr.mxu0 0.0
    %2907 = vmatpush1.msra.mxu0 0.0
    %2908 = vmatprep.subr.mxu0 0.0
    %2909 = vmatpush1.msra.mxu0 0.0
    %2910 = vmatprep.subr.mxu0 0.0
    %2911 = vmatpush1.msra.mxu0 0.0
    %2912 = vmatprep.subr.mxu0 0.0
    %2913 = vmatpush1.msra.mxu0 0.0
    %2914 = vmatprep.subr.mxu0 0.0
    %2915 = vmatpush1.msra.mxu0 0.0
    %2916 = vmatprep.subr.mxu0 0.0
    %2917 = vmatpush1.msra.mxu0 0.0
    %2918 = vmatprep.subr.mxu0 0.0
    %2919 = vmatpush1.msra.mxu0 0.0
    %2920 = vmatprep.subr.mxu0 0.0
    %2921 = vmatpush1.msra.mxu0 0.0
    %2922 = vmatprep.subr.mxu0 0.0
    %2923 = vmatpush1.msra.mxu0 0.0
    %2924 = vmatprep.subr.mxu0 0.0
    %2925 = vmatpush1.msra.mxu0 0.0
    %2926 = vmatprep.subr.mxu0 0.0
    %2927 = vmatpush1.msra.mxu0 0.0
    %2928 = vmatprep.subr.mxu0 0.0
    %2929 = vmatpush1.msra.mxu0 0.0
    %2930 = vmatprep.subr.mxu0 0.0
    %2931 = vmatpush1.msra.mxu0 0.0
    %2932 = vmatprep.subr.mxu0 0.0
    %2933 = vmatpush1.msra.mxu0 0.0
    %2934 = vmatprep.subr.mxu0 0.0
    %2935 = vmatpush1.msra.mxu0 0.0
    %2936 = vmatprep.subr.mxu0 0.0
    %2937 = vmatpush1.msra.mxu0 0.0
    %2938 = vmatprep.subr.mxu0 0.0
    %2939 = vmatpush1.msra.mxu0 0.0
    %2940 = vmatprep.subr.mxu0 0.0
    %2941 = vmatpush1.msra.mxu0 0.0
    %2942 = vmatprep.mubr.f32.mxu0 0.0
    %2943 = vmatmul.mubr.f32.gmra.mrb[0].mxu0 %v2876
    %v2944 = vpop.f32.mrb[0].mxu0
    %v2945 = vadd.f32 0.0, %v2944
    %v2946 = vpop.f32.mrb[0].mxu0
    %2947 = vdwg.mxu0
    %2948 = vrot.lane.b32.xlu0 %v2350, 56
    %v2949 = vpop.permute.xlu0 %2948
    %v2952 = vsel %vm310, %v2871, 0
    %2954 = vmatprep.subr.mxu0 0.0
    %2955 = vmatpush1.msra.mxu0 %v2949
    %2956 = vmatprep.subr.mxu0 0.0
    %2957 = vmatpush1.msra.mxu0 0.0
    %2958 = vmatprep.subr.mxu0 0.0
    %2959 = vmatpush1.msra.mxu0 0.0
    %2960 = vmatprep.subr.mxu0 0.0
    %2961 = vmatpush1.msra.mxu0 0.0
    %2962 = vmatprep.subr.mxu0 0.0
    %2963 = vmatpush1.msra.mxu0 0.0
    %2964 = vmatprep.subr.mxu0 0.0
    %2965 = vmatpush1.msra.mxu0 0.0
    %2966 = vmatprep.subr.mxu0 0.0
    %2967 = vmatpush1.msra.mxu0 0.0
    %2968 = vmatprep.subr.mxu0 0.0
    %2969 = vmatpush1.msra.mxu0 0.0
    %2970 = vmatprep.subr.mxu0 0.0
    %2971 = vmatpush1.msra.mxu0 0.0
    %2972 = vmatprep.subr.mxu0 0.0
    %2973 = vmatpush1.msra.mxu0 0.0
    %2974 = vmatprep.subr.mxu0 0.0
    %2975 = vmatpush1.msra.mxu0 0.0
    %2976 = vmatprep.subr.mxu0 0.0
    %2977 = vmatpush1.msra.mxu0 0.0
    %2978 = vmatprep.subr.mxu0 0.0
    %2979 = vmatpush1.msra.mxu0 0.0
    %2980 = vmatprep.subr.mxu0 0.0
    %2981 = vmatpush1.msra.mxu0 0.0
    %2982 = vmatprep.subr.mxu0 0.0
    %2983 = vmatpush1.msra.mxu0 0.0
    %2984 = vmatprep.subr.mxu0 0.0
    %2985 = vmatpush1.msra.mxu0 0.0
    %2986 = vmatprep.subr.mxu0 0.0
    %2987 = vmatpush1.msra.mxu0 0.0
    %2988 = vmatprep.subr.mxu0 0.0
    %2989 = vmatpush1.msra.mxu0 0.0
    %2990 = vmatprep.subr.mxu0 0.0
    %2991 = vmatpush1.msra.mxu0 0.0
    %2992 = vmatprep.subr.mxu0 0.0
    %2993 = vmatpush1.msra.mxu0 0.0
    %2994 = vmatprep.subr.mxu0 0.0
    %2995 = vmatpush1.msra.mxu0 0.0
    %2996 = vmatprep.subr.mxu0 0.0
    %2997 = vmatpush1.msra.mxu0 0.0
    %2998 = vmatprep.subr.mxu0 0.0
    %2999 = vmatpush1.msra.mxu0 0.0
    %3000 = vmatprep.subr.mxu0 0.0
    %3001 = vmatpush1.msra.mxu0 0.0
    %3002 = vmatprep.subr.mxu0 0.0
    %3003 = vmatpush1.msra.mxu0 0.0
    %3004 = vmatprep.subr.mxu0 0.0
    %3005 = vmatpush1.msra.mxu0 0.0
    %3006 = vmatprep.subr.mxu0 0.0
    %3007 = vmatpush1.msra.mxu0 0.0
    %3008 = vmatprep.subr.mxu0 0.0
    %3009 = vmatpush1.msra.mxu0 0.0
    %3010 = vmatprep.subr.mxu0 0.0
    %3011 = vmatpush1.msra.mxu0 0.0
    %3012 = vmatprep.subr.mxu0 0.0
    %3013 = vmatpush1.msra.mxu0 0.0
    %3014 = vmatprep.subr.mxu0 0.0
    %3015 = vmatpush1.msra.mxu0 0.0
    %3016 = vmatprep.subr.mxu0 0.0
    %3017 = vmatpush1.msra.mxu0 0.0
    %3018 = vmatprep.mubr.f32.mxu0 0.0
    %3019 = vmatmul.mubr.f32.gmra.mrb[0].mxu0 %v2952
    %v3020 = vpop.f32.mrb[0].mxu0
    %v3021 = vadd.f32 0.0, %v3020
    %v3022 = vpop.f32.mrb[0].mxu0
    %3023 = vdwg.mxu0
    %v3025 = vsel %vm310, %v2945, 0
    %v3028 = vsel %vm310, %v3021, 0
    %3030 = vmatprep.subr.mxu0 0.0
    %3031 = vmatpush1.msra.mxu0 %v2355
    %3032 = vmatprep.subr.mxu0 0.0
    %3033 = vmatpush1.msra.mxu0 0.0
    %3034 = vmatprep.subr.mxu0 0.0
    %3035 = vmatpush1.msra.mxu0 0.0
    %3036 = vmatprep.subr.mxu0 0.0
    %3037 = vmatpush1.msra.mxu0 0.0
    %3038 = vmatprep.subr.mxu0 0.0
    %3039 = vmatpush1.msra.mxu0 0.0
    %3040 = vmatprep.subr.mxu0 0.0
    %3041 = vmatpush1.msra.mxu0 0.0
    %3042 = vmatprep.subr.mxu0 0.0
    %3043 = vmatpush1.msra.mxu0 0.0
    %3044 = vmatprep.subr.mxu0 0.0
    %3045 = vmatpush1.msra.mxu0 0.0
    %3046 = vmatprep.subr.mxu0 0.0
    %3047 = vmatpush1.msra.mxu0 0.0
    %3048 = vmatprep.subr.mxu0 0.0
    %3049 = vmatpush1.msra.mxu0 0.0
    %3050 = vmatprep.subr.mxu0 0.0
    %3051 = vmatpush1.msra.mxu0 0.0
    %3052 = vmatprep.subr.mxu0 0.0
    %3053 = vmatpush1.msra.mxu0 0.0
    %3054 = vmatprep.subr.mxu0 0.0
    %3055 = vmatpush1.msra.mxu0 0.0
    %3056 = vmatprep.subr.mxu0 0.0
    %3057 = vmatpush1.msra.mxu0 0.0
    %3058 = vmatprep.subr.mxu0 0.0
    %3059 = vmatpush1.msra.mxu0 0.0
    %3060 = vmatprep.subr.mxu0 0.0
    %3061 = vmatpush1.msra.mxu0 0.0
    %3062 = vmatprep.subr.mxu0 0.0
    %3063 = vmatpush1.msra.mxu0 0.0
    %3064 = vmatprep.subr.mxu0 0.0
    %3065 = vmatpush1.msra.mxu0 0.0
    %3066 = vmatprep.subr.mxu0 0.0
    %3067 = vmatpush1.msra.mxu0 0.0
    %3068 = vmatprep.subr.mxu0 0.0
    %3069 = vmatpush1.msra.mxu0 0.0
    %3070 = vmatprep.subr.mxu0 0.0
    %3071 = vmatpush1.msra.mxu0 0.0
    %3072 = vmatprep.subr.mxu0 0.0
    %3073 = vmatpush1.msra.mxu0 0.0
    %3074 = vmatprep.subr.mxu0 0.0
    %3075 = vmatpush1.msra.mxu0 0.0
    %3076 = vmatprep.subr.mxu0 0.0
    %3077 = vmatpush1.msra.mxu0 0.0
    %3078 = vmatprep.subr.mxu0 0.0
    %3079 = vmatpush1.msra.mxu0 0.0
    %3080 = vmatprep.subr.mxu0 0.0
    %3081 = vmatpush1.msra.mxu0 0.0
    %3082 = vmatprep.subr.mxu0 0.0
    %3083 = vmatpush1.msra.mxu0 0.0
    %3084 = vmatprep.subr.mxu0 0.0
    %3085 = vmatpush1.msra.mxu0 0.0
    %3086 = vmatprep.subr.mxu0 0.0
    %3087 = vmatpush1.msra.mxu0 0.0
    %3088 = vmatprep.subr.mxu0 0.0
    %3089 = vmatpush1.msra.mxu0 0.0
    %3090 = vmatprep.subr.mxu0 0.0
    %3091 = vmatpush1.msra.mxu0 0.0
    %3092 = vmatprep.subr.mxu0 0.0
    %3093 = vmatpush1.msra.mxu0 0.0
    %3094 = vmatprep.mubr.f32.mxu0 0.0
    %3095 = vmatmul.mubr.f32.gmra.mrb[0].mxu0 %v3025
    %v3096 = vpop.f32.mrb[0].mxu0
    %v3097 = vadd.f32 0.0, %v3096
    %v3098 = vpop.f32.mrb[0].mxu0
    %3099 = vmatprep.mubr.f32.mxu0 0.0
    %3100 = vmatmul.mubr.f32.gmra.mrb[0].mxu0 %v3028
    %v3101 = vpop.f32.mrb[0].mxu0
    %v3102 = vadd.f32 0.0, %v3101
    %v3103 = vpop.f32.mrb[0].mxu0
    %3104 = vdwg.mxu0
    %v3106 = vsel %vm310, %v2611, 0
    %v3109 = vsel %vm310, %v2687, 0
    %3111 = vmatprep.subr.mxu0 0.0
    %3112 = vmatpush1.msra.mxu0 %v2354
    %3113 = vmatprep.subr.mxu0 0.0
    %3114 = vmatpush1.msra.mxu0 0.0
    %3115 = vmatprep.subr.mxu0 0.0
    %3116 = vmatpush1.msra.mxu0 0.0
    %3117 = vmatprep.subr.mxu0 0.0
    %3118 = vmatpush1.msra.mxu0 0.0
    %3119 = vmatprep.subr.mxu0 0.0
    %3120 = vmatpush1.msra.mxu0 0.0
    %3121 = vmatprep.subr.mxu0 0.0
    %3122 = vmatpush1.msra.mxu0 0.0
    %3123 = vmatprep.subr.mxu0 0.0
    %3124 = vmatpush1.msra.mxu0 0.0
    %3125 = vmatprep.subr.mxu0 0.0
    %3126 = vmatpush1.msra.mxu0 0.0
    %3127 = vmatprep.subr.mxu0 0.0
    %3128 = vmatpush1.msra.mxu0 0.0
    %3129 = vmatprep.subr.mxu0 0.0
    %3130 = vmatpush1.msra.mxu0 0.0
    %3131 = vmatprep.subr.mxu0 0.0
    %3132 = vmatpush1.msra.mxu0 0.0
    %3133 = vmatprep.subr.mxu0 0.0
    %3134 = vmatpush1.msra.mxu0 0.0
    %3135 = vmatprep.subr.mxu0 0.0
    %3136 = vmatpush1.msra.mxu0 0.0
    %3137 = vmatprep.subr.mxu0 0.0
    %3138 = vmatpush1.msra.mxu0 0.0
    %3139 = vmatprep.subr.mxu0 0.0
    %3140 = vmatpush1.msra.mxu0 0.0
    %3141 = vmatprep.subr.mxu0 0.0
    %3142 = vmatpush1.msra.mxu0 0.0
    %3143 = vmatprep.subr.mxu0 0.0
    %3144 = vmatpush1.msra.mxu0 0.0
    %3145 = vmatprep.subr.mxu0 0.0
    %3146 = vmatpush1.msra.mxu0 0.0
    %3147 = vmatprep.subr.mxu0 0.0
    %3148 = vmatpush1.msra.mxu0 0.0
    %3149 = vmatprep.subr.mxu0 0.0
    %3150 = vmatpush1.msra.mxu0 0.0
    %3151 = vmatprep.subr.mxu0 0.0
    %3152 = vmatpush1.msra.mxu0 0.0
    %3153 = vmatprep.subr.mxu0 0.0
    %3154 = vmatpush1.msra.mxu0 0.0
    %3155 = vmatprep.subr.mxu0 0.0
    %3156 = vmatpush1.msra.mxu0 0.0
    %3157 = vmatprep.subr.mxu0 0.0
    %3158 = vmatpush1.msra.mxu0 0.0
    %3159 = vmatprep.subr.mxu0 0.0
    %3160 = vmatpush1.msra.mxu0 0.0
    %3161 = vmatprep.subr.mxu0 0.0
    %3162 = vmatpush1.msra.mxu0 0.0
    %3163 = vmatprep.subr.mxu0 0.0
    %3164 = vmatpush1.msra.mxu0 0.0
    %3165 = vmatprep.subr.mxu0 0.0
    %3166 = vmatpush1.msra.mxu0 0.0
    %3167 = vmatprep.subr.mxu0 0.0
    %3168 = vmatpush1.msra.mxu0 0.0
    %3169 = vmatprep.subr.mxu0 0.0
    %3170 = vmatpush1.msra.mxu0 0.0
    %3171 = vmatprep.subr.mxu0 0.0
    %3172 = vmatpush1.msra.mxu0 0.0
    %3173 = vmatprep.subr.mxu0 0.0
    %3174 = vmatpush1.msra.mxu0 0.0
    %3175 = vmatprep.mubr.f32.mxu0 0.0
    %3176 = vmatmul.mubr.f32.gmra.mrb[0].mxu0 %v3106
    %v3177 = vpop.f32.mrb[0].mxu0
    %v3178 = vadd.f32 %v3097, %v3177
    %v3179 = vpop.f32.mrb[0].mxu0
    %3180 = vmatprep.mubr.f32.mxu0 0.0
    %3181 = vmatmul.mubr.f32.gmra.mrb[0].mxu0 %v3109
    %v3182 = vpop.f32.mrb[0].mxu0
    %v3183 = vadd.f32 %v3102, %v3182
    %v3184 = vpop.f32.mrb[0].mxu0
    %3185 = vdwg.mxu0
    %3186 = vrot.lane.b32.xlu0 %v2345, 112
    %v3187 = vpop.permute.xlu0 %3186
    %3188 = vrot.lane.b32.xlu0 %v2345, 80
    %v3189 = vpop.permute.xlu0 %3188
    %v3190 = vsel %vm310, %v3187, 0
    %v3192 = vsel %vm310, %v3189, 0
    %3194 = vmatprep.subr.mxu0 0.0
    %3195 = vmatpush1.xpose.msra.mxu0 %v3192
    %3196 = vmatprep.subr.mxu0 0.0
    %3197 = vmatpush1.xpose.msra.mxu0 0.0
    %3198 = vmatprep.subr.mxu0 0.0
    %3199 = vmatpush1.xpose.msra.mxu0 0.0
    %3200 = vmatprep.subr.mxu0 0.0
    %3201 = vmatpush1.xpose.msra.mxu0 0.0
    %3202 = vmatprep.subr.mxu0 0.0
    %3203 = vmatpush1.xpose.msra.mxu0 0.0
    %3204 = vmatprep.subr.mxu0 0.0
    %3205 = vmatpush1.xpose.msra.mxu0 0.0
    %3206 = vmatprep.subr.mxu0 0.0
    %3207 = vmatpush1.xpose.msra.mxu0 0.0
    %3208 = vmatprep.subr.mxu0 0.0
    %3209 = vmatpush1.xpose.msra.mxu0 0.0
    %3210 = vmatprep.subr.mxu0 0.0
    %3211 = vmatpush1.xpose.msra.mxu0 0.0
    %3212 = vmatprep.subr.mxu0 0.0
    %3213 = vmatpush1.xpose.msra.mxu0 0.0
    %3214 = vmatprep.subr.mxu0 0.0
    %3215 = vmatpush1.xpose.msra.mxu0 0.0
    %3216 = vmatprep.subr.mxu0 0.0
    %3217 = vmatpush1.xpose.msra.mxu0 0.0
    %3218 = vmatprep.subr.mxu0 0.0
    %3219 = vmatpush1.xpose.msra.mxu0 0.0
    %3220 = vmatprep.subr.mxu0 0.0
    %3221 = vmatpush1.xpose.msra.mxu0 0.0
    %3222 = vmatprep.subr.mxu0 0.0
    %3223 = vmatpush1.xpose.msra.mxu0 0.0
    %3224 = vmatprep.subr.mxu0 0.0
    %3225 = vmatpush1.xpose.msra.mxu0 0.0
    %3226 = vmatprep.subr.mxu0 0.0
    %3227 = vmatpush1.xpose.msra.mxu0 0.0
    %3228 = vmatprep.subr.mxu0 0.0
    %3229 = vmatpush1.xpose.msra.mxu0 0.0
    %3230 = vmatprep.subr.mxu0 0.0
    %3231 = vmatpush1.xpose.msra.mxu0 0.0
    %3232 = vmatprep.subr.mxu0 0.0
    %3233 = vmatpush1.xpose.msra.mxu0 0.0
    %3234 = vmatprep.subr.mxu0 0.0
    %3235 = vmatpush1.xpose.msra.mxu0 0.0
    %3236 = vmatprep.subr.mxu0 0.0
    %3237 = vmatpush1.xpose.msra.mxu0 0.0
    %3238 = vmatprep.subr.mxu0 0.0
    %3239 = vmatpush1.xpose.msra.mxu0 0.0
    %3240 = vmatprep.subr.mxu0 0.0
    %3241 = vmatpush1.xpose.msra.mxu0 0.0
    %3242 = vmatprep.subr.mxu0 0.0
    %3243 = vmatpush1.xpose.msra.mxu0 0.0
    %3244 = vmatprep.subr.mxu0 0.0
    %3245 = vmatpush1.xpose.msra.mxu0 0.0
    %3246 = vmatprep.subr.mxu0 0.0
    %3247 = vmatpush1.xpose.msra.mxu0 0.0
    %3248 = vmatprep.subr.mxu0 0.0
    %3249 = vmatpush1.xpose.msra.mxu0 0.0
    %3250 = vmatprep.subr.mxu0 0.0
    %3251 = vmatpush1.xpose.msra.mxu0 0.0
    %3252 = vmatprep.subr.mxu0 0.0
    %3253 = vmatpush1.xpose.msra.mxu0 0.0
    %3254 = vmatprep.subr.mxu0 0.0
    %3255 = vmatpush1.xpose.msra.mxu0 0.0
    %3256 = vmatprep.subr.mxu0 0.0
    %3257 = vmatpush1.xpose.msra.mxu0 0.0
    %3258 = vmatprep.mubr.f32.mxu0 0.0
    %3259 = vmatmul.mubr.f32.gmra.mrb[0].mxu0 %v3190
    %v3260 = vpop.f32.mrb[0].mxu0
    %v3261 = vadd.f32 0.0, %v3260
    %v3262 = vpop.f32.mrb[0].mxu0
    %3263 = vdwg.mxu0
    %3264 = vrot.lane.b32.xlu0 %v2350, 112
    %v3265 = vpop.permute.xlu0 %3264
    %3266 = vrot.lane.b32.xlu0 %v2350, 80
    %v3267 = vpop.permute.xlu0 %3266
    %v3268 = vsel %vm310, %v3265, 0
    %v3270 = vsel %vm310, %v3267, 0
    %3272 = vmatprep.subr.mxu0 0.0
    %3273 = vmatpush1.xpose.msra.mxu0 %v3270
    %3274 = vmatprep.subr.mxu0 0.0
    %3275 = vmatpush1.xpose.msra.mxu0 0.0
    %3276 = vmatprep.subr.mxu0 0.0
    %3277 = vmatpush1.xpose.msra.mxu0 0.0
    %3278 = vmatprep.subr.mxu0 0.0
    %3279 = vmatpush1.xpose.msra.mxu0 0.0
    %3280 = vmatprep.subr.mxu0 0.0
    %3281 = vmatpush1.xpose.msra.mxu0 0.0
    %3282 = vmatprep.subr.mxu0 0.0
    %3283 = vmatpush1.xpose.msra.mxu0 0.0
    %3284 = vmatprep.subr.mxu0 0.0
    %3285 = vmatpush1.xpose.msra.mxu0 0.0
    %3286 = vmatprep.subr.mxu0 0.0
    %3287 = vmatpush1.xpose.msra.mxu0 0.0
    %3288 = vmatprep.subr.mxu0 0.0
    %3289 = vmatpush1.xpose.msra.mxu0 0.0
    %3290 = vmatprep.subr.mxu0 0.0
    %3291 = vmatpush1.xpose.msra.mxu0 0.0
    %3292 = vmatprep.subr.mxu0 0.0
    %3293 = vmatpush1.xpose.msra.mxu0 0.0
    %3294 = vmatprep.subr.mxu0 0.0
    %3295 = vmatpush1.xpose.msra.mxu0 0.0
    %3296 = vmatprep.subr.mxu0 0.0
    %3297 = vmatpush1.xpose.msra.mxu0 0.0
    %3298 = vmatprep.subr.mxu0 0.0
    %3299 = vmatpush1.xpose.msra.mxu0 0.0
    %3300 = vmatprep.subr.mxu0 0.0
    %3301 = vmatpush1.xpose.msra.mxu0 0.0
    %3302 = vmatprep.subr.mxu0 0.0
    %3303 = vmatpush1.xpose.msra.mxu0 0.0
    %3304 = vmatprep.subr.mxu0 0.0
    %3305 = vmatpush1.xpose.msra.mxu0 0.0
    %3306 = vmatprep.subr.mxu0 0.0
    %3307 = vmatpush1.xpose.msra.mxu0 0.0
    %3308 = vmatprep.subr.mxu0 0.0
    %3309 = vmatpush1.xpose.msra.mxu0 0.0
    %3310 = vmatprep.subr.mxu0 0.0
    %3311 = vmatpush1.xpose.msra.mxu0 0.0
    %3312 = vmatprep.subr.mxu0 0.0
    %3313 = vmatpush1.xpose.msra.mxu0 0.0
    %3314 = vmatprep.subr.mxu0 0.0
    %3315 = vmatpush1.xpose.msra.mxu0 0.0
    %3316 = vmatprep.subr.mxu0 0.0
    %3317 = vmatpush1.xpose.msra.mxu0 0.0
    %3318 = vmatprep.subr.mxu0 0.0
    %3319 = vmatpush1.xpose.msra.mxu0 0.0
    %3320 = vmatprep.subr.mxu0 0.0
    %3321 = vmatpush1.xpose.msra.mxu0 0.0
    %3322 = vmatprep.subr.mxu0 0.0
    %3323 = vmatpush1.xpose.msra.mxu0 0.0
    %3324 = vmatprep.subr.mxu0 0.0
    %3325 = vmatpush1.xpose.msra.mxu0 0.0
    %3326 = vmatprep.subr.mxu0 0.0
    %3327 = vmatpush1.xpose.msra.mxu0 0.0
    %3328 = vmatprep.subr.mxu0 0.0
    %3329 = vmatpush1.xpose.msra.mxu0 0.0
    %3330 = vmatprep.subr.mxu0 0.0
    %3331 = vmatpush1.xpose.msra.mxu0 0.0
    %3332 = vmatprep.subr.mxu0 0.0
    %3333 = vmatpush1.xpose.msra.mxu0 0.0
    %3334 = vmatprep.subr.mxu0 0.0
    %3335 = vmatpush1.xpose.msra.mxu0 0.0
    %3336 = vmatprep.mubr.f32.mxu0 0.0
    %3337 = vmatmul.mubr.f32.gmra.mrb[0].mxu0 %v3268
    %v3338 = vpop.f32.mrb[0].mxu0
    %v3339 = vadd.f32 0.0, %v3338
    %v3340 = vpop.f32.mrb[0].mxu0
    %3341 = vdwg.mxu0
    %v3342 = vmul.f32 %v3261, 0.17677669
    %v3343 = vmul.f32 %v3339, 0.17677669
    %v3344 = vadd.f32 %v3342, %v171
    %v3345 = vadd.f32 %v3343, %v171
    %v3346 = vsel %vm310, %v3344, -inf
    %3347 = vmax.xlane.f32.xlu0 %v3346
    %v3348 = vpop.xlane.xlu0 %3347
    %v3349 = vsel %vm310, %v3345, -inf
    %3350 = vmax.xlane.f32.xlu0 %v3349
    %v3351 = vpop.xlane.xlu0 %3350
    %v3352 = vsub.f32 %v3344, %v3348
    %v3353 = vsub.f32 %v3345, %v3351
    %v3354 = vmul.f32 %v3352, 1.442695
    %v3355 = vpow.pop %v3354
    %v3356 = vmul.f32 %v3353, 1.442695
    %v3357 = vpow.pop %v3356
    %v3358 = vsel %vm310, %v3355, 0.0
    %3359 = vadd.xlane.f32.xlu0 %v3358
    %v3360 = vpop.xlane.xlu0 %3359
    %v3361 = vsel %vm310, %v3357, 0.0
    %3362 = vadd.xlane.f32.xlu0 %v3361
    %v3363 = vpop.xlane.xlu0 %3362
    %v3364 = vrcp.pop %v3360
    %v3365 = vrcp.pop %v3363
    %v3366 = vmul.f32 %v3355, %v3364
    %v3367 = vmul.f32 %v3357, %v3365
    %3368 = vrot.lane.b32.xlu0 %v2345, 48
    %v3369 = vpop.permute.xlu0 %3368
    %v3372 = vsel %vm310, %v3366, 0
    %3374 = vmatprep.subr.mxu0 0.0
    %3375 = vmatpush1.msra.mxu0 %v3369
    %3376 = vmatprep.subr.mxu0 0.0
    %3377 = vmatpush1.msra.mxu0 0.0
    %3378 = vmatprep.subr.mxu0 0.0
    %3379 = vmatpush1.msra.mxu0 0.0
    %3380 = vmatprep.subr.mxu0 0.0
    %3381 = vmatpush1.msra.mxu0 0.0
    %3382 = vmatprep.subr.mxu0 0.0
    %3383 = vmatpush1.msra.mxu0 0.0
    %3384 = vmatprep.subr.mxu0 0.0
    %3385 = vmatpush1.msra.mxu0 0.0
    %3386 = vmatprep.subr.mxu0 0.0
    %3387 = vmatpush1.msra.mxu0 0.0
    %3388 = vmatprep.subr.mxu0 0.0
    %3389 = vmatpush1.msra.mxu0 0.0
    %3390 = vmatprep.subr.mxu0 0.0
    %3391 = vmatpush1.msra.mxu0 0.0
    %3392 = vmatprep.subr.mxu0 0.0
    %3393 = vmatpush1.msra.mxu0 0.0
    %3394 = vmatprep.subr.mxu0 0.0
    %3395 = vmatpush1.msra.mxu0 0.0
    %3396 = vmatprep.subr.mxu0 0.0
    %3397 = vmatpush1.msra.mxu0 0.0
    %3398 = vmatprep.subr.mxu0 0.0
    %3399 = vmatpush1.msra.mxu0 0.0
    %3400 = vmatprep.subr.mxu0 0.0
    %3401 = vmatpush1.msra.mxu0 0.0
    %3402 = vmatprep.subr.mxu0 0.0
    %3403 = vmatpush1.msra.mxu0 0.0
    %3404 = vmatprep.subr.mxu0 0.0
    %3405 = vmatpush1.msra.mxu0 0.0
    %3406 = vmatprep.subr.mxu0 0.0
    %3407 = vmatpush1.msra.mxu0 0.0
    %3408 = vmatprep.subr.mxu0 0.0
    %3409 = vmatpush1.msra.mxu0 0.0
    %3410 = vmatprep.subr.mxu0 0.0
    %3411 = vmatpush1.msra.mxu0 0.0
    %3412 = vmatprep.subr.mxu0 0.0
    %3413 = vmatpush1.msra.mxu0 0.0
    %3414 = vmatprep.subr.mxu0 0.0
    %3415 = vmatpush1.msra.mxu0 0.0
    %3416 = vmatprep.subr.mxu0 0.0
    %3417 = vmatpush1.msra.mxu0 0.0
    %3418 = vmatprep.subr.mxu0 0.0
    %3419 = vmatpush1.msra.mxu0 0.0
    %3420 = vmatprep.subr.mxu0 0.0
    %3421 = vmatpush1.msra.mxu0 0.0
    %3422 = vmatprep.subr.mxu0 0.0
    %3423 = vmatpush1.msra.mxu0 0.0
    %3424 = vmatprep.subr.mxu0 0.0
    %3425 = vmatpush1.msra.mxu0 0.0
    %3426 = vmatprep.subr.mxu0 0.0
    %3427 = vmatpush1.msra.mxu0 0.0
    %3428 = vmatprep.subr.mxu0 0.0
    %3429 = vmatpush1.msra.mxu0 0.0
    %3430 = vmatprep.subr.mxu0 0.0
    %3431 = vmatpush1.msra.mxu0 0.0
    %3432 = vmatprep.subr.mxu0 0.0
    %3433 = vmatpush1.msra.mxu0 0.0
    %3434 = vmatprep.subr.mxu0 0.0
    %3435 = vmatpush1.msra.mxu0 0.0
    %3436 = vmatprep.subr.mxu0 0.0
    %3437 = vmatpush1.msra.mxu0 0.0
    %3438 = vmatprep.mubr.f32.mxu0 0.0
    %3439 = vmatmul.mubr.f32.gmra.mrb[0].mxu0 %v3372
    %v3440 = vpop.f32.mrb[0].mxu0
    %v3441 = vadd.f32 0.0, %v3440
    %v3442 = vpop.f32.mrb[0].mxu0
    %3443 = vdwg.mxu0
    %3444 = vrot.lane.b32.xlu0 %v2350, 48
    %v3445 = vpop.permute.xlu0 %3444
    %v3448 = vsel %vm310, %v3367, 0
    %3450 = vmatprep.subr.mxu0 0.0
    %3451 = vmatpush1.msra.mxu0 %v3445
    %3452 = vmatprep.subr.mxu0 0.0
    %3453 = vmatpush1.msra.mxu0 0.0
    %3454 = vmatprep.subr.mxu0 0.0
    %3455 = vmatpush1.msra.mxu0 0.0
    %3456 = vmatprep.subr.mxu0 0.0
    %3457 = vmatpush1.msra.mxu0 0.0
    %3458 = vmatprep.subr.mxu0 0.0
    %3459 = vmatpush1.msra.mxu0 0.0
    %3460 = vmatprep.subr.mxu0 0.0
    %3461 = vmatpush1.msra.mxu0 0.0
    %3462 = vmatprep.subr.mxu0 0.0
    %3463 = vmatpush1.msra.mxu0 0.0
    %3464 = vmatprep.subr.mxu0 0.0
    %3465 = vmatpush1.msra.mxu0 0.0
    %3466 = vmatprep.subr.mxu0 0.0
    %3467 = vmatpush1.msra.mxu0 0.0
    %3468 = vmatprep.subr.mxu0 0.0
    %3469 = vmatpush1.msra.mxu0 0.0
    %3470 = vmatprep.subr.mxu0 0.0
    %3471 = vmatpush1.msra.mxu0 0.0
    %3472 = vmatprep.subr.mxu0 0.0
    %3473 = vmatpush1.msra.mxu0 0.0
    %3474 = vmatprep.subr.mxu0 0.0
    %3475 = vmatpush1.msra.mxu0 0.0
    %3476 = vmatprep.subr.mxu0 0.0
    %3477 = vmatpush1.msra.mxu0 0.0
    %3478 = vmatprep.subr.mxu0 0.0
    %3479 = vmatpush1.msra.mxu0 0.0
    %3480 = vmatprep.subr.mxu0 0.0
    %3481 = vmatpush1.msra.mxu0 0.0
    %3482 = vmatprep.subr.mxu0 0.0
    %3483 = vmatpush1.msra.mxu0 0.0
    %3484 = vmatprep.subr.mxu0 0.0
    %3485 = vmatpush1.msra.mxu0 0.0
    %3486 = vmatprep.subr.mxu0 0.0
    %3487 = vmatpush1.msra.mxu0 0.0
    %3488 = vmatprep.subr.mxu0 0.0
    %3489 = vmatpush1.msra.mxu0 0.0
    %3490 = vmatprep.subr.mxu0 0.0
    %3491 = vmatpush1.msra.mxu0 0.0
    %3492 = vmatprep.subr.mxu0 0.0
    %3493 = vmatpush1.msra.mxu0 0.0
    %3494 = vmatprep.subr.mxu0 0.0
    %3495 = vmatpush1.msra.mxu0 0.0
    %3496 = vmatprep.subr.mxu0 0.0
    %3497 = vmatpush1.msra.mxu0 0.0
    %3498 = vmatprep.subr.mxu0 0.0
    %3499 = vmatpush1.msra.mxu0 0.0
    %3500 = vmatprep.subr.mxu0 0.0
    %3501 = vmatpush1.msra.mxu0 0.0
    %3502 = vmatprep.subr.mxu0 0.0
    %3503 = vmatpush1.msra.mxu0 0.0
    %3504 = vmatprep.subr.mxu0 0.0
    %3505 = vmatpush1.msra.mxu0 0.0
    %3506 = vmatprep.subr.mxu0 0.0
    %3507 = vmatpush1.msra.mxu0 0.0
    %3508 = vmatprep.subr.mxu0 0.0
    %3509 = vmatpush1.msra.mxu0 0.0
    %3510 = vmatprep.subr.mxu0 0.0
    %3511 = vmatpush1.msra.mxu0 0.0
    %3512 = vmatprep.subr.mxu0 0.0
    %3513 = vmatpush1.msra.mxu0 0.0
    %3514 = vmatprep.mubr.f32.mxu0 0.0
    %3515 = vmatmul.mubr.f32.gmra.mrb[0].mxu0 %v3448
    %v3516 = vpop.f32.mrb[0].mxu0
    %v3517 = vadd.f32 0.0, %v3516
    %v3518 = vpop.f32.mrb[0].mxu0
    %3519 = vdwg.mxu0
    %v3521 = vsel %vm310, %v3441, 0
    %v3524 = vsel %vm310, %v3517, 0
    %3526 = vmatprep.subr.mxu0 0.0
    %3527 = vmatpush1.msra.mxu0 %v2356
    %3528 = vmatprep.subr.mxu0 0.0
    %3529 = vmatpush1.msra.mxu0 0.0
    %3530 = vmatprep.subr.mxu0 0.0
    %3531 = vmatpush1.msra.mxu0 0.0
    %3532 = vmatprep.subr.mxu0 0.0
    %3533 = vmatpush1.msra.mxu0 0.0
    %3534 = vmatprep.subr.mxu0 0.0
    %3535 = vmatpush1.msra.mxu0 0.0
    %3536 = vmatprep.subr.mxu0 0.0
    %3537 = vmatpush1.msra.mxu0 0.0
    %3538 = vmatprep.subr.mxu0 0.0
    %3539 = vmatpush1.msra.mxu0 0.0
    %3540 = vmatprep.subr.mxu0 0.0
    %3541 = vmatpush1.msra.mxu0 0.0
    %3542 = vmatprep.subr.mxu0 0.0
    %3543 = vmatpush1.msra.mxu0 0.0
    %3544 = vmatprep.subr.mxu0 0.0
    %3545 = vmatpush1.msra.mxu0 0.0
    %3546 = vmatprep.subr.mxu0 0.0
    %3547 = vmatpush1.msra.mxu0 0.0
    %3548 = vmatprep.subr.mxu0 0.0
    %3549 = vmatpush1.msra.mxu0 0.0
    %3550 = vmatprep.subr.mxu0 0.0
    %3551 = vmatpush1.msra.mxu0 0.0
    %3552 = vmatprep.subr.mxu0 0.0
    %3553 = vmatpush1.msra.mxu0 0.0
    %3554 = vmatprep.subr.mxu0 0.0
    %3555 = vmatpush1.msra.mxu0 0.0
    %3556 = vmatprep.subr.mxu0 0.0
    %3557 = vmatpush1.msra.mxu0 0.0
    %3558 = vmatprep.subr.mxu0 0.0
    %3559 = vmatpush1.msra.mxu0 0.0
    %3560 = vmatprep.subr.mxu0 0.0
    %3561 = vmatpush1.msra.mxu0 0.0
    %3562 = vmatprep.subr.mxu0 0.0
    %3563 = vmatpush1.msra.mxu0 0.0
    %3564 = vmatprep.subr.mxu0 0.0
    %3565 = vmatpush1.msra.mxu0 0.0
    %3566 = vmatprep.subr.mxu0 0.0
    %3567 = vmatpush1.msra.mxu0 0.0
    %3568 = vmatprep.subr.mxu0 0.0
    %3569 = vmatpush1.msra.mxu0 0.0
    %3570 = vmatprep.subr.mxu0 0.0
    %3571 = vmatpush1.msra.mxu0 0.0
    %3572 = vmatprep.subr.mxu0 0.0
    %3573 = vmatpush1.msra.mxu0 0.0
    %3574 = vmatprep.subr.mxu0 0.0
    %3575 = vmatpush1.msra.mxu0 0.0
    %3576 = vmatprep.subr.mxu0 0.0
    %3577 = vmatpush1.msra.mxu0 0.0
    %3578 = vmatprep.subr.mxu0 0.0
    %3579 = vmatpush1.msra.mxu0 0.0
    %3580 = vmatprep.subr.mxu0 0.0
    %3581 = vmatpush1.msra.mxu0 0.0
    %3582 = vmatprep.subr.mxu0 0.0
    %3583 = vmatpush1.msra.mxu0 0.0
    %3584 = vmatprep.subr.mxu0 0.0
    %3585 = vmatpush1.msra.mxu0 0.0
    %3586 = vmatprep.subr.mxu0 0.0
    %3587 = vmatpush1.msra.mxu0 0.0
    %3588 = vmatprep.subr.mxu0 0.0
    %3589 = vmatpush1.msra.mxu0 0.0
    %3590 = vmatprep.mubr.f32.mxu0 0.0
    %3591 = vmatmul.mubr.f32.gmra.mrb[0].mxu0 %v3521
    %v3592 = vpop.f32.mrb[0].mxu0
    %v3593 = vadd.f32 0.0, %v3592
    %v3594 = vpop.f32.mrb[0].mxu0
    %3595 = vmatprep.mubr.f32.mxu0 0.0
    %3596 = vmatmul.mubr.f32.gmra.mrb[0].mxu0 %v3524
    %v3597 = vpop.f32.mrb[0].mxu0
    %v3598 = vadd.f32 0.0, %v3597
    %v3599 = vpop.f32.mrb[0].mxu0
    %3600 = vdwg.mxu0
    %v3601 = vadd.f32 %v3178, %v3593
    %v3602 = vadd.f32 %v3183, %v3598
    %3603 = vrot.lane.b32.xlu0 %v2345, 104
    %v3604 = vpop.permute.xlu0 %3603
    %3605 = vrot.lane.b32.xlu0 %v2345, 72
    %v3606 = vpop.permute.xlu0 %3605
    %v3607 = vsel %vm310, %v3604, 0
    %v3609 = vsel %vm310, %v3606, 0
    %3611 = vmatprep.subr.mxu0 0.0
    %3612 = vmatpush1.xpose.msra.mxu0 %v3609
    %3613 = vmatprep.subr.mxu0 0.0
    %3614 = vmatpush1.xpose.msra.mxu0 0.0
    %3615 = vmatprep.subr.mxu0 0.0
    %3616 = vmatpush1.xpose.msra.mxu0 0.0
    %3617 = vmatprep.subr.mxu0 0.0
    %3618 = vmatpush1.xpose.msra.mxu0 0.0
    %3619 = vmatprep.subr.mxu0 0.0
    %3620 = vmatpush1.xpose.msra.mxu0 0.0
    %3621 = vmatprep.subr.mxu0 0.0
    %3622 = vmatpush1.xpose.msra.mxu0 0.0
    %3623 = vmatprep.subr.mxu0 0.0
    %3624 = vmatpush1.xpose.msra.mxu0 0.0
    %3625 = vmatprep.subr.mxu0 0.0
    %3626 = vmatpush1.xpose.msra.mxu0 0.0
    %3627 = vmatprep.subr.mxu0 0.0
    %3628 = vmatpush1.xpose.msra.mxu0 0.0
    %3629 = vmatprep.subr.mxu0 0.0
    %3630 = vmatpush1.xpose.msra.mxu0 0.0
    %3631 = vmatprep.subr.mxu0 0.0
    %3632 = vmatpush1.xpose.msra.mxu0 0.0
    %3633 = vmatprep.subr.mxu0 0.0
    %3634 = vmatpush1.xpose.msra.mxu0 0.0
    %3635 = vmatprep.subr.mxu0 0.0
    %3636 = vmatpush1.xpose.msra.mxu0 0.0
    %3637 = vmatprep.subr.mxu0 0.0
    %3638 = vmatpush1.xpose.msra.mxu0 0.0
    %3639 = vmatprep.subr.mxu0 0.0
    %3640 = vmatpush1.xpose.msra.mxu0 0.0
    %3641 = vmatprep.subr.mxu0 0.0
    %3642 = vmatpush1.xpose.msra.mxu0 0.0
    %3643 = vmatprep.subr.mxu0 0.0
    %3644 = vmatpush1.xpose.msra.mxu0 0.0
    %3645 = vmatprep.subr.mxu0 0.0
    %3646 = vmatpush1.xpose.msra.mxu0 0.0
    %3647 = vmatprep.subr.mxu0 0.0
    %3648 = vmatpush1.xpose.msra.mxu0 0.0
    %3649 = vmatprep.subr.mxu0 0.0
    %3650 = vmatpush1.xpose.msra.mxu0 0.0
    %3651 = vmatprep.subr.mxu0 0.0
    %3652 = vmatpush1.xpose.msra.mxu0 0.0
    %3653 = vmatprep.subr.mxu0 0.0
    %3654 = vmatpush1.xpose.msra.mxu0 0.0
    %3655 = vmatprep.subr.mxu0 0.0
    %3656 = vmatpush1.xpose.msra.mxu0 0.0
    %3657 = vmatprep.subr.mxu0 0.0
    %3658 = vmatpush1.xpose.msra.mxu0 0.0
    %3659 = vmatprep.subr.mxu0 0.0
    %3660 = vmatpush1.xpose.msra.mxu0 0.0
    %3661 = vmatprep.subr.mxu0 0.0
    %3662 = vmatpush1.xpose.msra.mxu0 0.0
    %3663 = vmatprep.subr.mxu0 0.0
    %3664 = vmatpush1.xpose.msra.mxu0 0.0
    %3665 = vmatprep.subr.mxu0 0.0
    %3666 = vmatpush1.xpose.msra.mxu0 0.0
    %3667 = vmatprep.subr.mxu0 0.0
    %3668 = vmatpush1.xpose.msra.mxu0 0.0
    %3669 = vmatprep.subr.mxu0 0.0
    %3670 = vmatpush1.xpose.msra.mxu0 0.0
    %3671 = vmatprep.subr.mxu0 0.0
    %3672 = vmatpush1.xpose.msra.mxu0 0.0
    %3673 = vmatprep.subr.mxu0 0.0
    %3674 = vmatpush1.xpose.msra.mxu0 0.0
    %3675 = vmatprep.mubr.f32.mxu0 0.0
    %3676 = vmatmul.mubr.f32.gmra.mrb[0].mxu0 %v3607
    %v3677 = vpop.f32.mrb[0].mxu0
    %v3678 = vadd.f32 0.0, %v3677
    %v3679 = vpop.f32.mrb[0].mxu0
    %3680 = vdwg.mxu0
    %3681 = vrot.lane.b32.xlu0 %v2350, 104
    %v3682 = vpop.permute.xlu0 %3681
    %3683 = vrot.lane.b32.xlu0 %v2350, 72
    %v3684 = vpop.permute.xlu0 %3683
    %v3685 = vsel %vm310, %v3682, 0
    %v3687 = vsel %vm310, %v3684, 0
    %3689 = vmatprep.subr.mxu0 0.0
    %3690 = vmatpush1.xpose.msra.mxu0 %v3687
    %3691 = vmatprep.subr.mxu0 0.0
    %3692 = vmatpush1.xpose.msra.mxu0 0.0
    %3693 = vmatprep.subr.mxu0 0.0
    %3694 = vmatpush1.xpose.msra.mxu0 0.0
    %3695 = vmatprep.subr.mxu0 0.0
    %3696 = vmatpush1.xpose.msra.mxu0 0.0
    %3697 = vmatprep.subr.mxu0 0.0
    %3698 = vmatpush1.xpose.msra.mxu0 0.0
    %3699 = vmatprep.subr.mxu0 0.0
    %3700 = vmatpush1.xpose.msra.mxu0 0.0
    %3701 = vmatprep.subr.mxu0 0.0
    %3702 = vmatpush1.xpose.msra.mxu0 0.0
    %3703 = vmatprep.subr.mxu0 0.0
    %3704 = vmatpush1.xpose.msra.mxu0 0.0
    %3705 = vmatprep.subr.mxu0 0.0
    %3706 = vmatpush1.xpose.msra.mxu0 0.0
    %3707 = vmatprep.subr.mxu0 0.0
    %3708 = vmatpush1.xpose.msra.mxu0 0.0
    %3709 = vmatprep.subr.mxu0 0.0
    %3710 = vmatpush1.xpose.msra.mxu0 0.0
    %3711 = vmatprep.subr.mxu0 0.0
    %3712 = vmatpush1.xpose.msra.mxu0 0.0
    %3713 = vmatprep.subr.mxu0 0.0
    %3714 = vmatpush1.xpose.msra.mxu0 0.0
    %3715 = vmatprep.subr.mxu0 0.0
    %3716 = vmatpush1.xpose.msra.mxu0 0.0
    %3717 = vmatprep.subr.mxu0 0.0
    %3718 = vmatpush1.xpose.msra.mxu0 0.0
    %3719 = vmatprep.subr.mxu0 0.0
    %3720 = vmatpush1.xpose.msra.mxu0 0.0
    %3721 = vmatprep.subr.mxu0 0.0
    %3722 = vmatpush1.xpose.msra.mxu0 0.0
    %3723 = vmatprep.subr.mxu0 0.0
    %3724 = vmatpush1.xpose.msra.mxu0 0.0
    %3725 = vmatprep.subr.mxu0 0.0
    %3726 = vmatpush1.xpose.msra.mxu0 0.0
    %3727 = vmatprep.subr.mxu0 0.0
    %3728 = vmatpush1.xpose.msra.mxu0 0.0
    %3729 = vmatprep.subr.mxu0 0.0
    %3730 = vmatpush1.xpose.msra.mxu0 0.0
    %3731 = vmatprep.subr.mxu0 0.0
    %3732 = vmatpush1.xpose.msra.mxu0 0.0
    %3733 = vmatprep.subr.mxu0 0.0
    %3734 = vmatpush1.xpose.msra.mxu0 0.0
    %3735 = vmatprep.subr.mxu0 0.0
    %3736 = vmatpush1.xpose.msra.mxu0 0.0
    %3737 = vmatprep.subr.mxu0 0.0
    %3738 = vmatpush1.xpose.msra.mxu0 0.0
    %3739 = vmatprep.subr.mxu0 0.0
    %3740 = vmatpush1.xpose.msra.mxu0 0.0
    %3741 = vmatprep.subr.mxu0 0.0
    %3742 = vmatpush1.xpose.msra.mxu0 0.0
    %3743 = vmatprep.subr.mxu0 0.0
    %3744 = vmatpush1.xpose.msra.mxu0 0.0
    %3745 = vmatprep.subr.mxu0 0.0
    %3746 = vmatpush1.xpose.msra.mxu0 0.0
    %3747 = vmatprep.subr.mxu0 0.0
    %3748 = vmatpush1.xpose.msra.mxu0 0.0
    %3749 = vmatprep.subr.mxu0 0.0
    %3750 = vmatpush1.xpose.msra.mxu0 0.0
    %3751 = vmatprep.subr.mxu0 0.0
    %3752 = vmatpush1.xpose.msra.mxu0 0.0
    %3753 = vmatprep.mubr.f32.mxu0 0.0
    %3754 = vmatmul.mubr.f32.gmra.mrb[0].mxu0 %v3685
    %v3755 = vpop.f32.mrb[0].mxu0
    %v3756 = vadd.f32 0.0, %v3755
    %v3757 = vpop.f32.mrb[0].mxu0
    %3758 = vdwg.mxu0
    %v3759 = vmul.f32 %v3678, 0.17677669
    %v3760 = vmul.f32 %v3756, 0.17677669
    %v3761 = vadd.f32 %v3759, %v171
    %v3762 = vadd.f32 %v3760, %v171
    %v3763 = vsel %vm310, %v3761, -inf
    %3764 = vmax.xlane.f32.xlu0 %v3763
    %v3765 = vpop.xlane.xlu0 %3764
    %v3766 = vsel %vm310, %v3762, -inf
    %3767 = vmax.xlane.f32.xlu0 %v3766
    %v3768 = vpop.xlane.xlu0 %3767
    %v3769 = vsub.f32 %v3761, %v3765
    %v3770 = vsub.f32 %v3762, %v3768
    %v3771 = vmul.f32 %v3769, 1.442695
    %v3772 = vpow.pop %v3771
    %v3773 = vmul.f32 %v3770, 1.442695
    %v3774 = vpow.pop %v3773
    %v3775 = vsel %vm310, %v3772, 0.0
    %3776 = vadd.xlane.f32.xlu0 %v3775
    %v3777 = vpop.xlane.xlu0 %3776
    %v3778 = vsel %vm310, %v3774, 0.0
    %3779 = vadd.xlane.f32.xlu0 %v3778
    %v3780 = vpop.xlane.xlu0 %3779
    %v3781 = vrcp.pop %v3777
    %v3782 = vrcp.pop %v3780
    %v3783 = vmul.f32 %v3772, %v3781
    %v3784 = vmul.f32 %v3774, %v3782
    %3785 = vrot.lane.b32.xlu0 %v2345, 40
    %v3786 = vpop.permute.xlu0 %3785
    %v3789 = vsel %vm310, %v3783, 0
    %3791 = vmatprep.subr.mxu0 0.0
    %3792 = vmatpush1.msra.mxu0 %v3786
    %3793 = vmatprep.subr.mxu0 0.0
    %3794 = vmatpush1.msra.mxu0 0.0
    %3795 = vmatprep.subr.mxu0 0.0
    %3796 = vmatpush1.msra.mxu0 0.0
    %3797 = vmatprep.subr.mxu0 0.0
    %3798 = vmatpush1.msra.mxu0 0.0
    %3799 = vmatprep.subr.mxu0 0.0
    %3800 = vmatpush1.msra.mxu0 0.0
    %3801 = vmatprep.subr.mxu0 0.0
    %3802 = vmatpush1.msra.mxu0 0.0
    %3803 = vmatprep.subr.mxu0 0.0
    %3804 = vmatpush1.msra.mxu0 0.0
    %3805 = vmatprep.subr.mxu0 0.0
    %3806 = vmatpush1.msra.mxu0 0.0
    %3807 = vmatprep.subr.mxu0 0.0
    %3808 = vmatpush1.msra.mxu0 0.0
    %3809 = vmatprep.subr.mxu0 0.0
    %3810 = vmatpush1.msra.mxu0 0.0
    %3811 = vmatprep.subr.mxu0 0.0
    %3812 = vmatpush1.msra.mxu0 0.0
    %3813 = vmatprep.subr.mxu0 0.0
    %3814 = vmatpush1.msra.mxu0 0.0
    %3815 = vmatprep.subr.mxu0 0.0
    %3816 = vmatpush1.msra.mxu0 0.0
    %3817 = vmatprep.subr.mxu0 0.0
    %3818 = vmatpush1.msra.mxu0 0.0
    %3819 = vmatprep.subr.mxu0 0.0
    %3820 = vmatpush1.msra.mxu0 0.0
    %3821 = vmatprep.subr.mxu0 0.0
    %3822 = vmatpush1.msra.mxu0 0.0
    %3823 = vmatprep.subr.mxu0 0.0
    %3824 = vmatpush1.msra.mxu0 0.0
    %3825 = vmatprep.subr.mxu0 0.0
    %3826 = vmatpush1.msra.mxu0 0.0
    %3827 = vmatprep.subr.mxu0 0.0
    %3828 = vmatpush1.msra.mxu0 0.0
    %3829 = vmatprep.subr.mxu0 0.0
    %3830 = vmatpush1.msra.mxu0 0.0
    %3831 = vmatprep.subr.mxu0 0.0
    %3832 = vmatpush1.msra.mxu0 0.0
    %3833 = vmatprep.subr.mxu0 0.0
    %3834 = vmatpush1.msra.mxu0 0.0
    %3835 = vmatprep.subr.mxu0 0.0
    %3836 = vmatpush1.msra.mxu0 0.0
    %3837 = vmatprep.subr.mxu0 0.0
    %3838 = vmatpush1.msra.mxu0 0.0
    %3839 = vmatprep.subr.mxu0 0.0
    %3840 = vmatpush1.msra.mxu0 0.0
    %3841 = vmatprep.subr.mxu0 0.0
    %3842 = vmatpush1.msra.mxu0 0.0
    %3843 = vmatprep.subr.mxu0 0.0
    %3844 = vmatpush1.msra.mxu0 0.0
    %3845 = vmatprep.subr.mxu0 0.0
    %3846 = vmatpush1.msra.mxu0 0.0
    %3847 = vmatprep.subr.mxu0 0.0
    %3848 = vmatpush1.msra.mxu0 0.0
    %3849 = vmatprep.subr.mxu0 0.0
    %3850 = vmatpush1.msra.mxu0 0.0
    %3851 = vmatprep.subr.mxu0 0.0
    %3852 = vmatpush1.msra.mxu0 0.0
    %3853 = vmatprep.subr.mxu0 0.0
    %3854 = vmatpush1.msra.mxu0 0.0
    %3855 = vmatprep.mubr.f32.mxu0 0.0
    %3856 = vmatmul.mubr.f32.gmra.mrb[0].mxu0 %v3789
    %v3857 = vpop.f32.mrb[0].mxu0
    %v3858 = vadd.f32 0.0, %v3857
    %v3859 = vpop.f32.mrb[0].mxu0
    %3860 = vdwg.mxu0
    %3861 = vrot.lane.b32.xlu0 %v2350, 40
    %v3862 = vpop.permute.xlu0 %3861
    %v3865 = vsel %vm310, %v3784, 0
    %3867 = vmatprep.subr.mxu0 0.0
    %3868 = vmatpush1.msra.mxu0 %v3862
    %3869 = vmatprep.subr.mxu0 0.0
    %3870 = vmatpush1.msra.mxu0 0.0
    %3871 = vmatprep.subr.mxu0 0.0
    %3872 = vmatpush1.msra.mxu0 0.0
    %3873 = vmatprep.subr.mxu0 0.0
    %3874 = vmatpush1.msra.mxu0 0.0
    %3875 = vmatprep.subr.mxu0 0.0
    %3876 = vmatpush1.msra.mxu0 0.0
    %3877 = vmatprep.subr.mxu0 0.0
    %3878 = vmatpush1.msra.mxu0 0.0
    %3879 = vmatprep.subr.mxu0 0.0
    %3880 = vmatpush1.msra.mxu0 0.0
    %3881 = vmatprep.subr.mxu0 0.0
    %3882 = vmatpush1.msra.mxu0 0.0
    %3883 = vmatprep.subr.mxu0 0.0
    %3884 = vmatpush1.msra.mxu0 0.0
    %3885 = vmatprep.subr.mxu0 0.0
    %3886 = vmatpush1.msra.mxu0 0.0
    %3887 = vmatprep.subr.mxu0 0.0
    %3888 = vmatpush1.msra.mxu0 0.0
    %3889 = vmatprep.subr.mxu0 0.0
    %3890 = vmatpush1.msra.mxu0 0.0
    %3891 = vmatprep.subr.mxu0 0.0
    %3892 = vmatpush1.msra.mxu0 0.0
    %3893 = vmatprep.subr.mxu0 0.0
    %3894 = vmatpush1.msra.mxu0 0.0
    %3895 = vmatprep.subr.mxu0 0.0
    %3896 = vmatpush1.msra.mxu0 0.0
    %3897 = vmatprep.subr.mxu0 0.0
    %3898 = vmatpush1.msra.mxu0 0.0
    %3899 = vmatprep.subr.mxu0 0.0
    %3900 = vmatpush1.msra.mxu0 0.0
    %3901 = vmatprep.subr.mxu0 0.0
    %3902 = vmatpush1.msra.mxu0 0.0
    %3903 = vmatprep.subr.mxu0 0.0
    %3904 = vmatpush1.msra.mxu0 0.0
    %3905 = vmatprep.subr.mxu0 0.0
    %3906 = vmatpush1.msra.mxu0 0.0
    %3907 = vmatprep.subr.mxu0 0.0
    %3908 = vmatpush1.msra.mxu0 0.0
    %3909 = vmatprep.subr.mxu0 0.0
    %3910 = vmatpush1.msra.mxu0 0.0
    %3911 = vmatprep.subr.mxu0 0.0
    %3912 = vmatpush1.msra.mxu0 0.0
    %3913 = vmatprep.subr.mxu0 0.0
    %3914 = vmatpush1.msra.mxu0 0.0
    %3915 = vmatprep.subr.mxu0 0.0
    %3916 = vmatpush1.msra.mxu0 0.0
    %3917 = vmatprep.subr.mxu0 0.0
    %3918 = vmatpush1.msra.mxu0 0.0
    %3919 = vmatprep.subr.mxu0 0.0
    %3920 = vmatpush1.msra.mxu0 0.0
    %3921 = vmatprep.subr.mxu0 0.0
    %3922 = vmatpush1.msra.mxu0 0.0
    %3923 = vmatprep.subr.mxu0 0.0
    %3924 = vmatpush1.msra.mxu0 0.0
    %3925 = vmatprep.subr.mxu0 0.0
    %3926 = vmatpush1.msra.mxu0 0.0
    %3927 = vmatprep.subr.mxu0 0.0
    %3928 = vmatpush1.msra.mxu0 0.0
    %3929 = vmatprep.subr.mxu0 0.0
    %3930 = vmatpush1.msra.mxu0 0.0
    %3931 = vmatprep.mubr.f32.mxu0 0.0
    %3932 = vmatmul.mubr.f32.gmra.mrb[0].mxu0 %v3865
    %v3933 = vpop.f32.mrb[0].mxu0
    %v3934 = vadd.f32 0.0, %v3933
    %v3935 = vpop.f32.mrb[0].mxu0
    %3936 = vdwg.mxu0
    %v3938 = vsel %vm310, %v3858, 0
    %v3941 = vsel %vm310, %v3934, 0
    %3943 = vmatprep.subr.mxu0 0.0
    %3944 = vmatpush1.msra.mxu0 %v2357
    %3945 = vmatprep.subr.mxu0 0.0
    %3946 = vmatpush1.msra.mxu0 0.0
    %3947 = vmatprep.subr.mxu0 0.0
    %3948 = vmatpush1.msra.mxu0 0.0
    %3949 = vmatprep.subr.mxu0 0.0
    %3950 = vmatpush1.msra.mxu0 0.0
    %3951 = vmatprep.subr.mxu0 0.0
    %3952 = vmatpush1.msra.mxu0 0.0
    %3953 = vmatprep.subr.mxu0 0.0
    %3954 = vmatpush1.msra.mxu0 0.0
    %3955 = vmatprep.subr.mxu0 0.0
    %3956 = vmatpush1.msra.mxu0 0.0
    %3957 = vmatprep.subr.mxu0 0.0
    %3958 = vmatpush1.msra.mxu0 0.0
    %3959 = vmatprep.subr.mxu0 0.0
    %3960 = vmatpush1.msra.mxu0 0.0
    %3961 = vmatprep.subr.mxu0 0.0
    %3962 = vmatpush1.msra.mxu0 0.0
    %3963 = vmatprep.subr.mxu0 0.0
    %3964 = vmatpush1.msra.mxu0 0.0
    %3965 = vmatprep.subr.mxu0 0.0
    %3966 = vmatpush1.msra.mxu0 0.0
    %3967 = vmatprep.subr.mxu0 0.0
    %3968 = vmatpush1.msra.mxu0 0.0
    %3969 = vmatprep.subr.mxu0 0.0
    %3970 = vmatpush1.msra.mxu0 0.0
    %3971 = vmatprep.subr.mxu0 0.0
    %3972 = vmatpush1.msra.mxu0 0.0
    %3973 = vmatprep.subr.mxu0 0.0
    %3974 = vmatpush1.msra.mxu0 0.0
    %3975 = vmatprep.subr.mxu0 0.0
    %3976 = vmatpush1.msra.mxu0 0.0
    %3977 = vmatprep.subr.mxu0 0.0
    %3978 = vmatpush1.msra.mxu0 0.0
    %3979 = vmatprep.subr.mxu0 0.0
    %3980 = vmatpush1.msra.mxu0 0.0
    %3981 = vmatprep.subr.mxu0 0.0
    %3982 = vmatpush1.msra.mxu0 0.0
    %3983 = vmatprep.subr.mxu0 0.0
    %3984 = vmatpush1.msra.mxu0 0.0
    %3985 = vmatprep.subr.mxu0 0.0
    %3986 = vmatpush1.msra.mxu0 0.0
    %3987 = vmatprep.subr.mxu0 0.0
    %3988 = vmatpush1.msra.mxu0 0.0
    %3989 = vmatprep.subr.mxu0 0.0
    %3990 = vmatpush1.msra.mxu0 0.0
    %3991 = vmatprep.subr.mxu0 0.0
    %3992 = vmatpush1.msra.mxu0 0.0
    %3993 = vmatprep.subr.mxu0 0.0
    %3994 = vmatpush1.msra.mxu0 0.0
    %3995 = vmatprep.subr.mxu0 0.0
    %3996 = vmatpush1.msra.mxu0 0.0
    %3997 = vmatprep.subr.mxu0 0.0
    %3998 = vmatpush1.msra.mxu0 0.0
    %3999 = vmatprep.subr.mxu0 0.0
    %4000 = vmatpush1.msra.mxu0 0.0
    %4001 = vmatprep.subr.mxu0 0.0
    %4002 = vmatpush1.msra.mxu0 0.0
    %4003 = vmatprep.subr.mxu0 0.0
    %4004 = vmatpush1.msra.mxu0 0.0
    %4005 = vmatprep.subr.mxu0 0.0
    %4006 = vmatpush1.msra.mxu0 0.0
    %4007 = vmatprep.mubr.f32.mxu0 0.0
    %4008 = vmatmul.mubr.f32.gmra.mrb[0].mxu0 %v3938
    %v4009 = vpop.f32.mrb[0].mxu0
    %v4010 = vadd.f32 0.0, %v4009
    %v4011 = vpop.f32.mrb[0].mxu0
    %4012 = vmatprep.mubr.f32.mxu0 0.0
    %4013 = vmatmul.mubr.f32.gmra.mrb[0].mxu0 %v3941
    %v4014 = vpop.f32.mrb[0].mxu0
    %v4015 = vadd.f32 0.0, %v4014
    %v4016 = vpop.f32.mrb[0].mxu0
    %4017 = vdwg.mxu0
    %v4018 = vadd.f32 %v3601, %v4010
    %v4019 = vadd.f32 %v3602, %v4015
    %v4020 = vadd.f32 %v2219, %v4018
    %v4021 = vadd.f32 %v2220, %v4019
    %s4022 = scalar_lea.vmem %s7, 1
    %v4023 = vld [vmem:[%s4022] sm:$0x1]
    %v4025 = vlaneseq
    %v4026 = vshrl.u32 %v4025, 7
    %v4027 = vsub.s32 0, %v4026
    %v4028 = vrot.slane %v4023, %v4027
    %v4030 = vadd.f32 %v4020, %v4028
    %v4031 = vadd.f32 %v4021, %v4028
    %s4032 = scalar_lea.vmem %s8, 1
    %v4033 = vld [vmem:[%s4032] sm:$0x1]
    %s4034 = scalar_lea.vmem %s9, 1
    %v4035 = vld [vmem:[%s4034] sm:$0x1]
    %v4036 = vsel %vm174, %v4030, 0.0
    %4037 = vadd.xlane.f32.xlu0 %v4036
    %v4038 = vpop.xlane.xlu0 %4037
    %v4039 = vsel %vm174, %v4031, 0.0
    %4040 = vadd.xlane.f32.xlu0 %v4039
    %v4041 = vpop.xlane.xlu0 %4040
    %v4042 = vmul.f32 %v4038, %v181
    %v4043 = vmul.f32 %v4041, %v181
    %v4044 = vsub.f32 %v4030, %v4042
    %v4045 = vsub.f32 %v4031, %v4043
    %v4046 = vmul.f32 %v4044, %v4044
    %v4047 = vmul.f32 %v4045, %v4045
    %v4048 = vsel %vm174, %v4046, 0.0
    %4049 = vadd.xlane.f32.xlu0 %v4048
    %v4050 = vpop.xlane.xlu0 %4049
    %v4051 = vsel %vm174, %v4047, 0.0
    %4052 = vadd.xlane.f32.xlu0 %v4051
    %v4053 = vpop.xlane.xlu0 %4052
    %v4054 = vmul.f32 %v4050, %v181
    %v4055 = vmul.f32 %v4053, %v181
    %v4056 = vadd.f32 %v4054, 1e-05
    %v4057 = vadd.f32 %v4055, 1e-05
    %v4058 = vrsqrt.pop %v4056
    %v4059 = vrsqrt.pop %v4057
    %v4060 = vmul.f32 %v4044, %v4058
    %v4061 = vmul.f32 %v4045, %v4059
    %v4063 = vlaneseq
    %v4064 = vshrl.u32 %v4063, 7
    %v4065 = vsub.s32 0, %v4064
    %v4066 = vrot.slane %v4033, %v4065
    %v4068 = vmul.f32 %v4060, %v4066
    %v4069 = vmul.f32 %v4061, %v4066
    %v4071 = vlaneseq
    %v4072 = vshrl.u32 %v4071, 7
    %v4073 = vsub.s32 0, %v4072
    %v4074 = vrot.slane %v4035, %v4073
    %v4076 = vadd.f32 %v4068, %v4074
    %v4077 = vadd.f32 %v4069, %v4074
    %s4078 = scalar_lea.vmem %s10, 32
    %v4079 = vld [vmem:[%s4078] sm:$0xff]
    %v4080 = vld [vmem:[%s4078 + $0x8] sm:$0xff]
    %v4081 = vld [vmem:[%s4078 + $0x10] sm:$0xff]
    %v4082 = vld [vmem:[%s4078 + $0x18] sm:$0xff]
    %s4083 = scalar_lea.vmem %s11, 1
    %v4084 = vld [vmem:[%s4083] sm:$0x1]
    %v4086 = vlaneseq
    %v4087 = vshrl.u32 %v4086, 7
    %v4088 = vsub.s32 0, %v4087
    %v4089 = vrot.slane %v4084, %v4088
    %v4092 = vsel %vm174, %v4076, 0
    %v4095 = vsel %vm174, %v4077, 0
    %4097 = vmatprep.subr.mxu0 0.0
    %4098 = vmatpush1.msra.mxu0 %v4079
    %4099 = vmatprep.subr.mxu0 0.0
    %4100 = vmatpush1.msra.mxu0 %v4080
    %4101 = vmatprep.subr.mxu0 0.0
    %4102 = vmatpush1.msra.mxu0 %v4081
    %4103 = vmatprep.subr.mxu0 0.0
    %4104 = vmatpush1.msra.mxu0 %v4082
    %4105 = vmatprep.subr.mxu0 0.0
    %4106 = vmatpush1.msra.mxu0 0.0
    %4107 = vmatprep.subr.mxu0 0.0
    %4108 = vmatpush1.msra.mxu0 0.0
    %4109 = vmatprep.subr.mxu0 0.0
    %4110 = vmatpush1.msra.mxu0 0.0
    %4111 = vmatprep.subr.mxu0 0.0
    %4112 = vmatpush1.msra.mxu0 0.0
    %4113 = vmatprep.subr.mxu0 0.0
    %4114 = vmatpush1.msra.mxu0 0.0
    %4115 = vmatprep.subr.mxu0 0.0
    %4116 = vmatpush1.msra.mxu0 0.0
    %4117 = vmatprep.subr.mxu0 0.0
    %4118 = vmatpush1.msra.mxu0 0.0
    %4119 = vmatprep.subr.mxu0 0.0
    %4120 = vmatpush1.msra.mxu0 0.0
    %4121 = vmatprep.subr.mxu0 0.0
    %4122 = vmatpush1.msra.mxu0 0.0
    %4123 = vmatprep.subr.mxu0 0.0
    %4124 = vmatpush1.msra.mxu0 0.0
    %4125 = vmatprep.subr.mxu0 0.0
    %4126 = vmatpush1.msra.mxu0 0.0
    %4127 = vmatprep.subr.mxu0 0.0
    %4128 = vmatpush1.msra.mxu0 0.0
    %4129 = vmatprep.subr.mxu0 0.0
    %4130 = vmatpush1.msra.mxu0 0.0
    %4131 = vmatprep.subr.mxu0 0.0
    %4132 = vmatpush1.msra.mxu0 0.0
    %4133 = vmatprep.subr.mxu0 0.0
    %4134 = vmatpush1.msra.mxu0 0.0
    %4135 = vmatprep.subr.mxu0 0.0
    %4136 = vmatpush1.msra.mxu0 0.0
    %4137 = vmatprep.subr.mxu0 0.0
    %4138 = vmatpush1.msra.mxu0 0.0
    %4139 = vmatprep.subr.mxu0 0.0
    %4140 = vmatpush1.msra.mxu0 0.0
    %4141 = vmatprep.subr.mxu0 0.0
    %4142 = vmatpush1.msra.mxu0 0.0
    %4143 = vmatprep.subr.mxu0 0.0
    %4144 = vmatpush1.msra.mxu0 0.0
    %4145 = vmatprep.subr.mxu0 0.0
    %4146 = vmatpush1.msra.mxu0 0.0
    %4147 = vmatprep.subr.mxu0 0.0
    %4148 = vmatpush1.msra.mxu0 0.0
    %4149 = vmatprep.subr.mxu0 0.0
    %4150 = vmatpush1.msra.mxu0 0.0
    %4151 = vmatprep.subr.mxu0 0.0
    %4152 = vmatpush1.msra.mxu0 0.0
    %4153 = vmatprep.subr.mxu0 0.0
    %4154 = vmatpush1.msra.mxu0 0.0
    %4155 = vmatprep.subr.mxu0 0.0
    %4156 = vmatpush1.msra.mxu0 0.0
    %4157 = vmatprep.subr.mxu0 0.0
    %4158 = vmatpush1.msra.mxu0 0.0
    %4159 = vmatprep.subr.mxu0 0.0
    %4160 = vmatpush1.msra.mxu0 0.0
    %4161 = vmatprep.mubr.f32.mxu0 0.0
    %4162 = vmatmul.mubr.f32.gmra.mrb[0].mxu0 %v4092
    %v4163 = vpop.f32.mrb[0].mxu0
    %v4164 = vadd.f32 %v4089, %v4163
    %v4165 = vpop.f32.mrb[0].mxu0
    %4166 = vmatprep.mubr.f32.mxu0 0.0
    %4167 = vmatmul.mubr.f32.gmra.mrb[0].mxu0 %v4095
    %v4168 = vpop.f32.mrb[0].mxu0
    %v4169 = vadd.f32 %v4089, %v4168
    %v4170 = vpop.f32.mrb[0].mxu0
    %4171 = vdwg.mxu0
    %v4172 = vmax.f32 %v4164, 0.0
    %v4173 = vmax.f32 %v4169, 0.0
    %s4174 = scalar_lea.vmem %s12, 128
    %v4175 = vld [vmem:[%s4174] sm:$0xff]
    %v4176 = vld [vmem:[%s4174 + $0x8] sm:$0xff]
    %v4177 = vld [vmem:[%s4174 + $0x10] sm:$0xff]
    %v4178 = vld [vmem:[%s4174 + $0x18] sm:$0xff]
    %v4179 = vld [vmem:[%s4174 + $0x20] sm:$0xff]
    %v4180 = vld [vmem:[%s4174 + $0x28] sm:$0xff]
    %v4181 = vld [vmem:[%s4174 + $0x30] sm:$0xff]
    %v4182 = vld [vmem:[%s4174 + $0x38] sm:$0xff]
    %v4183 = vld [vmem:[%s4174 + $0x40] sm:$0xff]
    %v4184 = vld [vmem:[%s4174 + $0x48] sm:$0xff]
    %v4185 = vld [vmem:[%s4174 + $0x50] sm:$0xff]
    %v4186 = vld [vmem:[%s4174 + $0x58] sm:$0xff]
    %v4187 = vld [vmem:[%s4174 + $0x60] sm:$0xff]
    %v4188 = vld [vmem:[%s4174 + $0x68] sm:$0xff]
    %v4189 = vld [vmem:[%s4174 + $0x70] sm:$0xff]
    %v4190 = vld [vmem:[%s4174 + $0x78] sm:$0xff]
    %4191 = vmatprep.subr.mxu0 0.0
    %4192 = vmatpush1.msra.mxu0 %v4175
    %4193 = vmatprep.subr.mxu0 0.0
    %4194 = vmatpush1.msra.mxu0 %v4176
    %4195 = vmatprep.subr.mxu0 0.0
    %4196 = vmatpush1.msra.mxu0 %v4177
    %4197 = vmatprep.subr.mxu0 0.0
    %4198 = vmatpush1.msra.mxu0 %v4178
    %4199 = vmatprep.subr.mxu0 0.0
    %4200 = vmatpush1.msra.mxu0 %v4179
    %4201 = vmatprep.subr.mxu0 0.0
    %4202 = vmatpush1.msra.mxu0 %v4180
    %4203 = vmatprep.subr.mxu0 0.0
    %4204 = vmatpush1.msra.mxu0 %v4181
    %4205 = vmatprep.subr.mxu0 0.0
    %4206 = vmatpush1.msra.mxu0 %v4182
    %4207 = vmatprep.subr.mxu0 0.0
    %4208 = vmatpush1.msra.mxu0 %v4183
    %4209 = vmatprep.subr.mxu0 0.0
    %4210 = vmatpush1.msra.mxu0 %v4184
    %4211 = vmatprep.subr.mxu0 0.0
    %4212 = vmatpush1.msra.mxu0 %v4185
    %4213 = vmatprep.subr.mxu0 0.0
    %4214 = vmatpush1.msra.mxu0 %v4186
    %4215 = vmatprep.subr.mxu0 0.0
    %4216 = vmatpush1.msra.mxu0 %v4187
    %4217 = vmatprep.subr.mxu0 0.0
    %4218 = vmatpush1.msra.mxu0 %v4188
    %4219 = vmatprep.subr.mxu0 0.0
    %4220 = vmatpush1.msra.mxu0 %v4189
    %4221 = vmatprep.subr.mxu0 0.0
    %4222 = vmatpush1.msra.mxu0 %v4190
    %4223 = vmatprep.subr.mxu0 0.0
    %4224 = vmatpush1.msra.mxu0 0.0
    %4225 = vmatprep.subr.mxu0 0.0
    %4226 = vmatpush1.msra.mxu0 0.0
    %4227 = vmatprep.subr.mxu0 0.0
    %4228 = vmatpush1.msra.mxu0 0.0
    %4229 = vmatprep.subr.mxu0 0.0
    %4230 = vmatpush1.msra.mxu0 0.0
    %4231 = vmatprep.subr.mxu0 0.0
    %4232 = vmatpush1.msra.mxu0 0.0
    %4233 = vmatprep.subr.mxu0 0.0
    %4234 = vmatpush1.msra.mxu0 0.0
    %4235 = vmatprep.subr.mxu0 0.0
    %4236 = vmatpush1.msra.mxu0 0.0
    %4237 = vmatprep.subr.mxu0 0.0
    %4238 = vmatpush1.msra.mxu0 0.0
    %4239 = vmatprep.subr.mxu0 0.0
    %4240 = vmatpush1.msra.mxu0 0.0
    %4241 = vmatprep.subr.mxu0 0.0
    %4242 = vmatpush1.msra.mxu0 0.0
    %4243 = vmatprep.subr.mxu0 0.0
    %4244 = vmatpush1.msra.mxu0 0.0
    %4245 = vmatprep.subr.mxu0 0.0
    %4246 = vmatpush1.msra.mxu0 0.0
    %4247 = vmatprep.subr.mxu0 0.0
    %4248 = vmatpush1.msra.mxu0 0.0
    %4249 = vmatprep.subr.mxu0 0.0
    %4250 = vmatpush1.msra.mxu0 0.0
    %4251 = vmatprep.subr.mxu0 0.0
    %4252 = vmatpush1.msra.mxu0 0.0
    %4253 = vmatprep.subr.mxu0 0.0
    %4254 = vmatpush1.msra.mxu0 0.0
    %4255 = vmatprep.mubr.f32.mxu0 0.0
    %4256 = vmatmul.mubr.f32.gmra.mrb[0].mxu0 %v4172
    %v4257 = vpop.f32.mrb[0].mxu0
    %v4258 = vadd.f32 0.0, %v4257
    %v4259 = vpop.f32.mrb[0].mxu0
    %4260 = vmatprep.mubr.f32.mxu0 0.0
    %4261 = vmatmul.mubr.f32.gmra.mrb[0].mxu0 %v4173
    %v4262 = vpop.f32.mrb[0].mxu0
    %v4263 = vadd.f32 0.0, %v4262
    %v4264 = vpop.f32.mrb[0].mxu0
    %4265 = vdwg.mxu0
    %v4266 = vadd.f32 %v4030, %v4258
    %v4267 = vadd.f32 %v4031, %v4263
    %s4268 = scalar_lea.vmem %s13, 1
    %v4269 = vld [vmem:[%s4268] sm:$0x1]
    %v4271 = vlaneseq
    %v4272 = vshrl.u32 %v4271, 7
    %v4273 = vsub.s32 0, %v4272
    %v4274 = vrot.slane %v4269, %v4273
    %v4276 = vadd.f32 %v4266, %v4274
    %v4277 = vadd.f32 %v4267, %v4274
    %v4278 = vld [vmem:[%s14] sm:$0x1]
    %v4279 = vld [vmem:[%s15] sm:$0x1]
    %v4280 = vsel %vm174, %v4276, 0.0
    %4281 = vadd.xlane.f32.xlu0 %v4280
    %v4282 = vpop.xlane.xlu0 %4281
    %v4283 = vsel %vm174, %v4277, 0.0
    %4284 = vadd.xlane.f32.xlu0 %v4283
    %v4285 = vpop.xlane.xlu0 %4284
    %v4286 = vmul.f32 %v4282, %v181
    %v4287 = vmul.f32 %v4285, %v181
    %v4288 = vsub.f32 %v4276, %v4286
    %v4289 = vsub.f32 %v4277, %v4287
    %v4290 = vmul.f32 %v4288, %v4288
    %v4291 = vmul.f32 %v4289, %v4289
    %v4292 = vsel %vm174, %v4290, 0.0
    %4293 = vadd.xlane.f32.xlu0 %v4292
    %v4294 = vpop.xlane.xlu0 %4293
    %v4295 = vsel %vm174, %v4291, 0.0
    %4296 = vadd.xlane.f32.xlu0 %v4295
    %v4297 = vpop.xlane.xlu0 %4296
    %v4298 = vmul.f32 %v4294, %v181
    %v4299 = vmul.f32 %v4297, %v181
    %v4300 = vadd.f32 %v4298, 1e-05
    %v4301 = vadd.f32 %v4299, 1e-05
    %v4302 = vrsqrt.pop %v4300
    %v4303 = vrsqrt.pop %v4301
    %v4304 = vmul.f32 %v4288, %v4302
    %v4305 = vmul.f32 %v4289, %v4303
    %v4307 = vlaneseq
    %v4308 = vshrl.u32 %v4307, 7
    %v4309 = vsub.s32 0, %v4308
    %v4310 = vrot.slane %v4278, %v4309
    %v4312 = vmul.f32 %v4304, %v4310
    %v4313 = vmul.f32 %v4305, %v4310
    %v4315 = vlaneseq
    %v4316 = vshrl.u32 %v4315, 7
    %v4317 = vsub.s32 0, %v4316
    %v4318 = vrot.slane %v4279, %v4317
    %v4320 = vadd.f32 %v4312, %v4318
    %v4321 = vadd.f32 %v4313, %v4318
    %v4322 = vld [vmem:[%s16] sm:$0xff]
    %v4323 = vld [vmem:[%s16 + $0x8] sm:$0xff]
    %v4324 = vld [vmem:[%s16 + $0x10] sm:$0xff]
    %v4325 = vld [vmem:[%s16 + $0x18] sm:$0xff]
    %v4326 = vld [vmem:[%s17] sm:$0x1]
    %v4328 = vlaneseq
    %v4329 = vshrl.u32 %v4328, 7
    %v4330 = vsub.s32 0, %v4329
    %v4331 = vrot.slane %v4326, %v4330
    %v4334 = vsel %vm174, %v4320, 0
    %v4337 = vsel %vm174, %v4321, 0
    %4339 = vmatprep.subr.mxu0 0.0
    %4340 = vmatpush1.msra.mxu0 %v4322
    %4341 = vmatprep.subr.mxu0 0.0
    %4342 = vmatpush1.msra.mxu0 %v4323
    %4343 = vmatprep.subr.mxu0 0.0
    %4344 = vmatpush1.msra.mxu0 %v4324
    %4345 = vmatprep.subr.mxu0 0.0
    %4346 = vmatpush1.msra.mxu0 %v4325
    %4347 = vmatprep.subr.mxu0 0.0
    %4348 = vmatpush1.msra.mxu0 0.0
    %4349 = vmatprep.subr.mxu0 0.0
    %4350 = vmatpush1.msra.mxu0 0.0
    %4351 = vmatprep.subr.mxu0 0.0
    %4352 = vmatpush1.msra.mxu0 0.0
    %4353 = vmatprep.subr.mxu0 0.0
    %4354 = vmatpush1.msra.mxu0 0.0
    %4355 = vmatprep.subr.mxu0 0.0
    %4356 = vmatpush1.msra.mxu0 0.0
    %4357 = vmatprep.subr.mxu0 0.0
    %4358 = vmatpush1.msra.mxu0 0.0
    %4359 = vmatprep.subr.mxu0 0.0
    %4360 = vmatpush1.msra.mxu0 0.0
    %4361 = vmatprep.subr.mxu0 0.0
    %4362 = vmatpush1.msra.mxu0 0.0
    %4363 = vmatprep.subr.mxu0 0.0
    %4364 = vmatpush1.msra.mxu0 0.0
    %4365 = vmatprep.subr.mxu0 0.0
    %4366 = vmatpush1.msra.mxu0 0.0
    %4367 = vmatprep.subr.mxu0 0.0
    %4368 = vmatpush1.msra.mxu0 0.0
    %4369 = vmatprep.subr.mxu0 0.0
    %4370 = vmatpush1.msra.mxu0 0.0
    %4371 = vmatprep.subr.mxu0 0.0
    %4372 = vmatpush1.msra.mxu0 0.0
    %4373 = vmatprep.subr.mxu0 0.0
    %4374 = vmatpush1.msra.mxu0 0.0
    %4375 = vmatprep.subr.mxu0 0.0
    %4376 = vmatpush1.msra.mxu0 0.0
    %4377 = vmatprep.subr.mxu0 0.0
    %4378 = vmatpush1.msra.mxu0 0.0
    %4379 = vmatprep.subr.mxu0 0.0
    %4380 = vmatpush1.msra.mxu0 0.0
    %4381 = vmatprep.subr.mxu0 0.0
    %4382 = vmatpush1.msra.mxu0 0.0
    %4383 = vmatprep.subr.mxu0 0.0
    %4384 = vmatpush1.msra.mxu0 0.0
    %4385 = vmatprep.subr.mxu0 0.0
    %4386 = vmatpush1.msra.mxu0 0.0
    %4387 = vmatprep.subr.mxu0 0.0
    %4388 = vmatpush1.msra.mxu0 0.0
    %4389 = vmatprep.subr.mxu0 0.0
    %4390 = vmatpush1.msra.mxu0 0.0
    %4391 = vmatprep.subr.mxu0 0.0
    %4392 = vmatpush1.msra.mxu0 0.0
    %4393 = vmatprep.subr.mxu0 0.0
    %4394 = vmatpush1.msra.mxu0 0.0
    %4395 = vmatprep.subr.mxu0 0.0
    %4396 = vmatpush1.msra.mxu0 0.0
    %4397 = vmatprep.subr.mxu0 0.0
    %4398 = vmatpush1.msra.mxu0 0.0
    %4399 = vmatprep.subr.mxu0 0.0
    %4400 = vmatpush1.msra.mxu0 0.0
    %4401 = vmatprep.subr.mxu0 0.0
    %4402 = vmatpush1.msra.mxu0 0.0
    %4403 = vmatprep.mubr.f32.mxu0 0.0
    %4404 = vmatmul.mubr.f32.gmra.mrb[0].mxu0 %v4334
    %v4405 = vpop.f32.mrb[0].mxu0
    %v4406 = vadd.f32 %v4331, %v4405
    %v4407 = vpop.f32.mrb[0].mxu0
    %4408 = vmatprep.mubr.f32.mxu0 0.0
    %4409 = vmatmul.mubr.f32.gmra.mrb[0].mxu0 %v4337
    %v4410 = vpop.f32.mrb[0].mxu0
    %v4411 = vadd.f32 %v4331, %v4410
    %v4412 = vpop.f32.mrb[0].mxu0
    %4413 = vdwg.mxu0
    %4414 = vst [vmem:[#allocation2] sm:$0xff] %v4406
    %4415 = vst [vmem:[#allocation2 + $0x8] sm:$0xff] %v4411
    // Predicated region
    $region74: #{tpu_custom_call.1} parent=1 // pred_check
      _
    $region75: #{tpu_custom_call.1} parent=1 // pred_check_branch
      %4417 = sbr.rel (0) target = $region77
    $region76: #{tpu_custom_call.1} parent=1 // pred_region
      %s4419 = ssub.s32 256, 256
      %4420 = vsyncadd [#allocation3], %s4419
      %s4421 = sshll.u32 [#allocation2], 4
      %s4422 = int_to_ptr.vmem [resolvable:$true] %s4421
      %4427 = dma.vmem_to_hbm [thread:$0]  %s4422, 256, %s18, [#allocation3], 128, 128, 8
    $region77: #{tpu_custom_call.1} parent=1 // pred_fallthru
      _
    // Predicated region
    $region78: #{tpu_custom_call.1} parent=1 // pred_check
      _
    $region79: #{tpu_custom_call.1} parent=1 // pred_check_branch
      %4429 = sbr.rel (0) target = $region81
    $region80: #{tpu_custom_call.1} parent=1 // pred_region
      %4430 = dma.done [#allocation3], 256
    $region81: #{tpu_custom_call.1} parent=1 // pred_fallthru
      _
    %4431 = vsyncpa [#allocation3], 1

</llo_original>
